<compile_context>
chip_gen: v6e
topology: v6e:2x2x1
jax: 0.10.0
libtpu: 0.0.40
codegen_flags: <defaults>
</compile_context>

<pallas_src>
import functools
import math

import jax
import jax.numpy as jnp
from jax.experimental import pallas as pl
from jax.experimental.pallas import tpu as pltpu


def _round_up(x, m):
    return ((x + m - 1) // m) * m


def _pick_tile_h(h, w, target_m=512):
    """Divisor TH of H keeping M = TH*W moderate (<= ~512) and sublane-aligned."""
    best = None
    for th in range(1, h + 1):
        if h % th:
            continue
        m = th * w
        if (m % 8) and th != h:      # keep the flat output block sublane-aligned
            continue
        if m <= target_m:
            best = th                # largest aligned divisor with M <= target
        elif best is None:
            return th                # even the smallest aligned divisor exceeds target
    return best if best is not None else h


def _fam_conv_kernel(x_ref, w_ref, b_ref, o_ref, *, tile_h, out_w, kh, kw,
                     apply_gelu):
    # x_ref: (1, tile_h+2, W+2, C2p) bf16  -- haloed row tile of cat([x1,x2], ch)
    # w_ref: (kh*kw, C2p, COp)       bf16  -- per-tap weight slabs
    # b_ref: (1, COp)                f32
    # o_ref: (1, tile_h*W, COp)      f32   -- flat lane-dense output slab
    m = tile_h * out_w

    # Bias folded into the accumulator init (saves a zero-fill + epilogue add).
    acc = jnp.broadcast_to(b_ref[...], (m, o_ref.shape[-1])).astype(jnp.float32)

    for dx in range(kw):
        # One dx-shifted slab per kernel column: 3 window extractions per step
        # (was 9 per input = 18).  No im2col tensor ever hits HBM.
        xd = x_ref[0, :, dx:dx + out_w, :]                 # (tile_h+2, W, C2p)
        xd = xd.reshape((tile_h + kh - 1) * out_w, xd.shape[-1])
        for dy in range(kh):
            # Aligned row-offset view when W % 8 == 0 -> no per-tap relayout.
            p = xd[dy * out_w:dy * out_w + m, :]
            acc = acc + jnp.dot(p, w_ref[dy * kw + dx],
                                preferred_element_type=jnp.float32)

    if apply_gelu:
        # BasicConv(relu=True) epilogue: exact erf-GELU (torch.nn.GELU default).
        # FAM uses relu=False, so this path is disabled.
        acc = 0.5 * acc * (1.0 + jax.lax.erf(acc * 0.7071067811865475))
    o_ref[0] = acc.astype(o_ref.dtype)


def fam_conv(x1, x2, w, b, *, apply_gelu=False):
    """FAM.forward: Conv2d(2C->Cout, 3x3, stride 1, pad 1, bias) on cat([x1,x2], dim=1).

    x1, x2: (N, C, H, W) f32 (PyTorch NCHW).  w: (Cout, 2C, 3, 3).  b: (Cout,)
    Returns (N, Cout, H, W) f32.
    """
    n, c, hh, ww = x1.shape
    cout, cin2, kh, kw = w.shape
    assert x2.shape == x1.shape and cin2 == 2 * c and b.shape == (cout,)
    pad = kh // 2

    c2 = 2 * c
    c2_pad = _round_up(c2, 128)      # K per tap (lane axis of activations)
    cout_pad = _round_up(cout, 128)  # lane-dense output stores

    tile_h = _pick_tile_h(hh, ww)
    nt = hh // tile_h
    m = tile_h * ww
    th_halo = tile_h + kh - 1
    wp2 = ww + 2 * pad

    # ---- prep (one XLA fusion): NCHW -> NHWC, fused channel concat, bf16 cast,
    # 1px spatial pad, K pad, per-row-tile halo duplication. ----
    # TODO(synk): keeping the surrounding network NHWC removes the two transposes
    # here and the one below; the 1px pad could also be handled in-kernel with
    # border masks to avoid materializing the padded copy.
    x_nhwc = jnp.concatenate(
        [jnp.transpose(x1, (0, 2, 3, 1)), jnp.transpose(x2, (0, 2, 3, 1))],
        axis=-1).astype(jnp.bfloat16)
    xp = jnp.pad(x_nhwc, ((0, 0), (pad, pad), (pad, pad), (0, c2_pad - c2)))
    xt = jnp.stack(
        [xp[:, i * tile_h:i * tile_h + th_halo] for i in range(nt)], axis=1)
    xt = xt.reshape(n * nt, th_halo, wp2, c2_pad)     # haloed row tiles

    # Weights: (Cout, 2C, kh, kw) -> per-tap (kh*kw, 2C_pad, Cout_pad) bf16.
    wt = jnp.transpose(w, (2, 3, 1, 0)).reshape(kh * kw, c2, cout)
    wt = jnp.pad(wt, ((0, 0), (0, c2_pad - c2), (0, cout_pad - cout)))
    wt = wt.astype(jnp.bfloat16)
    b2 = jnp.pad(b.astype(jnp.float32), (0, cout_pad - cout)).reshape(1, cout_pad)

    grid = (n, nt)
    kern = functools.partial(_fam_conv_kernel, tile_h=tile_h, out_w=ww,
                             kh=kh, kw=kw, apply_gelu=apply_gelu)

    # Scoped-VMEM budget: 2 pipeline buffers for the activation tile and output
    # slab + weights + bias + f32 accumulator + slack.
    in_blk = th_halo * wp2 * c2_pad * 2
    out_blk = m * cout_pad * 4
    w_bytes = kh * kw * c2_pad * cout_pad * 2
    vmem_need = 2 * in_blk + 2 * out_blk + 2 * w_bytes + m * cout_pad * 4 + (2 << 20)
    vmem_limit = int(min(max(2 * vmem_need, 16 << 20), 48 << 20))

    out_flat = pl.pallas_call(
        kern,
        out_shape=jax.ShapeDtypeStruct((n, hh * ww, cout_pad), jnp.float32),
        grid=grid,
        in_specs=[
            # Haloed row tile for (image i, row-tile j); overlapping rows are
            # duplicated at prep time so every BlockSpec stays rectangular and
            # auto-pipelined (small, pipelined DMAs instead of one multi-MB
            # resident image per grid row).
            pl.BlockSpec((1, th_halo, wp2, c2_pad),
                         lambda i, j: (i * nt + j, 0, 0, 0)),
            # Weights / bias: constant block index -> DMA'd once, stay resident.
            pl.BlockSpec((kh * kw, c2_pad, cout_pad), lambda i, j: (0, 0, 0)),
            pl.BlockSpec((1, cout_pad), lambda i, j: (0, 0)),
        ],
        out_specs=pl.BlockSpec((1, m, cout_pad), lambda i, j: (i, j, 0)),
        compiler_params=pltpu.CompilerParams(
            dimension_semantics=("parallel", "parallel"),
            vmem_limit_bytes=vmem_limit),
    )(xt, wt, b2)

    out = out_flat[..., :cout].reshape(n, hh, ww, cout)
    return jnp.transpose(out, (0, 3, 1, 2))            # back to NCHW f32


def fam_forward(params, x1, x2):
    # FAM.merge = BasicConv(2C, C, k=3, s=1, relu=False)  ->  conv + bias only.
    return fam_conv(x1, x2, params["w"], params["b"], apply_gelu=False)


if __name__ == "__main__":
    key = jax.random.PRNGKey(0)
    k1, k2, k3, k4 = jax.random.split(key, 4)
    N, C, H, W = 2, 32, 16, 16          # small FAM(channel=32) test shape
    x1 = jax.random.normal(k1, (N, C, H, W), jnp.float32)
    x2 = jax.random.normal(k2, (N, C, H, W), jnp.float32)
    fan_in = 2 * C * 3 * 3
    params = {
        "w": jax.random.normal(k3, (C, 2 * C, 3, 3), jnp.float32) / math.sqrt(fan_in),
        "b": jax.random.normal(k4, (C,), jnp.float32) * 0.01,
    }

    out = jax.block_until_ready(jax.jit(fam_forward)(params, x1, x2))
    assert out.shape == (N, C, H, W)
    assert bool(jnp.all(jnp.isfinite(out)))

    # Cross-check against plain-XLA conv on the concatenated input (f32 reference;
    # kernel uses bf16 MXU operands with f32 accumulation -> loose tolerance).
    ref = jax.lax.conv_general_dilated(
        jnp.concatenate([x1, x2], axis=1), params["w"],
        window_strides=(1, 1), padding="SAME",
        dimension_numbers=("NCHW", "OIHW", "NCHW"),
        precision=jax.lax.Precision.HIGHEST,
    ) + params["b"].reshape(1, C, 1, 1)
    assert bool(jnp.allclose(out, ref, atol=5e-2, rtol=5e-2)), \
        float(jnp.max(jnp.abs(out - ref)))

    print("KERNEL_OK")
</pallas_src>

<mosaic_0001>
module attributes {stable_mosaic.version = 11 : i64} {
  func.func @_fam_conv_kernel(%arg0: i32, %arg1: i32, %arg2: memref<1x18x18x128xbf16, #tpu.memory_space<vmem>>, %arg3: memref<9x128x128xbf16, #tpu.memory_space<vmem>>, %arg4: memref<1x128xf32, #tpu.memory_space<vmem>>, %arg5: memref<1x256x128xf32, #tpu.memory_space<vmem>>) attributes {dimension_semantics = [#tpu.dimension_semantics<parallel>, #tpu.dimension_semantics<parallel>], iteration_bounds = array<i64: 2, 1>, scalar_prefetch = 0 : i64, scratch_operands = 0 : i64, tpu.core_type = #tpu.core_type<tc>, window_params = [{transform_indices = @transform_0, window_bounds = array<i64: 1, 18, 18, 128>}, {pipeline_mode = #tpu.pipeline_mode<synchronous>, transform_indices = @transform_1, window_bounds = array<i64: 9, 128, 128>}, {pipeline_mode = #tpu.pipeline_mode<synchronous>, transform_indices = @transform_2, window_bounds = array<i64: 1, 128>}, {transform_indices = @transform_3, window_bounds = array<i64: 1, 256, 128>}]} {
    %c0 = arith.constant 0 : index
    %c0_0 = arith.constant 0 : index
    %0 = vector.load %arg4[%c0, %c0_0] : memref<1x128xf32, #tpu.memory_space<vmem>>, vector<1x128xf32>
    %1 = vector.shape_cast %0 : vector<1x128xf32> to vector<1x128xf32>
    %2 = vector.broadcast %1 : vector<1x128xf32> to vector<256x128xf32>
    %c0_1 = arith.constant 0 : index
    %c0_2 = arith.constant 0 : index
    %c0_3 = arith.constant 0 : index
    %c0_4 = arith.constant 0 : index
    %3 = vector.load %arg2[%c0_1, %c0_2, %c0_3, %c0_4] : memref<1x18x18x128xbf16, #tpu.memory_space<vmem>>, vector<1x18x16x128xbf16>
    %4 = vector.shape_cast %3 : vector<1x18x16x128xbf16> to vector<18x16x128xbf16>
    %5 = vector.shape_cast %4 : vector<18x16x128xbf16> to vector<288x128xbf16>
    %6 = vector.extract_strided_slice %5 {offsets = [0, 0], sizes = [256, 128], strides = [1, 1]} : vector<288x128xbf16> to vector<256x128xbf16>
    %c0_5 = arith.constant 0 : index
    %c0_6 = arith.constant 0 : index
    %c0_7 = arith.constant 0 : index
    %7 = vector.load %arg3[%c0_5, %c0_6, %c0_7] : memref<9x128x128xbf16, #tpu.memory_space<vmem>>, vector<1x128x128xbf16>
    %8 = vector.shape_cast %7 : vector<1x128x128xbf16> to vector<128x128xbf16>
    %cst = arith.constant dense<0.000000e+00> : vector<256x128xf32>
    %9 = tpu.matmul %6, %8, %cst {dimension_numbers = #tpu.dot_dimension_numbers<[1], [0], [0], [1], [0, 0, 1, 1], [], []>} : vector<256x128xbf16>, vector<128x128xbf16>, vector<256x128xf32> -> vector<256x128xf32>
    %10 = arith.addf %2, %9 : vector<256x128xf32>
    %11 = vector.extract_strided_slice %5 {offsets = [16, 0], sizes = [256, 128], strides = [1, 1]} : vector<288x128xbf16> to vector<256x128xbf16>
    %c3 = arith.constant 3 : index
    %c0_8 = arith.constant 0 : index
    %c0_9 = arith.constant 0 : index
    %12 = vector.load %arg3[%c3, %c0_8, %c0_9] : memref<9x128x128xbf16, #tpu.memory_space<vmem>>, vector<1x128x128xbf16>
    %13 = vector.shape_cast %12 : vector<1x128x128xbf16> to vector<128x128xbf16>
    %cst_10 = arith.constant dense<0.000000e+00> : vector<256x128xf32>
    %14 = tpu.matmul %11, %13, %cst_10 {dimension_numbers = #tpu.dot_dimension_numbers<[1], [0], [0], [1], [0, 0, 1, 1], [], []>} : vector<256x128xbf16>, vector<128x128xbf16>, vector<256x128xf32> -> vector<256x128xf32>
    %15 = arith.addf %10, %14 : vector<256x128xf32>
    %16 = vector.extract_strided_slice %5 {offsets = [32, 0], sizes = [256, 128], strides = [1, 1]} : vector<288x128xbf16> to vector<256x128xbf16>
    %c6 = arith.constant 6 : index
    %c0_11 = arith.constant 0 : index
    %c0_12 = arith.constant 0 : index
    %17 = vector.load %arg3[%c6, %c0_11, %c0_12] : memref<9x128x128xbf16, #tpu.memory_space<vmem>>, vector<1x128x128xbf16>
    %18 = vector.shape_cast %17 : vector<1x128x128xbf16> to vector<128x128xbf16>
    %cst_13 = arith.constant dense<0.000000e+00> : vector<256x128xf32>
    %19 = tpu.matmul %16, %18, %cst_13 {dimension_numbers = #tpu.dot_dimension_numbers<[1], [0], [0], [1], [0, 0, 1, 1], [], []>} : vector<256x128xbf16>, vector<128x128xbf16>, vector<256x128xf32> -> vector<256x128xf32>
    %20 = arith.addf %15, %19 : vector<256x128xf32>
    %c0_14 = arith.constant 0 : index
    %c0_15 = arith.constant 0 : index
    %c1 = arith.constant 1 : index
    %c0_16 = arith.constant 0 : index
    %21 = vector.load %arg2[%c0_14, %c0_15, %c1, %c0_16] : memref<1x18x18x128xbf16, #tpu.memory_space<vmem>>, vector<1x18x16x128xbf16>
    %22 = vector.shape_cast %21 : vector<1x18x16x128xbf16> to vector<18x16x128xbf16>
    %23 = vector.shape_cast %22 : vector<18x16x128xbf16> to vector<288x128xbf16>
    %24 = vector.extract_strided_slice %23 {offsets = [0, 0], sizes = [256, 128], strides = [1, 1]} : vector<288x128xbf16> to vector<256x128xbf16>
    %c1_17 = arith.constant 1 : index
    %c0_18 = arith.constant 0 : index
    %c0_19 = arith.constant 0 : index
    %25 = vector.load %arg3[%c1_17, %c0_18, %c0_19] : memref<9x128x128xbf16, #tpu.memory_space<vmem>>, vector<1x128x128xbf16>
    %26 = vector.shape_cast %25 : vector<1x128x128xbf16> to vector<128x128xbf16>
    %cst_20 = arith.constant dense<0.000000e+00> : vector<256x128xf32>
    %27 = tpu.matmul %24, %26, %cst_20 {dimension_numbers = #tpu.dot_dimension_numbers<[1], [0], [0], [1], [0, 0, 1, 1], [], []>} : vector<256x128xbf16>, vector<128x128xbf16>, vector<256x128xf32> -> vector<256x128xf32>
    %28 = arith.addf %20, %27 : vector<256x128xf32>
    %29 = vector.extract_strided_slice %23 {offsets = [16, 0], sizes = [256, 128], strides = [1, 1]} : vector<288x128xbf16> to vector<256x128xbf16>
    %c4 = arith.constant 4 : index
    %c0_21 = arith.constant 0 : index
    %c0_22 = arith.constant 0 : index
    %30 = vector.load %arg3[%c4, %c0_21, %c0_22] : memref<9x128x128xbf16, #tpu.memory_space<vmem>>, vector<1x128x128xbf16>
    %31 = vector.shape_cast %30 : vector<1x128x128xbf16> to vector<128x128xbf16>
    %cst_23 = arith.constant dense<0.000000e+00> : vector<256x128xf32>
    %32 = tpu.matmul %29, %31, %cst_23 {dimension_numbers = #tpu.dot_dimension_numbers<[1], [0], [0], [1], [0, 0, 1, 1], [], []>} : vector<256x128xbf16>, vector<128x128xbf16>, vector<256x128xf32> -> vector<256x128xf32>
    %33 = arith.addf %28, %32 : vector<256x128xf32>
    %34 = vector.extract_strided_slice %23 {offsets = [32, 0], sizes = [256, 128], strides = [1, 1]} : vector<288x128xbf16> to vector<256x128xbf16>
    %c7 = arith.constant 7 : index
    %c0_24 = arith.constant 0 : index
    %c0_25 = arith.constant 0 : index
    %35 = vector.load %arg3[%c7, %c0_24, %c0_25] : memref<9x128x128xbf16, #tpu.memory_space<vmem>>, vector<1x128x128xbf16>
    %36 = vector.shape_cast %35 : vector<1x128x128xbf16> to vector<128x128xbf16>
    %cst_26 = arith.constant dense<0.000000e+00> : vector<256x128xf32>
    %37 = tpu.matmul %34, %36, %cst_26 {dimension_numbers = #tpu.dot_dimension_numbers<[1], [0], [0], [1], [0, 0, 1, 1], [], []>} : vector<256x128xbf16>, vector<128x128xbf16>, vector<256x128xf32> -> vector<256x128xf32>
    %38 = arith.addf %33, %37 : vector<256x128xf32>
    %c0_27 = arith.constant 0 : index
    %c0_28 = arith.constant 0 : index
    %c2 = arith.constant 2 : index
    %c0_29 = arith.constant 0 : index
    %39 = vector.load %arg2[%c0_27, %c0_28, %c2, %c0_29] : memref<1x18x18x128xbf16, #tpu.memory_space<vmem>>, vector<1x18x16x128xbf16>
    %40 = vector.shape_cast %39 : vector<1x18x16x128xbf16> to vector<18x16x128xbf16>
    %41 = vector.shape_cast %40 : vector<18x16x128xbf16> to vector<288x128xbf16>
    %42 = vector.extract_strided_slice %41 {offsets = [0, 0], sizes = [256, 128], strides = [1, 1]} : vector<288x128xbf16> to vector<256x128xbf16>
    %c2_30 = arith.constant 2 : index
    %c0_31 = arith.constant 0 : index
    %c0_32 = arith.constant 0 : index
    %43 = vector.load %arg3[%c2_30, %c0_31, %c0_32] : memref<9x128x128xbf16, #tpu.memory_space<vmem>>, vector<1x128x128xbf16>
    %44 = vector.shape_cast %43 : vector<1x128x128xbf16> to vector<128x128xbf16>
    %cst_33 = arith.constant dense<0.000000e+00> : vector<256x128xf32>
    %45 = tpu.matmul %42, %44, %cst_33 {dimension_numbers = #tpu.dot_dimension_numbers<[1], [0], [0], [1], [0, 0, 1, 1], [], []>} : vector<256x128xbf16>, vector<128x128xbf16>, vector<256x128xf32> -> vector<256x128xf32>
    %46 = arith.addf %38, %45 : vector<256x128xf32>
    %47 = vector.extract_strided_slice %41 {offsets = [16, 0], sizes = [256, 128], strides = [1, 1]} : vector<288x128xbf16> to vector<256x128xbf16>
    %c5 = arith.constant 5 : index
    %c0_34 = arith.constant 0 : index
    %c0_35 = arith.constant 0 : index
    %48 = vector.load %arg3[%c5, %c0_34, %c0_35] : memref<9x128x128xbf16, #tpu.memory_space<vmem>>, vector<1x128x128xbf16>
    %49 = vector.shape_cast %48 : vector<1x128x128xbf16> to vector<128x128xbf16>
    %cst_36 = arith.constant dense<0.000000e+00> : vector<256x128xf32>
    %50 = tpu.matmul %47, %49, %cst_36 {dimension_numbers = #tpu.dot_dimension_numbers<[1], [0], [0], [1], [0, 0, 1, 1], [], []>} : vector<256x128xbf16>, vector<128x128xbf16>, vector<256x128xf32> -> vector<256x128xf32>
    %51 = arith.addf %46, %50 : vector<256x128xf32>
    %52 = vector.extract_strided_slice %41 {offsets = [32, 0], sizes = [256, 128], strides = [1, 1]} : vector<288x128xbf16> to vector<256x128xbf16>
    %c8 = arith.constant 8 : index
    %c0_37 = arith.constant 0 : index
    %c0_38 = arith.constant 0 : index
    %53 = vector.load %arg3[%c8, %c0_37, %c0_38] : memref<9x128x128xbf16, #tpu.memory_space<vmem>>, vector<1x128x128xbf16>
    %54 = vector.shape_cast %53 : vector<1x128x128xbf16> to vector<128x128xbf16>
    %cst_39 = arith.constant dense<0.000000e+00> : vector<256x128xf32>
    %55 = tpu.matmul %52, %54, %cst_39 {dimension_numbers = #tpu.dot_dimension_numbers<[1], [0], [0], [1], [0, 0, 1, 1], [], []>} : vector<256x128xbf16>, vector<128x128xbf16>, vector<256x128xf32> -> vector<256x128xf32>
    %56 = arith.addf %51, %55 : vector<256x128xf32>
    %c0_40 = arith.constant 0 : index
    %c0_41 = arith.constant 0 : index
    %c0_42 = arith.constant 0 : index
    %57 = vector.load %arg5[%c0_40, %c0_41, %c0_42] : memref<1x256x128xf32, #tpu.memory_space<vmem>>, vector<1x256x128xf32>
    %58 = vector.shape_cast %57 : vector<1x256x128xf32> to vector<256x128xf32>
    %59 = vector.shape_cast %56 : vector<256x128xf32> to vector<1x256x128xf32>
    tpu.vector_store %arg5[%c0_40, %c0_41, %c0_42], %59 {strides = array<i32>} : memref<1x256x128xf32, #tpu.memory_space<vmem>>, vector<1x256x128xf32>,
    return
  }
  func.func @transform_0(%arg0: i32, %arg1: i32) -> (i32, i32, i32, i32) {
    %c1_i32 = arith.constant 1 : i32
    %0 = arith.muli %arg0, %c1_i32 : i32
    %1 = arith.addi %0, %arg1 : i32
    %c0_i32 = arith.constant 0 : i32
    %c0_i32_0 = arith.constant 0 : i32
    %c0_i32_1 = arith.constant 0 : i32
    %c0_i32_2 = arith.constant 0 : i32
    return %1, %c0_i32, %c0_i32_0, %c0_i32_1 : i32, i32, i32, i32
  }
  func.func @transform_1(%arg0: i32, %arg1: i32) -> (i32, i32, i32) {
    %c0_i32 = arith.constant 0 : i32
    %c0_i32_0 = arith.constant 0 : i32
    %c0_i32_1 = arith.constant 0 : i32
    %c0_i32_2 = arith.constant 0 : i32
    return %c0_i32, %c0_i32_0, %c0_i32_1 : i32, i32, i32
  }
  func.func @transform_2(%arg0: i32, %arg1: i32) -> (i32, i32) {
    %c0_i32 = arith.constant 0 : i32
    %c0_i32_0 = arith.constant 0 : i32
    %c0_i32_1 = arith.constant 0 : i32
    return %c0_i32, %c0_i32_0 : i32, i32
  }
  func.func @transform_3(%arg0: i32, %arg1: i32) -> (i32, i32, i32) {
    %c0_i32 = arith.constant 0 : i32
    %c0_i32_0 = arith.constant 0 : i32
    return %arg0, %arg1, %c0_i32 : i32, i32, i32
  }
}

</mosaic_0001>

<llo_original>
// kernel: fam_forward.1
$region0: #{fam_forward.1}
  #allocation0 [shape = 'u32[]', space=smem, size = 0x4, offset = 0x4, fixed_abs, tag = 'smem constant byte address 0x4 - core index']
  #allocation1 [shape = 'u32[144,128]{1,0:T(1,128)}', space=vmem, size = 0x12000, scoped, tag = 'internal scratch']
  %s0 = inlined_call_operand.vmem [shape: bf16[2,18,18,128], index: 0, kind: input, shape index: {}]
  %s1 = inlined_call_operand.vmem [shape: bf16[9,128,128], index: 1, kind: input, shape index: {}]
  %s2 = inlined_call_operand.vmem [shape: f32[1,128], index: 2, kind: input, shape index: {}]
  %s3 = inlined_call_operand.hbm [shape: f32[2,256,128], index: 3, kind: output, shape index: {}]
  %s4 = sld [smem:[#allocation0]]
  $region45: #{fam_forward.1} parent=0
    _
  %s6 = ssub.s32 1, %s4
  %s7 = scalar_select 0, %s6, %s4
  $region1: #{fam_forward.1} parent=0
    #allocation2 [shape = 'u8[262144]{0}', space=vmem, size = 0x40000, scoped, tag = 'output window, operand 0']
    #allocation3 [shape = 's32[2]{0}', space=sflag, size = 0x8, scoped, tag = 'scoped memory for fam_forward.1']
    %8 = vsyncpa [#allocation3], 0
    %s9 = scalar_lea.sflag [#allocation3], 1
    %10 = vsyncpa %s9, 0
    loop: start=0, step=1, limit=4
    $region2: #{fam_forward.1} parent=1 // loop_pre_header
      _
    $region3: #{fam_forward.1} parent=1 // loop_header
      %s12 = sphi 0, %s16
      %p13 = scmp.ge.s32.totalorder %s12, 4
      %s19 = sphi 0, %s31
      %s20 = sphi 0, %s27
      %s21 = sphi 0, %s19
      %s22 = sphi 0, %s20
      %s23 = sphi 0, %s21
      %s24 = sphi 0, %s22
      %s36 = sphi 0, %s38
      %s39 = sphi 0, %s36
      %s40 = sphi 0, %s39
      %s56 = sphi 0, %s40
      %s60 = sphi 0, %s60
      %s62 = sphi 0, %s60
      %s63 = sphi 0, %s62
      %s77 = sphi 0, %s63
      %s81 = sphi 0, %s81
      %s83 = sphi 0, %s81
      %s84 = sphi 0, %s83
      %s98 = sphi 0, %s84
      %s106 = sphi 0, %s108
      %s109 = sphi 0, %s106
      %s110 = sphi 0, %s109
      %s126 = sphi 0, %s110
    $region4: #{fam_forward.1} parent=1 // loop_header_branch
      %15 = sbr.rel (%p13) target = $region8
    $region5: #{fam_forward.1} parent=1 // loop_body
      %s17 = ssub.s32 %s12, 1
      %s18 = ssub.s32 %s12, 2
      %s25 = sadd.s32 1, %s20
      %p26 = scmp.ge.s32.totalorder %s25, 1
      %s27 = scalar_select %p26, 0, %s25
      %s28 = sadd.s32 1, %s19
      %s29 = scalar_select %p26, %s28, %s19
      %p30 = scmp.ge.s32.totalorder %s29, 2
      %s31 = scalar_select %p30, 0, %s29
      %s32 = sadd.s32 %s19, %s20
      %s33 = sadd.s32 %s31, %s27
      %s34 = ssub.s32 %s32, %s33
      %p35 = scmp.eq.s32.totalorder %s34, 0
      %s37 = sadd.s32 %s36, 1
      %s38 = scalar_select %p35, %s36, %s37
      %p41 = pneg %p35
      %p42 = scmp.eq.s32.totalorder %s12, 1
      %p43 = por %p41, %p42
      %p44 = scmp.ne.s32.totalorder %s36, %s39
      %p45 = scmp.eq.s32.totalorder %s12, 0
      %p46 = por %p44, %p45
      %p47 = scmp.ne.s32.totalorder %s36, %s39
      %p48 = scmp.eq.s32.totalorder %s17, 1
      %p49 = por %p47, %p48
      %p50 = scmp.ne.s32.totalorder %s39, %s40
      %p51 = scmp.eq.s32.totalorder %s17, 0
      %p52 = por %p50, %p51
      %p53 = scmp.ne.s32.totalorder %s39, %s40
      %p54 = scmp.eq.s32.totalorder %s18, 1
      %p55 = por %p53, %p54
      %p57 = scmp.ne.s32.totalorder %s40, %s56
      %p58 = scmp.eq.s32.totalorder %s18, 0
      %p59 = por %p57, %p58
      %s61 = sadd.s32 %s60, 1
      %p64 = scmp.eq.s32.totalorder %s12, 1
      %p65 = scmp.ne.s32.totalorder %s60, %s62
      %p66 = scmp.eq.s32.totalorder %s12, 0
      %p67 = por %p65, %p66
      %p68 = scmp.ne.s32.totalorder %s60, %s62
      %p69 = scmp.eq.s32.totalorder %s17, 1
      %p70 = por %p68, %p69
      %p71 = scmp.ne.s32.totalorder %s62, %s63
      %p72 = scmp.eq.s32.totalorder %s17, 0
      %p73 = por %p71, %p72
      %p74 = scmp.ne.s32.totalorder %s62, %s63
      %p75 = scmp.eq.s32.totalorder %s18, 1
      %p76 = por %p74, %p75
      %p78 = scmp.ne.s32.totalorder %s63, %s77
      %p79 = scmp.eq.s32.totalorder %s18, 0
      %p80 = por %p78, %p79
      %s82 = sadd.s32 %s81, 1
      %p85 = scmp.eq.s32.totalorder %s12, 1
      %p86 = scmp.ne.s32.totalorder %s81, %s83
      %p87 = scmp.eq.s32.totalorder %s12, 0
      %p88 = por %p86, %p87
      %p89 = scmp.ne.s32.totalorder %s81, %s83
      %p90 = scmp.eq.s32.totalorder %s17, 1
      %p91 = por %p89, %p90
      %p92 = scmp.ne.s32.totalorder %s83, %s84
      %p93 = scmp.eq.s32.totalorder %s17, 0
      %p94 = por %p92, %p93
      %p95 = scmp.ne.s32.totalorder %s83, %s84
      %p96 = scmp.eq.s32.totalorder %s18, 1
      %p97 = por %p95, %p96
      %p99 = scmp.ne.s32.totalorder %s84, %s98
      %p100 = scmp.eq.s32.totalorder %s18, 0
      %p101 = por %p99, %p100
      %s102 = ssub.s32 %s19, %s31
      %s103 = ssub.s32 %s20, %s27
      %s104 = sor.u32 %s102, %s103
      %p105 = scmp.eq.s32.totalorder %s104, 0
      %s107 = sadd.s32 %s106, 1
      %s108 = scalar_select %p105, %s106, %s107
      %p111 = pneg %p105
      %p112 = scmp.eq.s32.totalorder %s12, 1
      %p113 = por %p111, %p112
      %p114 = scmp.ne.s32.totalorder %s106, %s109
      %p115 = scmp.eq.s32.totalorder %s12, 0
      %p116 = por %p114, %p115
      %p117 = scmp.ne.s32.totalorder %s106, %s109
      %p118 = scmp.eq.s32.totalorder %s17, 1
      %p119 = por %p117, %p118
      %p120 = scmp.ne.s32.totalorder %s109, %s110
      %p121 = scmp.eq.s32.totalorder %s17, 0
      %p122 = por %p120, %p121
      %p123 = scmp.ne.s32.totalorder %s109, %s110
      %p124 = scmp.eq.s32.totalorder %s18, 1
      %p125 = por %p123, %p124
      %p127 = scmp.ne.s32.totalorder %s110, %s126
      %p128 = scmp.eq.s32.totalorder %s18, 0
      %p129 = por %p127, %p128
      %p130 = scmp.le.s32.totalorder 1, %s12
      %p131 = scmp.lt.s32.totalorder %s12, 3
      %p132 = pnand %p130, %p131
      %p133 = pneg %p132
      // Predicated region
      $region9: #{fam_forward.1} parent=5 // pred_check
        _
      $region10: #{fam_forward.1} parent=5 // pred_check_branch
        %135 = sbr.rel (%p132) target = $region12
      $region11: #{fam_forward.1} parent=5 // pred_region
        %s136 = ssub.s32 %s12, 1
        // Predicated region
        $region13: #{fam_forward.1} parent=11 // pred_check
          %p137 = pneg %p73
        $region14: #{fam_forward.1} parent=11 // pred_check_branch
          %139 = sbr.rel (%p137) target = $region16
        $region15: #{fam_forward.1} parent=11 // pred_region
          _
        $region16: #{fam_forward.1} parent=11 // pred_fallthru
          _
        // Predicated region
        $region17: #{fam_forward.1} parent=11 // pred_check
          %p140 = pneg %p94
        $region18: #{fam_forward.1} parent=11 // pred_check_branch
          %142 = sbr.rel (%p140) target = $region20
        $region19: #{fam_forward.1} parent=11 // pred_region
          _
        $region20: #{fam_forward.1} parent=11 // pred_fallthru
          _
      $region12: #{fam_forward.1} parent=5 // pred_fallthru
        _
      %p143 = scmp.lt.s32.totalorder %s12, 2
      // Predicated region
      $region21: #{fam_forward.1} parent=5 // pred_check
        %p144 = pneg %p143
      $region22: #{fam_forward.1} parent=5 // pred_check_branch
        %146 = sbr.rel (%p144) target = $region24
      $region23: #{fam_forward.1} parent=5 // pred_region
        // Predicated region
        $region25: #{fam_forward.1} parent=23 // pred_check
          %p147 = pneg %p46
        $region26: #{fam_forward.1} parent=23 // pred_check_branch
          %149 = sbr.rel (%p147) target = $region28
        $region27: #{fam_forward.1} parent=23 // pred_region
          %s150 = sadd.s32 %s19, %s20
          %p151 = scmp.lt.s32.totalorder %s150, 1
          %s152 = scalar_select %p151, %s150, 1
          %s153 = smul.addr %s152, 54
          %s154 = smul.addr %s153, 4
          %s155 = scalar_lea.vmem %s0, %s154
          %s156 = sadd.s32 %s19, %s20
        $region28: #{fam_forward.1} parent=23 // pred_fallthru
          _
      $region24: #{fam_forward.1} parent=5 // pred_fallthru
        _
      %p157 = scmp.le.s32.totalorder 1, %s12
      %p158 = scmp.lt.s32.totalorder %s12, 3
      %p159 = pnand %p157, %p158
      %p160 = pneg %p159
      // Predicated region
      $region29: #{fam_forward.1} parent=5 // pred_check
        _
      $region30: #{fam_forward.1} parent=5 // pred_check_branch
        %162 = sbr.rel (%p159) target = $region32
      $region31: #{fam_forward.1} parent=5 // pred_region
        %s163 = ssub.s32 %s12, 1
        %s164 = sadd.s32 %s21, %s22
        %p165 = scmp.lt.s32.totalorder %s164, 1
        %s166 = scalar_select %p165, %s164, 1
        %s167 = smul.addr %s166, 54
        %s168 = smul.addr %s167, 4
        %s169 = scalar_lea.vmem %s0, %s168
        %p170 = pneg %p52
        %p171 = pneg %p49
        %p172 = pneg %p73
        %p173 = pneg %p70
        %p174 = pneg %p94
        %p175 = pneg %p91
        %p176 = pneg %p122
        %p177 = pneg %p119
        %s178 = sand.u32 %s109, 1
        %s179 = scalar_lea.sflag [#allocation3], %s178
        %s180 = sand.u32 %s109, 1
        %s181 = smul.addr %s180, 256
        %s182 = scalar_lea.vmem [#allocation2], %s181
        %s183 = sadd.s32 %s21, %s22
        %p184 = scmp.lt.s32.totalorder %s183, 1
        %s185 = scalar_select %p184, %s183, 1
        %s186 = smul.addr %s185, 54
        %s187 = smul.addr %s186, 4
        %s188 = scalar_lea.vmem %s0, %s187
        %s189 = sadd.s32 %s21, %s22
        %s190 = smul.u32 32, %s22
        %v192 = vld [vmem:[%s2] sm:$0x1]
        %v194 = vlaneseq
        %v195 = vshrl.u32 %v194, 7
        %v196 = vsub.s32 0, %v195
        %v197 = vrot.slane %v192, %v196
        %v199 = vld [vmem:[%s188] sm:$0xf]
        %v200 = vld [vmem:[%s188 + $0x4] sm:$0xf]
        %v201 = vld [vmem:[%s188 + $0xc] sm:$0xf]
        %v202 = vld [vmem:[%s188 + $0x10] sm:$0xf]
        %v203 = vld [vmem:[%s188 + $0x18] sm:$0xf]
        %v204 = vld [vmem:[%s188 + $0x1c] sm:$0xf]
        %v205 = vld [vmem:[%s188 + $0x24] sm:$0xf]
        %v206 = vld [vmem:[%s188 + $0x28] sm:$0xf]
        %v207 = vld [vmem:[%s188 + $0x30] sm:$0xf]
        %v208 = vld [vmem:[%s188 + $0x34] sm:$0xf]
        %v209 = vld [vmem:[%s188 + $0x3c] sm:$0xf]
        %v210 = vld [vmem:[%s188 + $0x40] sm:$0xf]
        %v211 = vld [vmem:[%s188 + $0x48] sm:$0xf]
        %v212 = vld [vmem:[%s188 + $0x4c] sm:$0xf]
        %v213 = vld [vmem:[%s188 + $0x54] sm:$0xf]
        %v214 = vld [vmem:[%s188 + $0x58] sm:$0xf]
        %v215 = vld [vmem:[%s188 + $0x60] sm:$0xf]
        %v216 = vld [vmem:[%s188 + $0x64] sm:$0xf]
        %v217 = vld [vmem:[%s188 + $0x6c] sm:$0xf]
        %v218 = vld [vmem:[%s188 + $0x70] sm:$0xf]
        %v219 = vld [vmem:[%s188 + $0x78] sm:$0xf]
        %v220 = vld [vmem:[%s188 + $0x7c] sm:$0xf]
        %v221 = vld [vmem:[%s188 + $0x84] sm:$0xf]
        %v222 = vld [vmem:[%s188 + $0x88] sm:$0xf]
        %v223 = vld [vmem:[%s188 + $0x90] sm:$0xf]
        %v224 = vld [vmem:[%s188 + $0x94] sm:$0xf]
        %v225 = vld [vmem:[%s188 + $0x9c] sm:$0xf]
        %v226 = vld [vmem:[%s188 + $0xa0] sm:$0xf]
        %v227 = vld [vmem:[%s188 + $0xa8] sm:$0xf]
        %v228 = vld [vmem:[%s188 + $0xac] sm:$0xf]
        %v229 = vld [vmem:[%s188 + $0xb4] sm:$0xf]
        %v230 = vld [vmem:[%s188 + $0xb8] sm:$0xf]
        %v231 = vld [vmem:[%s188 + $0xc0] sm:$0xf]
        %v232 = vld [vmem:[%s188 + $0xc4] sm:$0xf]
        %v233 = vld [vmem:[%s188 + $0xcc] sm:$0xf]
        %v234 = vld [vmem:[%s188 + $0xd0] sm:$0xf]
        %v235 = vld [vmem:[%s1] sm:$0xf]
        %v236 = vld [vmem:[%s1 + $0x4] sm:$0xf]
        %v237 = vld [vmem:[%s1 + $0x8] sm:$0xf]
        %v238 = vld [vmem:[%s1 + $0xc] sm:$0xf]
        %v239 = vld [vmem:[%s1 + $0x10] sm:$0xf]
        %v240 = vld [vmem:[%s1 + $0x14] sm:$0xf]
        %v241 = vld [vmem:[%s1 + $0x18] sm:$0xf]
        %v242 = vld [vmem:[%s1 + $0x1c] sm:$0xf]
        %v243 = vld [vmem:[%s1 + $0x20] sm:$0xf]
        %v244 = vld [vmem:[%s1 + $0x24] sm:$0xf]
        %v245 = vld [vmem:[%s1 + $0x28] sm:$0xf]
        %v246 = vld [vmem:[%s1 + $0x2c] sm:$0xf]
        %v247 = vld [vmem:[%s1 + $0x30] sm:$0xf]
        %v248 = vld [vmem:[%s1 + $0x34] sm:$0xf]
        %v249 = vld [vmem:[%s1 + $0x38] sm:$0xf]
        %v250 = vld [vmem:[%s1 + $0x3c] sm:$0xf]
        %v283 = vunpack.c.l.b16 %v199
        %v284 = vunpack.c.l.b16 %v200
        %v285 = vunpack.c.l.b16 %v201
        %v286 = vunpack.c.l.b16 %v202
        %v287 = vunpack.c.l.b16 %v203
        %v288 = vunpack.c.l.b16 %v204
        %v289 = vunpack.c.l.b16 %v205
        %v290 = vunpack.c.l.b16 %v206
        %v291 = vunpack.c.l.b16 %v207
        %v292 = vunpack.c.l.b16 %v208
        %v293 = vunpack.c.l.b16 %v209
        %v294 = vunpack.c.l.b16 %v210
        %v295 = vunpack.c.l.b16 %v211
        %v296 = vunpack.c.l.b16 %v212
        %v297 = vunpack.c.l.b16 %v213
        %v298 = vunpack.c.l.b16 %v214
        %v299 = vunpack.c.l.b16 %v215
        %v300 = vunpack.c.l.b16 %v216
        %v301 = vunpack.c.l.b16 %v217
        %v302 = vunpack.c.l.b16 %v218
        %v303 = vunpack.c.l.b16 %v219
        %v304 = vunpack.c.l.b16 %v220
        %v305 = vunpack.c.l.b16 %v221
        %v306 = vunpack.c.l.b16 %v222
        %v307 = vunpack.c.l.b16 %v223
        %v308 = vunpack.c.l.b16 %v224
        %v309 = vunpack.c.l.b16 %v225
        %v310 = vunpack.c.l.b16 %v226
        %v311 = vunpack.c.l.b16 %v227
        %v312 = vunpack.c.l.b16 %v228
        %v313 = vunpack.c.l.b16 %v229
        %v314 = vunpack.c.l.b16 %v230
        %v315 = vpack.c.b16 %v284, %v283
        %v316 = vpack.c.b16 %v286, %v285
        %v317 = vpack.c.b16 %v288, %v287
        %v318 = vpack.c.b16 %v290, %v289
        %v319 = vpack.c.b16 %v292, %v291
        %v320 = vpack.c.b16 %v294, %v293
        %v321 = vpack.c.b16 %v296, %v295
        %v322 = vpack.c.b16 %v298, %v297
        %v323 = vpack.c.b16 %v300, %v299
        %v324 = vpack.c.b16 %v302, %v301
        %v325 = vpack.c.b16 %v304, %v303
        %v326 = vpack.c.b16 %v306, %v305
        %v327 = vpack.c.b16 %v308, %v307
        %v328 = vpack.c.b16 %v310, %v309
        %v329 = vpack.c.b16 %v312, %v311
        %v330 = vpack.c.b16 %v314, %v313
        %v363 = vunpack.c.l.b16 %v235
        %v364 = vunpack.c.l.b16 %v236
        %v365 = vunpack.c.l.b16 %v237
        %v366 = vunpack.c.l.b16 %v238
        %v367 = vunpack.c.l.b16 %v239
        %v368 = vunpack.c.l.b16 %v240
        %v369 = vunpack.c.l.b16 %v241
        %v370 = vunpack.c.l.b16 %v242
        %v371 = vunpack.c.l.b16 %v243
        %v372 = vunpack.c.l.b16 %v244
        %v373 = vunpack.c.l.b16 %v245
        %v374 = vunpack.c.l.b16 %v246
        %v375 = vunpack.c.l.b16 %v247
        %v376 = vunpack.c.l.b16 %v248
        %v377 = vunpack.c.l.b16 %v249
        %v378 = vunpack.c.l.b16 %v250
        %v379 = vpack.c.b16 %v364, %v363
        %v380 = vpack.c.b16 %v366, %v365
        %v381 = vpack.c.b16 %v368, %v367
        %v382 = vpack.c.b16 %v370, %v369
        %v383 = vpack.c.b16 %v372, %v371
        %v384 = vpack.c.b16 %v374, %v373
        %v385 = vpack.c.b16 %v376, %v375
        %v386 = vpack.c.b16 %v378, %v377
        %395 = vmatprep.subr.bf16.mxu0 0
        %396 = vmatpush1.bf16.msra.mxu0 %v386
        %397 = vmatprep.subr.bf16.mxu0 0
        %398 = vmatpush1.bf16.msra.mxu0 %v385
        %399 = vmatprep.subr.bf16.mxu0 0
        %400 = vmatpush1.bf16.msra.mxu0 %v384
        %401 = vmatprep.subr.bf16.mxu0 0
        %402 = vmatpush1.bf16.msra.mxu0 %v383
        %403 = vmatprep.subr.bf16.mxu0 0
        %404 = vmatpush1.bf16.msra.mxu0 %v382
        %405 = vmatprep.subr.bf16.mxu0 0
        %406 = vmatpush1.bf16.msra.mxu0 %v381
        %407 = vmatprep.subr.bf16.mxu0 0
        %408 = vmatpush1.bf16.msra.mxu0 %v380
        %409 = vmatprep.subr.bf16.mxu0 0
        %410 = vmatpush1.bf16.msra.mxu0 %v379
        %411 = vmatprep.subr.bf16.mxu0 0
        %412 = vmatpush2.bf16.msra.mxu0 0
        %413 = vmatprep.subr.bf16.mxu0 0
        %414 = vmatpush2.bf16.msra.mxu0 0
        %415 = vmatprep.subr.bf16.mxu0 0
        %416 = vmatpush2.bf16.msra.mxu0 0
        %417 = vmatprep.subr.bf16.mxu0 0
        %418 = vmatpush2.bf16.msra.mxu0 0
        %419 = vmatprep.subr.bf16.mxu0 0
        %420 = vmatpush2.bf16.msra.mxu0 0
        %421 = vmatprep.subr.bf16.mxu0 0
        %422 = vmatpush2.bf16.msra.mxu0 0
        %423 = vmatprep.subr.bf16.mxu0 0
        %424 = vmatpush2.bf16.msra.mxu0 0
        %425 = vmatprep.subr.bf16.mxu0 0
        %426 = vmatpush2.bf16.msra.mxu0 0
        %427 = vmatprep.mubr.bf16.mxu0 0
        %428 = vmatmul.mubr.bf16.gmra.mxu0 %v315
        %v429 = vpop.f32.mrf.mxu0
        %v430 = vadd.f32 0.0, %v429
        %v431 = vpop.f32.mrf.mxu0
        %v432 = vpop.f32.mrf.mxu0
        %v433 = vadd.f32 0.0, %v432
        %v434 = vpop.f32.mrf.mxu0
        %435 = vmatprep.mubr.bf16.mxu0 0
        %436 = vmatmul.mubr.bf16.gmra.mxu0 %v316
        %v437 = vpop.f32.mrf.mxu0
        %v438 = vadd.f32 0.0, %v437
        %v439 = vpop.f32.mrf.mxu0
        %v440 = vpop.f32.mrf.mxu0
        %v441 = vadd.f32 0.0, %v440
        %v442 = vpop.f32.mrf.mxu0
        %443 = vmatprep.mubr.bf16.mxu0 0
        %444 = vmatmul.mubr.bf16.gmra.mxu0 %v317
        %v445 = vpop.f32.mrf.mxu0
        %v446 = vadd.f32 0.0, %v445
        %v447 = vpop.f32.mrf.mxu0
        %v448 = vpop.f32.mrf.mxu0
        %v449 = vadd.f32 0.0, %v448
        %v450 = vpop.f32.mrf.mxu0
        %451 = vmatprep.mubr.bf16.mxu0 0
        %452 = vmatmul.mubr.bf16.gmra.mxu0 %v318
        %v453 = vpop.f32.mrf.mxu0
        %v454 = vadd.f32 0.0, %v453
        %v455 = vpop.f32.mrf.mxu0
        %v456 = vpop.f32.mrf.mxu0
        %v457 = vadd.f32 0.0, %v456
        %v458 = vpop.f32.mrf.mxu0
        %459 = vmatprep.mubr.bf16.mxu0 0
        %460 = vmatmul.mubr.bf16.gmra.mxu0 %v319
        %v461 = vpop.f32.mrf.mxu0
        %v462 = vadd.f32 0.0, %v461
        %v463 = vpop.f32.mrf.mxu0
        %v464 = vpop.f32.mrf.mxu0
        %v465 = vadd.f32 0.0, %v464
        %v466 = vpop.f32.mrf.mxu0
        %467 = vmatprep.mubr.bf16.mxu0 0
        %468 = vmatmul.mubr.bf16.gmra.mxu0 %v320
        %v469 = vpop.f32.mrf.mxu0
        %v470 = vadd.f32 0.0, %v469
        %v471 = vpop.f32.mrf.mxu0
        %v472 = vpop.f32.mrf.mxu0
        %v473 = vadd.f32 0.0, %v472
        %v474 = vpop.f32.mrf.mxu0
        %475 = vmatprep.mubr.bf16.mxu0 0
        %476 = vmatmul.mubr.bf16.gmra.mxu0 %v321
        %v477 = vpop.f32.mrf.mxu0
        %v478 = vadd.f32 0.0, %v477
        %v479 = vpop.f32.mrf.mxu0
        %v480 = vpop.f32.mrf.mxu0
        %v481 = vadd.f32 0.0, %v480
        %v482 = vpop.f32.mrf.mxu0
        %483 = vmatprep.mubr.bf16.mxu0 0
        %484 = vmatmul.mubr.bf16.gmra.mxu0 %v322
        %v485 = vpop.f32.mrf.mxu0
        %v486 = vadd.f32 0.0, %v485
        %v487 = vpop.f32.mrf.mxu0
        %v488 = vpop.f32.mrf.mxu0
        %v489 = vadd.f32 0.0, %v488
        %v490 = vpop.f32.mrf.mxu0
        %491 = vmatprep.mubr.bf16.mxu0 0
        %492 = vmatmul.mubr.bf16.gmra.mxu0 %v323
        %v493 = vpop.f32.mrf.mxu0
        %v494 = vadd.f32 0.0, %v493
        %v495 = vpop.f32.mrf.mxu0
        %v496 = vpop.f32.mrf.mxu0
        %v497 = vadd.f32 0.0, %v496
        %v498 = vpop.f32.mrf.mxu0
        %499 = vmatprep.mubr.bf16.mxu0 0
        %500 = vmatmul.mubr.bf16.gmra.mxu0 %v324
        %v501 = vpop.f32.mrf.mxu0
        %v502 = vadd.f32 0.0, %v501
        %v503 = vpop.f32.mrf.mxu0
        %v504 = vpop.f32.mrf.mxu0
        %v505 = vadd.f32 0.0, %v504
        %v506 = vpop.f32.mrf.mxu0
        %507 = vmatprep.mubr.bf16.mxu0 0
        %508 = vmatmul.mubr.bf16.gmra.mxu0 %v325
        %v509 = vpop.f32.mrf.mxu0
        %v510 = vadd.f32 0.0, %v509
        %v511 = vpop.f32.mrf.mxu0
        %v512 = vpop.f32.mrf.mxu0
        %v513 = vadd.f32 0.0, %v512
        %v514 = vpop.f32.mrf.mxu0
        %515 = vmatprep.mubr.bf16.mxu0 0
        %516 = vmatmul.mubr.bf16.gmra.mxu0 %v326
        %v517 = vpop.f32.mrf.mxu0
        %v518 = vadd.f32 0.0, %v517
        %v519 = vpop.f32.mrf.mxu0
        %v520 = vpop.f32.mrf.mxu0
        %v521 = vadd.f32 0.0, %v520
        %v522 = vpop.f32.mrf.mxu0
        %523 = vmatprep.mubr.bf16.mxu0 0
        %524 = vmatmul.mubr.bf16.gmra.mxu0 %v327
        %v525 = vpop.f32.mrf.mxu0
        %v526 = vadd.f32 0.0, %v525
        %v527 = vpop.f32.mrf.mxu0
        %v528 = vpop.f32.mrf.mxu0
        %v529 = vadd.f32 0.0, %v528
        %v530 = vpop.f32.mrf.mxu0
        %531 = vmatprep.mubr.bf16.mxu0 0
        %532 = vmatmul.mubr.bf16.gmra.mxu0 %v328
        %v533 = vpop.f32.mrf.mxu0
        %v534 = vadd.f32 0.0, %v533
        %v535 = vpop.f32.mrf.mxu0
        %v536 = vpop.f32.mrf.mxu0
        %v537 = vadd.f32 0.0, %v536
        %v538 = vpop.f32.mrf.mxu0
        %539 = vmatprep.mubr.bf16.mxu0 0
        %540 = vmatmul.mubr.bf16.gmra.mxu0 %v329
        %v541 = vpop.f32.mrf.mxu0
        %v542 = vadd.f32 0.0, %v541
        %v543 = vpop.f32.mrf.mxu0
        %v544 = vpop.f32.mrf.mxu0
        %v545 = vadd.f32 0.0, %v544
        %v546 = vpop.f32.mrf.mxu0
        %547 = vmatprep.mubr.bf16.mxu0 0
        %548 = vmatmul.mubr.bf16.gmra.mxu0 %v330
        %v549 = vpop.f32.mrf.mxu0
        %v550 = vadd.f32 0.0, %v549
        %v551 = vpop.f32.mrf.mxu0
        %v552 = vpop.f32.mrf.mxu0
        %v553 = vadd.f32 0.0, %v552
        %v554 = vpop.f32.mrf.mxu0
        %555 = vdwg.mxu0
        %v556 = vadd.f32 %v197, %v430
        %v557 = vadd.f32 %v197, %v433
        %v558 = vadd.f32 %v197, %v438
        %v559 = vadd.f32 %v197, %v441
        %v560 = vadd.f32 %v197, %v446
        %v561 = vadd.f32 %v197, %v449
        %v562 = vadd.f32 %v197, %v454
        %v563 = vadd.f32 %v197, %v457
        %v564 = vadd.f32 %v197, %v462
        %v565 = vadd.f32 %v197, %v465
        %v566 = vadd.f32 %v197, %v470
        %v567 = vadd.f32 %v197, %v473
        %v568 = vadd.f32 %v197, %v478
        %v569 = vadd.f32 %v197, %v481
        %v570 = vadd.f32 %v197, %v486
        %v571 = vadd.f32 %v197, %v489
        %v572 = vadd.f32 %v197, %v494
        %v573 = vadd.f32 %v197, %v497
        %v574 = vadd.f32 %v197, %v502
        %v575 = vadd.f32 %v197, %v505
        %v576 = vadd.f32 %v197, %v510
        %v577 = vadd.f32 %v197, %v513
        %v578 = vadd.f32 %v197, %v518
        %v579 = vadd.f32 %v197, %v521
        %v580 = vadd.f32 %v197, %v526
        %v581 = vadd.f32 %v197, %v529
        %v582 = vadd.f32 %v197, %v534
        %v583 = vadd.f32 %v197, %v537
        %v584 = vadd.f32 %v197, %v542
        %v585 = vadd.f32 %v197, %v545
        %v586 = vadd.f32 %v197, %v550
        %v587 = vadd.f32 %v197, %v553
        %s588 = scalar_lea.vmem %s1, 192
        %v589 = vld [vmem:[%s588] sm:$0xf]
        %v590 = vld [vmem:[%s588 + $0x4] sm:$0xf]
        %v591 = vld [vmem:[%s588 + $0x8] sm:$0xf]
        %v592 = vld [vmem:[%s588 + $0xc] sm:$0xf]
        %v593 = vld [vmem:[%s588 + $0x10] sm:$0xf]
        %v594 = vld [vmem:[%s588 + $0x14] sm:$0xf]
        %v595 = vld [vmem:[%s588 + $0x18] sm:$0xf]
        %v596 = vld [vmem:[%s588 + $0x1c] sm:$0xf]
        %v597 = vld [vmem:[%s588 + $0x20] sm:$0xf]
        %v598 = vld [vmem:[%s588 + $0x24] sm:$0xf]
        %v599 = vld [vmem:[%s588 + $0x28] sm:$0xf]
        %v600 = vld [vmem:[%s588 + $0x2c] sm:$0xf]
        %v601 = vld [vmem:[%s588 + $0x30] sm:$0xf]
        %v602 = vld [vmem:[%s588 + $0x34] sm:$0xf]
        %v603 = vld [vmem:[%s588 + $0x38] sm:$0xf]
        %v604 = vld [vmem:[%s588 + $0x3c] sm:$0xf]
        %v607 = vunpack.c.l.b16 %v231
        %v608 = vunpack.c.l.b16 %v232
        %v609 = vpack.c.b16 %v608, %v607
        %v627 = vunpack.c.l.b16 %v589
        %v628 = vunpack.c.l.b16 %v590
        %v629 = vunpack.c.l.b16 %v591
        %v630 = vunpack.c.l.b16 %v592
        %v631 = vunpack.c.l.b16 %v593
        %v632 = vunpack.c.l.b16 %v594
        %v633 = vunpack.c.l.b16 %v595
        %v634 = vunpack.c.l.b16 %v596
        %v635 = vunpack.c.l.b16 %v597
        %v636 = vunpack.c.l.b16 %v598
        %v637 = vunpack.c.l.b16 %v599
        %v638 = vunpack.c.l.b16 %v600
        %v639 = vunpack.c.l.b16 %v601
        %v640 = vunpack.c.l.b16 %v602
        %v641 = vunpack.c.l.b16 %v603
        %v642 = vunpack.c.l.b16 %v604
        %v643 = vpack.c.b16 %v628, %v627
        %v644 = vpack.c.b16 %v630, %v629
        %v645 = vpack.c.b16 %v632, %v631
        %v646 = vpack.c.b16 %v634, %v633
        %v647 = vpack.c.b16 %v636, %v635
        %v648 = vpack.c.b16 %v638, %v637
        %v649 = vpack.c.b16 %v640, %v639
        %v650 = vpack.c.b16 %v642, %v641
        %659 = vmatprep.subr.bf16.mxu0 0
        %660 = vmatpush1.bf16.msra.mxu0 %v650
        %661 = vmatprep.subr.bf16.mxu0 0
        %662 = vmatpush1.bf16.msra.mxu0 %v649
        %663 = vmatprep.subr.bf16.mxu0 0
        %664 = vmatpush1.bf16.msra.mxu0 %v648
        %665 = vmatprep.subr.bf16.mxu0 0
        %666 = vmatpush1.bf16.msra.mxu0 %v647
        %667 = vmatprep.subr.bf16.mxu0 0
        %668 = vmatpush1.bf16.msra.mxu0 %v646
        %669 = vmatprep.subr.bf16.mxu0 0
        %670 = vmatpush1.bf16.msra.mxu0 %v645
        %671 = vmatprep.subr.bf16.mxu0 0
        %672 = vmatpush1.bf16.msra.mxu0 %v644
        %673 = vmatprep.subr.bf16.mxu0 0
        %674 = vmatpush1.bf16.msra.mxu0 %v643
        %675 = vmatprep.subr.bf16.mxu0 0
        %676 = vmatpush2.bf16.msra.mxu0 0
        %677 = vmatprep.subr.bf16.mxu0 0
        %678 = vmatpush2.bf16.msra.mxu0 0
        %679 = vmatprep.subr.bf16.mxu0 0
        %680 = vmatpush2.bf16.msra.mxu0 0
        %681 = vmatprep.subr.bf16.mxu0 0
        %682 = vmatpush2.bf16.msra.mxu0 0
        %683 = vmatprep.subr.bf16.mxu0 0
        %684 = vmatpush2.bf16.msra.mxu0 0
        %685 = vmatprep.subr.bf16.mxu0 0
        %686 = vmatpush2.bf16.msra.mxu0 0
        %687 = vmatprep.subr.bf16.mxu0 0
        %688 = vmatpush2.bf16.msra.mxu0 0
        %689 = vmatprep.subr.bf16.mxu0 0
        %690 = vmatpush2.bf16.msra.mxu0 0
        %691 = vmatprep.mubr.bf16.mxu0 0
        %692 = vmatmul.mubr.bf16.gmra.mxu0 %v316
        %v693 = vpop.f32.mrf.mxu0
        %v694 = vadd.f32 0.0, %v693
        %v695 = vpop.f32.mrf.mxu0
        %v696 = vpop.f32.mrf.mxu0
        %v697 = vadd.f32 0.0, %v696
        %v698 = vpop.f32.mrf.mxu0
        %699 = vmatprep.mubr.bf16.mxu0 0
        %700 = vmatmul.mubr.bf16.gmra.mxu0 %v317
        %v701 = vpop.f32.mrf.mxu0
        %v702 = vadd.f32 0.0, %v701
        %v703 = vpop.f32.mrf.mxu0
        %v704 = vpop.f32.mrf.mxu0
        %v705 = vadd.f32 0.0, %v704
        %v706 = vpop.f32.mrf.mxu0
        %707 = vmatprep.mubr.bf16.mxu0 0
        %708 = vmatmul.mubr.bf16.gmra.mxu0 %v318
        %v709 = vpop.f32.mrf.mxu0
        %v710 = vadd.f32 0.0, %v709
        %v711 = vpop.f32.mrf.mxu0
        %v712 = vpop.f32.mrf.mxu0
        %v713 = vadd.f32 0.0, %v712
        %v714 = vpop.f32.mrf.mxu0
        %715 = vmatprep.mubr.bf16.mxu0 0
        %716 = vmatmul.mubr.bf16.gmra.mxu0 %v319
        %v717 = vpop.f32.mrf.mxu0
        %v718 = vadd.f32 0.0, %v717
        %v719 = vpop.f32.mrf.mxu0
        %v720 = vpop.f32.mrf.mxu0
        %v721 = vadd.f32 0.0, %v720
        %v722 = vpop.f32.mrf.mxu0
        %723 = vmatprep.mubr.bf16.mxu0 0
        %724 = vmatmul.mubr.bf16.gmra.mxu0 %v320
        %v725 = vpop.f32.mrf.mxu0
        %v726 = vadd.f32 0.0, %v725
        %v727 = vpop.f32.mrf.mxu0
        %v728 = vpop.f32.mrf.mxu0
        %v729 = vadd.f32 0.0, %v728
        %v730 = vpop.f32.mrf.mxu0
        %731 = vmatprep.mubr.bf16.mxu0 0
        %732 = vmatmul.mubr.bf16.gmra.mxu0 %v321
        %v733 = vpop.f32.mrf.mxu0
        %v734 = vadd.f32 0.0, %v733
        %v735 = vpop.f32.mrf.mxu0
        %v736 = vpop.f32.mrf.mxu0
        %v737 = vadd.f32 0.0, %v736
        %v738 = vpop.f32.mrf.mxu0
        %739 = vmatprep.mubr.bf16.mxu0 0
        %740 = vmatmul.mubr.bf16.gmra.mxu0 %v322
        %v741 = vpop.f32.mrf.mxu0
        %v742 = vadd.f32 0.0, %v741
        %v743 = vpop.f32.mrf.mxu0
        %v744 = vpop.f32.mrf.mxu0
        %v745 = vadd.f32 0.0, %v744
        %v746 = vpop.f32.mrf.mxu0
        %747 = vmatprep.mubr.bf16.mxu0 0
        %748 = vmatmul.mubr.bf16.gmra.mxu0 %v323
        %v749 = vpop.f32.mrf.mxu0
        %v750 = vadd.f32 0.0, %v749
        %v751 = vpop.f32.mrf.mxu0
        %v752 = vpop.f32.mrf.mxu0
        %v753 = vadd.f32 0.0, %v752
        %v754 = vpop.f32.mrf.mxu0
        %755 = vmatprep.mubr.bf16.mxu0 0
        %756 = vmatmul.mubr.bf16.gmra.mxu0 %v324
        %v757 = vpop.f32.mrf.mxu0
        %v758 = vadd.f32 0.0, %v757
        %v759 = vpop.f32.mrf.mxu0
        %v760 = vpop.f32.mrf.mxu0
        %v761 = vadd.f32 0.0, %v760
        %v762 = vpop.f32.mrf.mxu0
        %763 = vmatprep.mubr.bf16.mxu0 0
        %764 = vmatmul.mubr.bf16.gmra.mxu0 %v325
        %v765 = vpop.f32.mrf.mxu0
        %v766 = vadd.f32 0.0, %v765
        %v767 = vpop.f32.mrf.mxu0
        %v768 = vpop.f32.mrf.mxu0
        %v769 = vadd.f32 0.0, %v768
        %v770 = vpop.f32.mrf.mxu0
        %771 = vmatprep.mubr.bf16.mxu0 0
        %772 = vmatmul.mubr.bf16.gmra.mxu0 %v326
        %v773 = vpop.f32.mrf.mxu0
        %v774 = vadd.f32 0.0, %v773
        %v775 = vpop.f32.mrf.mxu0
        %v776 = vpop.f32.mrf.mxu0
        %v777 = vadd.f32 0.0, %v776
        %v778 = vpop.f32.mrf.mxu0
        %779 = vmatprep.mubr.bf16.mxu0 0
        %780 = vmatmul.mubr.bf16.gmra.mxu0 %v327
        %v781 = vpop.f32.mrf.mxu0
        %v782 = vadd.f32 0.0, %v781
        %v783 = vpop.f32.mrf.mxu0
        %v784 = vpop.f32.mrf.mxu0
        %v785 = vadd.f32 0.0, %v784
        %v786 = vpop.f32.mrf.mxu0
        %787 = vmatprep.mubr.bf16.mxu0 0
        %788 = vmatmul.mubr.bf16.gmra.mxu0 %v328
        %v789 = vpop.f32.mrf.mxu0
        %v790 = vadd.f32 0.0, %v789
        %v791 = vpop.f32.mrf.mxu0
        %v792 = vpop.f32.mrf.mxu0
        %v793 = vadd.f32 0.0, %v792
        %v794 = vpop.f32.mrf.mxu0
        %795 = vmatprep.mubr.bf16.mxu0 0
        %796 = vmatmul.mubr.bf16.gmra.mxu0 %v329
        %v797 = vpop.f32.mrf.mxu0
        %v798 = vadd.f32 0.0, %v797
        %v799 = vpop.f32.mrf.mxu0
        %v800 = vpop.f32.mrf.mxu0
        %v801 = vadd.f32 0.0, %v800
        %v802 = vpop.f32.mrf.mxu0
        %803 = vmatprep.mubr.bf16.mxu0 0
        %804 = vmatmul.mubr.bf16.gmra.mxu0 %v330
        %v805 = vpop.f32.mrf.mxu0
        %v806 = vadd.f32 0.0, %v805
        %v807 = vpop.f32.mrf.mxu0
        %v808 = vpop.f32.mrf.mxu0
        %v809 = vadd.f32 0.0, %v808
        %v810 = vpop.f32.mrf.mxu0
        %811 = vmatprep.mubr.bf16.mxu0 0
        %812 = vmatmul.mubr.bf16.gmra.mxu0 %v609
        %v813 = vpop.f32.mrf.mxu0
        %v814 = vadd.f32 0.0, %v813
        %v815 = vpop.f32.mrf.mxu0
        %v816 = vpop.f32.mrf.mxu0
        %v817 = vadd.f32 0.0, %v816
        %v818 = vpop.f32.mrf.mxu0
        %819 = vdwg.mxu0
        %v820 = vadd.f32 %v556, %v694
        %v821 = vadd.f32 %v557, %v697
        %v822 = vadd.f32 %v558, %v702
        %v823 = vadd.f32 %v559, %v705
        %v824 = vadd.f32 %v560, %v710
        %v825 = vadd.f32 %v561, %v713
        %v826 = vadd.f32 %v562, %v718
        %v827 = vadd.f32 %v563, %v721
        %v828 = vadd.f32 %v564, %v726
        %v829 = vadd.f32 %v565, %v729
        %v830 = vadd.f32 %v566, %v734
        %v831 = vadd.f32 %v567, %v737
        %v832 = vadd.f32 %v568, %v742
        %v833 = vadd.f32 %v569, %v745
        %v834 = vadd.f32 %v570, %v750
        %v835 = vadd.f32 %v571, %v753
        %v836 = vadd.f32 %v572, %v758
        %v837 = vadd.f32 %v573, %v761
        %v838 = vadd.f32 %v574, %v766
        %v839 = vadd.f32 %v575, %v769
        %v840 = vadd.f32 %v576, %v774
        %v841 = vadd.f32 %v577, %v777
        %v842 = vadd.f32 %v578, %v782
        %v843 = vadd.f32 %v579, %v785
        %v844 = vadd.f32 %v580, %v790
        %v845 = vadd.f32 %v581, %v793
        %v846 = vadd.f32 %v582, %v798
        %v847 = vadd.f32 %v583, %v801
        %v848 = vadd.f32 %v584, %v806
        %v849 = vadd.f32 %v585, %v809
        %v850 = vadd.f32 %v586, %v814
        %v851 = vadd.f32 %v587, %v817
        %s852 = scalar_lea.vmem %s1, 384
        %v853 = vld [vmem:[%s852] sm:$0xf]
        %v854 = vld [vmem:[%s852 + $0x4] sm:$0xf]
        %v855 = vld [vmem:[%s852 + $0x8] sm:$0xf]
        %v856 = vld [vmem:[%s852 + $0xc] sm:$0xf]
        %v857 = vld [vmem:[%s852 + $0x10] sm:$0xf]
        %v858 = vld [vmem:[%s852 + $0x14] sm:$0xf]
        %v859 = vld [vmem:[%s852 + $0x18] sm:$0xf]
        %v860 = vld [vmem:[%s852 + $0x1c] sm:$0xf]
        %v861 = vld [vmem:[%s852 + $0x20] sm:$0xf]
        %v862 = vld [vmem:[%s852 + $0x24] sm:$0xf]
        %v863 = vld [vmem:[%s852 + $0x28] sm:$0xf]
        %v864 = vld [vmem:[%s852 + $0x2c] sm:$0xf]
        %v865 = vld [vmem:[%s852 + $0x30] sm:$0xf]
        %v866 = vld [vmem:[%s852 + $0x34] sm:$0xf]
        %v867 = vld [vmem:[%s852 + $0x38] sm:$0xf]
        %v868 = vld [vmem:[%s852 + $0x3c] sm:$0xf]
        %v871 = vunpack.c.l.b16 %v233
        %v872 = vunpack.c.l.b16 %v234
        %v873 = vpack.c.b16 %v872, %v871
        %v891 = vunpack.c.l.b16 %v853
        %v892 = vunpack.c.l.b16 %v854
        %v893 = vunpack.c.l.b16 %v855
        %v894 = vunpack.c.l.b16 %v856
        %v895 = vunpack.c.l.b16 %v857
        %v896 = vunpack.c.l.b16 %v858
        %v897 = vunpack.c.l.b16 %v859
        %v898 = vunpack.c.l.b16 %v860
        %v899 = vunpack.c.l.b16 %v861
        %v900 = vunpack.c.l.b16 %v862
        %v901 = vunpack.c.l.b16 %v863
        %v902 = vunpack.c.l.b16 %v864
        %v903 = vunpack.c.l.b16 %v865
        %v904 = vunpack.c.l.b16 %v866
        %v905 = vunpack.c.l.b16 %v867
        %v906 = vunpack.c.l.b16 %v868
        %v907 = vpack.c.b16 %v892, %v891
        %v908 = vpack.c.b16 %v894, %v893
        %v909 = vpack.c.b16 %v896, %v895
        %v910 = vpack.c.b16 %v898, %v897
        %v911 = vpack.c.b16 %v900, %v899
        %v912 = vpack.c.b16 %v902, %v901
        %v913 = vpack.c.b16 %v904, %v903
        %v914 = vpack.c.b16 %v906, %v905
        %923 = vmatprep.subr.bf16.mxu0 0
        %924 = vmatpush1.bf16.msra.mxu0 %v914
        %925 = vmatprep.subr.bf16.mxu0 0
        %926 = vmatpush1.bf16.msra.mxu0 %v913
        %927 = vmatprep.subr.bf16.mxu0 0
        %928 = vmatpush1.bf16.msra.mxu0 %v912
        %929 = vmatprep.subr.bf16.mxu0 0
        %930 = vmatpush1.bf16.msra.mxu0 %v911
        %931 = vmatprep.subr.bf16.mxu0 0
        %932 = vmatpush1.bf16.msra.mxu0 %v910
        %933 = vmatprep.subr.bf16.mxu0 0
        %934 = vmatpush1.bf16.msra.mxu0 %v909
        %935 = vmatprep.subr.bf16.mxu0 0
        %936 = vmatpush1.bf16.msra.mxu0 %v908
        %937 = vmatprep.subr.bf16.mxu0 0
        %938 = vmatpush1.bf16.msra.mxu0 %v907
        %939 = vmatprep.subr.bf16.mxu0 0
        %940 = vmatpush2.bf16.msra.mxu0 0
        %941 = vmatprep.subr.bf16.mxu0 0
        %942 = vmatpush2.bf16.msra.mxu0 0
        %943 = vmatprep.subr.bf16.mxu0 0
        %944 = vmatpush2.bf16.msra.mxu0 0
        %945 = vmatprep.subr.bf16.mxu0 0
        %946 = vmatpush2.bf16.msra.mxu0 0
        %947 = vmatprep.subr.bf16.mxu0 0
        %948 = vmatpush2.bf16.msra.mxu0 0
        %949 = vmatprep.subr.bf16.mxu0 0
        %950 = vmatpush2.bf16.msra.mxu0 0
        %951 = vmatprep.subr.bf16.mxu0 0
        %952 = vmatpush2.bf16.msra.mxu0 0
        %953 = vmatprep.subr.bf16.mxu0 0
        %954 = vmatpush2.bf16.msra.mxu0 0
        %955 = vmatprep.mubr.bf16.mxu0 0
        %956 = vmatmul.mubr.bf16.gmra.mxu0 %v317
        %v957 = vpop.f32.mrf.mxu0
        %v958 = vadd.f32 0.0, %v957
        %v959 = vpop.f32.mrf.mxu0
        %v960 = vpop.f32.mrf.mxu0
        %v961 = vadd.f32 0.0, %v960
        %v962 = vpop.f32.mrf.mxu0
        %963 = vmatprep.mubr.bf16.mxu0 0
        %964 = vmatmul.mubr.bf16.gmra.mxu0 %v318
        %v965 = vpop.f32.mrf.mxu0
        %v966 = vadd.f32 0.0, %v965
        %v967 = vpop.f32.mrf.mxu0
        %v968 = vpop.f32.mrf.mxu0
        %v969 = vadd.f32 0.0, %v968
        %v970 = vpop.f32.mrf.mxu0
        %971 = vmatprep.mubr.bf16.mxu0 0
        %972 = vmatmul.mubr.bf16.gmra.mxu0 %v319
        %v973 = vpop.f32.mrf.mxu0
        %v974 = vadd.f32 0.0, %v973
        %v975 = vpop.f32.mrf.mxu0
        %v976 = vpop.f32.mrf.mxu0
        %v977 = vadd.f32 0.0, %v976
        %v978 = vpop.f32.mrf.mxu0
        %979 = vmatprep.mubr.bf16.mxu0 0
        %980 = vmatmul.mubr.bf16.gmra.mxu0 %v320
        %v981 = vpop.f32.mrf.mxu0
        %v982 = vadd.f32 0.0, %v981
        %v983 = vpop.f32.mrf.mxu0
        %v984 = vpop.f32.mrf.mxu0
        %v985 = vadd.f32 0.0, %v984
        %v986 = vpop.f32.mrf.mxu0
        %987 = vmatprep.mubr.bf16.mxu0 0
        %988 = vmatmul.mubr.bf16.gmra.mxu0 %v321
        %v989 = vpop.f32.mrf.mxu0
        %v990 = vadd.f32 0.0, %v989
        %v991 = vpop.f32.mrf.mxu0
        %v992 = vpop.f32.mrf.mxu0
        %v993 = vadd.f32 0.0, %v992
        %v994 = vpop.f32.mrf.mxu0
        %995 = vmatprep.mubr.bf16.mxu0 0
        %996 = vmatmul.mubr.bf16.gmra.mxu0 %v322
        %v997 = vpop.f32.mrf.mxu0
        %v998 = vadd.f32 0.0, %v997
        %v999 = vpop.f32.mrf.mxu0
        %v1000 = vpop.f32.mrf.mxu0
        %v1001 = vadd.f32 0.0, %v1000
        %v1002 = vpop.f32.mrf.mxu0
        %1003 = vmatprep.mubr.bf16.mxu0 0
        %1004 = vmatmul.mubr.bf16.gmra.mxu0 %v323
        %v1005 = vpop.f32.mrf.mxu0
        %v1006 = vadd.f32 0.0, %v1005
        %v1007 = vpop.f32.mrf.mxu0
        %v1008 = vpop.f32.mrf.mxu0
        %v1009 = vadd.f32 0.0, %v1008
        %v1010 = vpop.f32.mrf.mxu0
        %1011 = vmatprep.mubr.bf16.mxu0 0
        %1012 = vmatmul.mubr.bf16.gmra.mxu0 %v324
        %v1013 = vpop.f32.mrf.mxu0
        %v1014 = vadd.f32 0.0, %v1013
        %v1015 = vpop.f32.mrf.mxu0
        %v1016 = vpop.f32.mrf.mxu0
        %v1017 = vadd.f32 0.0, %v1016
        %v1018 = vpop.f32.mrf.mxu0
        %1019 = vmatprep.mubr.bf16.mxu0 0
        %1020 = vmatmul.mubr.bf16.gmra.mxu0 %v325
        %v1021 = vpop.f32.mrf.mxu0
        %v1022 = vadd.f32 0.0, %v1021
        %v1023 = vpop.f32.mrf.mxu0
        %v1024 = vpop.f32.mrf.mxu0
        %v1025 = vadd.f32 0.0, %v1024
        %v1026 = vpop.f32.mrf.mxu0
        %1027 = vmatprep.mubr.bf16.mxu0 0
        %1028 = vmatmul.mubr.bf16.gmra.mxu0 %v326
        %v1029 = vpop.f32.mrf.mxu0
        %v1030 = vadd.f32 0.0, %v1029
        %v1031 = vpop.f32.mrf.mxu0
        %v1032 = vpop.f32.mrf.mxu0
        %v1033 = vadd.f32 0.0, %v1032
        %v1034 = vpop.f32.mrf.mxu0
        %1035 = vmatprep.mubr.bf16.mxu0 0
        %1036 = vmatmul.mubr.bf16.gmra.mxu0 %v327
        %v1037 = vpop.f32.mrf.mxu0
        %v1038 = vadd.f32 0.0, %v1037
        %v1039 = vpop.f32.mrf.mxu0
        %v1040 = vpop.f32.mrf.mxu0
        %v1041 = vadd.f32 0.0, %v1040
        %v1042 = vpop.f32.mrf.mxu0
        %1043 = vmatprep.mubr.bf16.mxu0 0
        %1044 = vmatmul.mubr.bf16.gmra.mxu0 %v328
        %v1045 = vpop.f32.mrf.mxu0
        %v1046 = vadd.f32 0.0, %v1045
        %v1047 = vpop.f32.mrf.mxu0
        %v1048 = vpop.f32.mrf.mxu0
        %v1049 = vadd.f32 0.0, %v1048
        %v1050 = vpop.f32.mrf.mxu0
        %1051 = vmatprep.mubr.bf16.mxu0 0
        %1052 = vmatmul.mubr.bf16.gmra.mxu0 %v329
        %v1053 = vpop.f32.mrf.mxu0
        %v1054 = vadd.f32 0.0, %v1053
        %v1055 = vpop.f32.mrf.mxu0
        %v1056 = vpop.f32.mrf.mxu0
        %v1057 = vadd.f32 0.0, %v1056
        %v1058 = vpop.f32.mrf.mxu0
        %1059 = vmatprep.mubr.bf16.mxu0 0
        %1060 = vmatmul.mubr.bf16.gmra.mxu0 %v330
        %v1061 = vpop.f32.mrf.mxu0
        %v1062 = vadd.f32 0.0, %v1061
        %v1063 = vpop.f32.mrf.mxu0
        %v1064 = vpop.f32.mrf.mxu0
        %v1065 = vadd.f32 0.0, %v1064
        %v1066 = vpop.f32.mrf.mxu0
        %1067 = vmatprep.mubr.bf16.mxu0 0
        %1068 = vmatmul.mubr.bf16.gmra.mxu0 %v609
        %v1069 = vpop.f32.mrf.mxu0
        %v1070 = vadd.f32 0.0, %v1069
        %v1071 = vpop.f32.mrf.mxu0
        %v1072 = vpop.f32.mrf.mxu0
        %v1073 = vadd.f32 0.0, %v1072
        %v1074 = vpop.f32.mrf.mxu0
        %1075 = vmatprep.mubr.bf16.mxu0 0
        %1076 = vmatmul.mubr.bf16.gmra.mxu0 %v873
        %v1077 = vpop.f32.mrf.mxu0
        %v1078 = vadd.f32 0.0, %v1077
        %v1079 = vpop.f32.mrf.mxu0
        %v1080 = vpop.f32.mrf.mxu0
        %v1081 = vadd.f32 0.0, %v1080
        %v1082 = vpop.f32.mrf.mxu0
        %1083 = vdwg.mxu0
        %v1084 = vadd.f32 %v820, %v958
        %v1085 = vadd.f32 %v821, %v961
        %v1086 = vadd.f32 %v822, %v966
        %v1087 = vadd.f32 %v823, %v969
        %v1088 = vadd.f32 %v824, %v974
        %v1089 = vadd.f32 %v825, %v977
        %v1090 = vadd.f32 %v826, %v982
        %v1091 = vadd.f32 %v827, %v985
        %v1092 = vadd.f32 %v828, %v990
        %v1093 = vadd.f32 %v829, %v993
        %v1094 = vadd.f32 %v830, %v998
        %v1095 = vadd.f32 %v831, %v1001
        %v1096 = vadd.f32 %v832, %v1006
        %v1097 = vadd.f32 %v833, %v1009
        %v1098 = vadd.f32 %v834, %v1014
        %v1099 = vadd.f32 %v835, %v1017
        %v1100 = vadd.f32 %v836, %v1022
        %v1101 = vadd.f32 %v837, %v1025
        %v1102 = vadd.f32 %v838, %v1030
        %v1103 = vadd.f32 %v839, %v1033
        %v1104 = vadd.f32 %v840, %v1038
        %v1105 = vadd.f32 %v841, %v1041
        %v1106 = vadd.f32 %v842, %v1046
        %v1107 = vadd.f32 %v843, %v1049
        %v1108 = vadd.f32 %v844, %v1054
        %v1109 = vadd.f32 %v845, %v1057
        %v1110 = vadd.f32 %v846, %v1062
        %v1111 = vadd.f32 %v847, %v1065
        %v1112 = vadd.f32 %v848, %v1070
        %v1113 = vadd.f32 %v849, %v1073
        %v1114 = vadd.f32 %v850, %v1078
        %v1115 = vadd.f32 %v851, %v1081
        %v1116 = vld [vmem:[%s188] sm:$0xf]
        %v1117 = vld [vmem:[%s188 + $0x4] sm:$0xf]
        %v1118 = vld [vmem:[%s188 + $0x8] sm:$0x1]
        %v1119 = vld [vmem:[%s188 + $0xc] sm:$0xf]
        %v1120 = vld [vmem:[%s188 + $0x10] sm:$0xf]
        %v1121 = vld [vmem:[%s188 + $0x14] sm:$0x1]
        %v1122 = vld [vmem:[%s188 + $0x18] sm:$0xf]
        %v1123 = vld [vmem:[%s188 + $0x1c] sm:$0xf]
        %v1124 = vld [vmem:[%s188 + $0x20] sm:$0x1]
        %v1125 = vld [vmem:[%s188 + $0x24] sm:$0xf]
        %v1126 = vld [vmem:[%s188 + $0x28] sm:$0xf]
        %v1127 = vld [vmem:[%s188 + $0x2c] sm:$0x1]
        %v1128 = vld [vmem:[%s188 + $0x30] sm:$0xf]
        %v1129 = vld [vmem:[%s188 + $0x34] sm:$0xf]
        %v1130 = vld [vmem:[%s188 + $0x38] sm:$0x1]
        %v1131 = vld [vmem:[%s188 + $0x3c] sm:$0xf]
        %v1132 = vld [vmem:[%s188 + $0x40] sm:$0xf]
        %v1133 = vld [vmem:[%s188 + $0x44] sm:$0x1]
        %v1134 = vld [vmem:[%s188 + $0x48] sm:$0xf]
        %v1135 = vld [vmem:[%s188 + $0x4c] sm:$0xf]
        %v1136 = vld [vmem:[%s188 + $0x50] sm:$0x1]
        %v1137 = vld [vmem:[%s188 + $0x54] sm:$0xf]
        %v1138 = vld [vmem:[%s188 + $0x58] sm:$0xf]
        %v1139 = vld [vmem:[%s188 + $0x5c] sm:$0x1]
        %v1140 = vld [vmem:[%s188 + $0x60] sm:$0xf]
        %v1141 = vld [vmem:[%s188 + $0x64] sm:$0xf]
        %v1142 = vld [vmem:[%s188 + $0x68] sm:$0x1]
        %v1143 = vld [vmem:[%s188 + $0x6c] sm:$0xf]
        %v1144 = vld [vmem:[%s188 + $0x70] sm:$0xf]
        %v1145 = vld [vmem:[%s188 + $0x74] sm:$0x1]
        %v1146 = vld [vmem:[%s188 + $0x78] sm:$0xf]
        %v1147 = vld [vmem:[%s188 + $0x7c] sm:$0xf]
        %v1148 = vld [vmem:[%s188 + $0x80] sm:$0x1]
        %v1149 = vld [vmem:[%s188 + $0x84] sm:$0xf]
        %v1150 = vld [vmem:[%s188 + $0x88] sm:$0xf]
        %v1151 = vld [vmem:[%s188 + $0x8c] sm:$0x1]
        %v1152 = vld [vmem:[%s188 + $0x90] sm:$0xf]
        %v1153 = vld [vmem:[%s188 + $0x94] sm:$0xf]
        %v1154 = vld [vmem:[%s188 + $0x98] sm:$0x1]
        %v1155 = vld [vmem:[%s188 + $0x9c] sm:$0xf]
        %v1156 = vld [vmem:[%s188 + $0xa0] sm:$0xf]
        %v1157 = vld [vmem:[%s188 + $0xa4] sm:$0x1]
        %v1158 = vld [vmem:[%s188 + $0xa8] sm:$0xf]
        %v1159 = vld [vmem:[%s188 + $0xac] sm:$0xf]
        %v1160 = vld [vmem:[%s188 + $0xb0] sm:$0x1]
        %v1161 = vld [vmem:[%s188 + $0xb4] sm:$0xf]
        %v1162 = vld [vmem:[%s188 + $0xb8] sm:$0xf]
        %v1163 = vld [vmem:[%s188 + $0xbc] sm:$0x1]
        %v1164 = vld [vmem:[%s188 + $0xc0] sm:$0xf]
        %v1165 = vld [vmem:[%s188 + $0xc4] sm:$0xf]
        %v1166 = vld [vmem:[%s188 + $0xc8] sm:$0x1]
        %v1167 = vld [vmem:[%s188 + $0xcc] sm:$0xf]
        %v1168 = vld [vmem:[%s188 + $0xd0] sm:$0xf]
        %v1169 = vld [vmem:[%s188 + $0xd4] sm:$0x1]
        %vm1170 = vsmask.f32 3328
        %vm1171 = vsmask.f32 7440
        %vm1172 = vmor %vm1170, %vm1171
        %v1174 = vshrl.u32 %v1116, 16
        %v1176 = vrot.slane %v1174, 4
        %v1177 = vshll.u32 %v1116, 16
        %v1179 = vrot.slane %v1177, 5
        %v1180 = vor.u32 %v1176, %v1179
        %v1181 = vrot.slane %v1180, 4
        %v1183 = vshll.u32 %v1117, 16
        %v1185 = vrot.slane %v1183, 5
        %v1186 = vsel %vm1172, %v1181, %v1185
        %v1187 = vshrl.u32 %v1117, 16
        %v1189 = vrot.slane %v1187, 4
        %v1190 = vor.u32 %v1189, %v1185
        %v1191 = vrot.slane %v1190, 4
        %v1193 = vshll.u32 %v1118, 16
        %v1195 = vrot.slane %v1193, 5
        %v1196 = vsel %vm1172, %v1191, %v1195
        %v1198 = vshrl.u32 %v1119, 16
        %v1200 = vrot.slane %v1198, 4
        %v1201 = vshll.u32 %v1119, 16
        %v1203 = vrot.slane %v1201, 5
        %v1204 = vor.u32 %v1200, %v1203
        %v1205 = vrot.slane %v1204, 4
        %v1207 = vshll.u32 %v1120, 16
        %v1209 = vrot.slane %v1207, 5
        %v1210 = vsel %vm1172, %v1205, %v1209
        %v1211 = vshrl.u32 %v1120, 16
        %v1213 = vrot.slane %v1211, 4
        %v1214 = vor.u32 %v1213, %v1209
        %v1215 = vrot.slane %v1214, 4
        %v1217 = vshll.u32 %v1121, 16
        %v1219 = vrot.slane %v1217, 5
        %v1220 = vsel %vm1172, %v1215, %v1219
        %v1222 = vshrl.u32 %v1122, 16
        %v1224 = vrot.slane %v1222, 4
        %v1225 = vshll.u32 %v1122, 16
        %v1227 = vrot.slane %v1225, 5
        %v1228 = vor.u32 %v1224, %v1227
        %v1229 = vrot.slane %v1228, 4
        %v1231 = vshll.u32 %v1123, 16
        %v1233 = vrot.slane %v1231, 5
        %v1234 = vsel %vm1172, %v1229, %v1233
        %v1235 = vshrl.u32 %v1123, 16
        %v1237 = vrot.slane %v1235, 4
        %v1238 = vor.u32 %v1237, %v1233
        %v1239 = vrot.slane %v1238, 4
        %v1241 = vshll.u32 %v1124, 16
        %v1243 = vrot.slane %v1241, 5
        %v1244 = vsel %vm1172, %v1239, %v1243
        %v1246 = vshrl.u32 %v1125, 16
        %v1248 = vrot.slane %v1246, 4
        %v1249 = vshll.u32 %v1125, 16
        %v1251 = vrot.slane %v1249, 5
        %v1252 = vor.u32 %v1248, %v1251
        %v1253 = vrot.slane %v1252, 4
        %v1255 = vshll.u32 %v1126, 16
        %v1257 = vrot.slane %v1255, 5
        %v1258 = vsel %vm1172, %v1253, %v1257
        %v1259 = vshrl.u32 %v1126, 16
        %v1261 = vrot.slane %v1259, 4
        %v1262 = vor.u32 %v1261, %v1257
        %v1263 = vrot.slane %v1262, 4
        %v1265 = vshll.u32 %v1127, 16
        %v1267 = vrot.slane %v1265, 5
        %v1268 = vsel %vm1172, %v1263, %v1267
        %v1270 = vshrl.u32 %v1128, 16
        %v1272 = vrot.slane %v1270, 4
        %v1273 = vshll.u32 %v1128, 16
        %v1275 = vrot.slane %v1273, 5
        %v1276 = vor.u32 %v1272, %v1275
        %v1277 = vrot.slane %v1276, 4
        %v1279 = vshll.u32 %v1129, 16
        %v1281 = vrot.slane %v1279, 5
        %v1282 = vsel %vm1172, %v1277, %v1281
        %v1283 = vshrl.u32 %v1129, 16
        %v1285 = vrot.slane %v1283, 4
        %v1286 = vor.u32 %v1285, %v1281
        %v1287 = vrot.slane %v1286, 4
        %v1289 = vshll.u32 %v1130, 16
        %v1291 = vrot.slane %v1289, 5
        %v1292 = vsel %vm1172, %v1287, %v1291
        %v1294 = vshrl.u32 %v1131, 16
        %v1296 = vrot.slane %v1294, 4
        %v1297 = vshll.u32 %v1131, 16
        %v1299 = vrot.slane %v1297, 5
        %v1300 = vor.u32 %v1296, %v1299
        %v1301 = vrot.slane %v1300, 4
        %v1303 = vshll.u32 %v1132, 16
        %v1305 = vrot.slane %v1303, 5
        %v1306 = vsel %vm1172, %v1301, %v1305
        %v1307 = vshrl.u32 %v1132, 16
        %v1309 = vrot.slane %v1307, 4
        %v1310 = vor.u32 %v1309, %v1305
        %v1311 = vrot.slane %v1310, 4
        %v1313 = vshll.u32 %v1133, 16
        %v1315 = vrot.slane %v1313, 5
        %v1316 = vsel %vm1172, %v1311, %v1315
        %v1318 = vshrl.u32 %v1134, 16
        %v1320 = vrot.slane %v1318, 4
        %v1321 = vshll.u32 %v1134, 16
        %v1323 = vrot.slane %v1321, 5
        %v1324 = vor.u32 %v1320, %v1323
        %v1325 = vrot.slane %v1324, 4
        %v1327 = vshll.u32 %v1135, 16
        %v1329 = vrot.slane %v1327, 5
        %v1330 = vsel %vm1172, %v1325, %v1329
        %v1331 = vshrl.u32 %v1135, 16
        %v1333 = vrot.slane %v1331, 4
        %v1334 = vor.u32 %v1333, %v1329
        %v1335 = vrot.slane %v1334, 4
        %v1337 = vshll.u32 %v1136, 16
        %v1339 = vrot.slane %v1337, 5
        %v1340 = vsel %vm1172, %v1335, %v1339
        %v1342 = vshrl.u32 %v1137, 16
        %v1344 = vrot.slane %v1342, 4
        %v1345 = vshll.u32 %v1137, 16
        %v1347 = vrot.slane %v1345, 5
        %v1348 = vor.u32 %v1344, %v1347
        %v1349 = vrot.slane %v1348, 4
        %v1351 = vshll.u32 %v1138, 16
        %v1353 = vrot.slane %v1351, 5
        %v1354 = vsel %vm1172, %v1349, %v1353
        %v1355 = vshrl.u32 %v1138, 16
        %v1357 = vrot.slane %v1355, 4
        %v1358 = vor.u32 %v1357, %v1353
        %v1359 = vrot.slane %v1358, 4
        %v1361 = vshll.u32 %v1139, 16
        %v1363 = vrot.slane %v1361, 5
        %v1364 = vsel %vm1172, %v1359, %v1363
        %v1366 = vshrl.u32 %v1140, 16
        %v1368 = vrot.slane %v1366, 4
        %v1369 = vshll.u32 %v1140, 16
        %v1371 = vrot.slane %v1369, 5
        %v1372 = vor.u32 %v1368, %v1371
        %v1373 = vrot.slane %v1372, 4
        %v1375 = vshll.u32 %v1141, 16
        %v1377 = vrot.slane %v1375, 5
        %v1378 = vsel %vm1172, %v1373, %v1377
        %v1379 = vshrl.u32 %v1141, 16
        %v1381 = vrot.slane %v1379, 4
        %v1382 = vor.u32 %v1381, %v1377
        %v1383 = vrot.slane %v1382, 4
        %v1385 = vshll.u32 %v1142, 16
        %v1387 = vrot.slane %v1385, 5
        %v1388 = vsel %vm1172, %v1383, %v1387
        %v1390 = vshrl.u32 %v1143, 16
        %v1392 = vrot.slane %v1390, 4
        %v1393 = vshll.u32 %v1143, 16
        %v1395 = vrot.slane %v1393, 5
        %v1396 = vor.u32 %v1392, %v1395
        %v1397 = vrot.slane %v1396, 4
        %v1399 = vshll.u32 %v1144, 16
        %v1401 = vrot.slane %v1399, 5
        %v1402 = vsel %vm1172, %v1397, %v1401
        %v1403 = vshrl.u32 %v1144, 16
        %v1405 = vrot.slane %v1403, 4
        %v1406 = vor.u32 %v1405, %v1401
        %v1407 = vrot.slane %v1406, 4
        %v1409 = vshll.u32 %v1145, 16
        %v1411 = vrot.slane %v1409, 5
        %v1412 = vsel %vm1172, %v1407, %v1411
        %v1414 = vshrl.u32 %v1146, 16
        %v1416 = vrot.slane %v1414, 4
        %v1417 = vshll.u32 %v1146, 16
        %v1419 = vrot.slane %v1417, 5
        %v1420 = vor.u32 %v1416, %v1419
        %v1421 = vrot.slane %v1420, 4
        %v1423 = vshll.u32 %v1147, 16
        %v1425 = vrot.slane %v1423, 5
        %v1426 = vsel %vm1172, %v1421, %v1425
        %v1427 = vshrl.u32 %v1147, 16
        %v1429 = vrot.slane %v1427, 4
        %v1430 = vor.u32 %v1429, %v1425
        %v1431 = vrot.slane %v1430, 4
        %v1433 = vshll.u32 %v1148, 16
        %v1435 = vrot.slane %v1433, 5
        %v1436 = vsel %vm1172, %v1431, %v1435
        %v1438 = vshrl.u32 %v1149, 16
        %v1440 = vrot.slane %v1438, 4
        %v1441 = vshll.u32 %v1149, 16
        %v1443 = vrot.slane %v1441, 5
        %v1444 = vor.u32 %v1440, %v1443
        %v1445 = vrot.slane %v1444, 4
        %v1447 = vshll.u32 %v1150, 16
        %v1449 = vrot.slane %v1447, 5
        %v1450 = vsel %vm1172, %v1445, %v1449
        %v1451 = vshrl.u32 %v1150, 16
        %v1453 = vrot.slane %v1451, 4
        %v1454 = vor.u32 %v1453, %v1449
        %v1455 = vrot.slane %v1454, 4
        %v1457 = vshll.u32 %v1151, 16
        %v1459 = vrot.slane %v1457, 5
        %v1460 = vsel %vm1172, %v1455, %v1459
        %v1462 = vshrl.u32 %v1152, 16
        %v1464 = vrot.slane %v1462, 4
        %v1465 = vshll.u32 %v1152, 16
        %v1467 = vrot.slane %v1465, 5
        %v1468 = vor.u32 %v1464, %v1467
        %v1469 = vrot.slane %v1468, 4
        %v1471 = vshll.u32 %v1153, 16
        %v1473 = vrot.slane %v1471, 5
        %v1474 = vsel %vm1172, %v1469, %v1473
        %v1475 = vshrl.u32 %v1153, 16
        %v1477 = vrot.slane %v1475, 4
        %v1478 = vor.u32 %v1477, %v1473
        %v1479 = vrot.slane %v1478, 4
        %v1481 = vshll.u32 %v1154, 16
        %v1483 = vrot.slane %v1481, 5
        %v1484 = vsel %vm1172, %v1479, %v1483
        %v1486 = vshrl.u32 %v1155, 16
        %v1488 = vrot.slane %v1486, 4
        %v1489 = vshll.u32 %v1155, 16
        %v1491 = vrot.slane %v1489, 5
        %v1492 = vor.u32 %v1488, %v1491
        %v1493 = vrot.slane %v1492, 4
        %v1495 = vshll.u32 %v1156, 16
        %v1497 = vrot.slane %v1495, 5
        %v1498 = vsel %vm1172, %v1493, %v1497
        %v1499 = vshrl.u32 %v1156, 16
        %v1501 = vrot.slane %v1499, 4
        %v1502 = vor.u32 %v1501, %v1497
        %v1503 = vrot.slane %v1502, 4
        %v1505 = vshll.u32 %v1157, 16
        %v1507 = vrot.slane %v1505, 5
        %v1508 = vsel %vm1172, %v1503, %v1507
        %v1510 = vshrl.u32 %v1158, 16
        %v1512 = vrot.slane %v1510, 4
        %v1513 = vshll.u32 %v1158, 16
        %v1515 = vrot.slane %v1513, 5
        %v1516 = vor.u32 %v1512, %v1515
        %v1517 = vrot.slane %v1516, 4
        %v1519 = vshll.u32 %v1159, 16
        %v1521 = vrot.slane %v1519, 5
        %v1522 = vsel %vm1172, %v1517, %v1521
        %v1523 = vshrl.u32 %v1159, 16
        %v1525 = vrot.slane %v1523, 4
        %v1526 = vor.u32 %v1525, %v1521
        %v1527 = vrot.slane %v1526, 4
        %v1529 = vshll.u32 %v1160, 16
        %v1531 = vrot.slane %v1529, 5
        %v1532 = vsel %vm1172, %v1527, %v1531
        %v1534 = vshrl.u32 %v1161, 16
        %v1536 = vrot.slane %v1534, 4
        %v1537 = vshll.u32 %v1161, 16
        %v1539 = vrot.slane %v1537, 5
        %v1540 = vor.u32 %v1536, %v1539
        %v1541 = vrot.slane %v1540, 4
        %v1543 = vshll.u32 %v1162, 16
        %v1545 = vrot.slane %v1543, 5
        %v1546 = vsel %vm1172, %v1541, %v1545
        %v1547 = vshrl.u32 %v1162, 16
        %v1549 = vrot.slane %v1547, 4
        %v1550 = vor.u32 %v1549, %v1545
        %v1551 = vrot.slane %v1550, 4
        %v1553 = vshll.u32 %v1163, 16
        %v1555 = vrot.slane %v1553, 5
        %v1556 = vsel %vm1172, %v1551, %v1555
        %v1558 = vshrl.u32 %v1164, 16
        %v1560 = vrot.slane %v1558, 4
        %v1561 = vshll.u32 %v1164, 16
        %v1563 = vrot.slane %v1561, 5
        %v1564 = vor.u32 %v1560, %v1563
        %v1565 = vrot.slane %v1564, 4
        %v1567 = vshll.u32 %v1165, 16
        %v1569 = vrot.slane %v1567, 5
        %v1570 = vsel %vm1172, %v1565, %v1569
        %v1571 = vshrl.u32 %v1165, 16
        %v1573 = vrot.slane %v1571, 4
        %v1574 = vor.u32 %v1573, %v1569
        %v1575 = vrot.slane %v1574, 4
        %v1577 = vshll.u32 %v1166, 16
        %v1579 = vrot.slane %v1577, 5
        %v1580 = vsel %vm1172, %v1575, %v1579
        %v1582 = vshrl.u32 %v1167, 16
        %v1584 = vrot.slane %v1582, 4
        %v1585 = vshll.u32 %v1167, 16
        %v1587 = vrot.slane %v1585, 5
        %v1588 = vor.u32 %v1584, %v1587
        %v1589 = vrot.slane %v1588, 4
        %v1591 = vshll.u32 %v1168, 16
        %v1593 = vrot.slane %v1591, 5
        %v1594 = vsel %vm1172, %v1589, %v1593
        %v1595 = vshrl.u32 %v1168, 16
        %v1597 = vrot.slane %v1595, 4
        %v1598 = vor.u32 %v1597, %v1593
        %v1599 = vrot.slane %v1598, 4
        %v1601 = vshll.u32 %v1169, 16
        %v1603 = vrot.slane %v1601, 5
        %v1604 = vsel %vm1172, %v1599, %v1603
        %s1605 = scalar_lea.vmem %s1, 64
        %v1606 = vld [vmem:[%s1605] sm:$0xf]
        %v1607 = vld [vmem:[%s1605 + $0x4] sm:$0xf]
        %v1608 = vld [vmem:[%s1605 + $0x8] sm:$0xf]
        %v1609 = vld [vmem:[%s1605 + $0xc] sm:$0xf]
        %v1610 = vld [vmem:[%s1605 + $0x10] sm:$0xf]
        %v1611 = vld [vmem:[%s1605 + $0x14] sm:$0xf]
        %v1612 = vld [vmem:[%s1605 + $0x18] sm:$0xf]
        %v1613 = vld [vmem:[%s1605 + $0x1c] sm:$0xf]
        %v1614 = vld [vmem:[%s1605 + $0x20] sm:$0xf]
        %v1615 = vld [vmem:[%s1605 + $0x24] sm:$0xf]
        %v1616 = vld [vmem:[%s1605 + $0x28] sm:$0xf]
        %v1617 = vld [vmem:[%s1605 + $0x2c] sm:$0xf]
        %v1618 = vld [vmem:[%s1605 + $0x30] sm:$0xf]
        %v1619 = vld [vmem:[%s1605 + $0x34] sm:$0xf]
        %v1620 = vld [vmem:[%s1605 + $0x38] sm:$0xf]
        %v1621 = vld [vmem:[%s1605 + $0x3c] sm:$0xf]
        %v1622 = vunpack.c.l.b16 %v1186
        %v1623 = vunpack.c.l.b16 %v1196
        %v1624 = vunpack.c.l.b16 %v1210
        %v1625 = vunpack.c.l.b16 %v1220
        %v1626 = vunpack.c.l.b16 %v1234
        %v1627 = vunpack.c.l.b16 %v1244
        %v1628 = vunpack.c.l.b16 %v1258
        %v1629 = vunpack.c.l.b16 %v1268
        %v1630 = vunpack.c.l.b16 %v1282
        %v1631 = vunpack.c.l.b16 %v1292
        %v1632 = vunpack.c.l.b16 %v1306
        %v1633 = vunpack.c.l.b16 %v1316
        %v1634 = vunpack.c.l.b16 %v1330
        %v1635 = vunpack.c.l.b16 %v1340
        %v1636 = vunpack.c.l.b16 %v1354
        %v1637 = vunpack.c.l.b16 %v1364
        %v1638 = vunpack.c.l.b16 %v1378
        %v1639 = vunpack.c.l.b16 %v1388
        %v1640 = vunpack.c.l.b16 %v1402
        %v1641 = vunpack.c.l.b16 %v1412
        %v1642 = vunpack.c.l.b16 %v1426
        %v1643 = vunpack.c.l.b16 %v1436
        %v1644 = vunpack.c.l.b16 %v1450
        %v1645 = vunpack.c.l.b16 %v1460
        %v1646 = vunpack.c.l.b16 %v1474
        %v1647 = vunpack.c.l.b16 %v1484
        %v1648 = vunpack.c.l.b16 %v1498
        %v1649 = vunpack.c.l.b16 %v1508
        %v1650 = vunpack.c.l.b16 %v1522
        %v1651 = vunpack.c.l.b16 %v1532
        %v1652 = vunpack.c.l.b16 %v1546
        %v1653 = vunpack.c.l.b16 %v1556
        %v1654 = vpack.c.b16 %v1623, %v1622
        %v1655 = vpack.c.b16 %v1625, %v1624
        %v1656 = vpack.c.b16 %v1627, %v1626
        %v1657 = vpack.c.b16 %v1629, %v1628
        %v1658 = vpack.c.b16 %v1631, %v1630
        %v1659 = vpack.c.b16 %v1633, %v1632
        %v1660 = vpack.c.b16 %v1635, %v1634
        %v1661 = vpack.c.b16 %v1637, %v1636
        %v1662 = vpack.c.b16 %v1639, %v1638
        %v1663 = vpack.c.b16 %v1641, %v1640
        %v1664 = vpack.c.b16 %v1643, %v1642
        %v1665 = vpack.c.b16 %v1645, %v1644
        %v1666 = vpack.c.b16 %v1647, %v1646
        %v1667 = vpack.c.b16 %v1649, %v1648
        %v1668 = vpack.c.b16 %v1651, %v1650
        %v1669 = vpack.c.b16 %v1653, %v1652
        %v1702 = vunpack.c.l.b16 %v1606
        %v1703 = vunpack.c.l.b16 %v1607
        %v1704 = vunpack.c.l.b16 %v1608
        %v1705 = vunpack.c.l.b16 %v1609
        %v1706 = vunpack.c.l.b16 %v1610
        %v1707 = vunpack.c.l.b16 %v1611
        %v1708 = vunpack.c.l.b16 %v1612
        %v1709 = vunpack.c.l.b16 %v1613
        %v1710 = vunpack.c.l.b16 %v1614
        %v1711 = vunpack.c.l.b16 %v1615
        %v1712 = vunpack.c.l.b16 %v1616
        %v1713 = vunpack.c.l.b16 %v1617
        %v1714 = vunpack.c.l.b16 %v1618
        %v1715 = vunpack.c.l.b16 %v1619
        %v1716 = vunpack.c.l.b16 %v1620
        %v1717 = vunpack.c.l.b16 %v1621
        %v1718 = vpack.c.b16 %v1703, %v1702
        %v1719 = vpack.c.b16 %v1705, %v1704
        %v1720 = vpack.c.b16 %v1707, %v1706
        %v1721 = vpack.c.b16 %v1709, %v1708
        %v1722 = vpack.c.b16 %v1711, %v1710
        %v1723 = vpack.c.b16 %v1713, %v1712
        %v1724 = vpack.c.b16 %v1715, %v1714
        %v1725 = vpack.c.b16 %v1717, %v1716
        %1734 = vmatprep.subr.bf16.mxu0 0
        %1735 = vmatpush1.bf16.msra.mxu0 %v1725
        %1736 = vmatprep.subr.bf16.mxu0 0
        %1737 = vmatpush1.bf16.msra.mxu0 %v1724
        %1738 = vmatprep.subr.bf16.mxu0 0
        %1739 = vmatpush1.bf16.msra.mxu0 %v1723
        %1740 = vmatprep.subr.bf16.mxu0 0
        %1741 = vmatpush1.bf16.msra.mxu0 %v1722
        %1742 = vmatprep.subr.bf16.mxu0 0
        %1743 = vmatpush1.bf16.msra.mxu0 %v1721
        %1744 = vmatprep.subr.bf16.mxu0 0
        %1745 = vmatpush1.bf16.msra.mxu0 %v1720
        %1746 = vmatprep.subr.bf16.mxu0 0
        %1747 = vmatpush1.bf16.msra.mxu0 %v1719
        %1748 = vmatprep.subr.bf16.mxu0 0
        %1749 = vmatpush1.bf16.msra.mxu0 %v1718
        %1750 = vmatprep.subr.bf16.mxu0 0
        %1751 = vmatpush2.bf16.msra.mxu0 0
        %1752 = vmatprep.subr.bf16.mxu0 0
        %1753 = vmatpush2.bf16.msra.mxu0 0
        %1754 = vmatprep.subr.bf16.mxu0 0
        %1755 = vmatpush2.bf16.msra.mxu0 0
        %1756 = vmatprep.subr.bf16.mxu0 0
        %1757 = vmatpush2.bf16.msra.mxu0 0
        %1758 = vmatprep.subr.bf16.mxu0 0
        %1759 = vmatpush2.bf16.msra.mxu0 0
        %1760 = vmatprep.subr.bf16.mxu0 0
        %1761 = vmatpush2.bf16.msra.mxu0 0
        %1762 = vmatprep.subr.bf16.mxu0 0
        %1763 = vmatpush2.bf16.msra.mxu0 0
        %1764 = vmatprep.subr.bf16.mxu0 0
        %1765 = vmatpush2.bf16.msra.mxu0 0
        %1766 = vmatprep.mubr.bf16.mxu0 0
        %1767 = vmatmul.mubr.bf16.gmra.mxu0 %v1654
        %v1768 = vpop.f32.mrf.mxu0
        %v1769 = vadd.f32 0.0, %v1768
        %v1770 = vpop.f32.mrf.mxu0
        %v1771 = vpop.f32.mrf.mxu0
        %v1772 = vadd.f32 0.0, %v1771
        %v1773 = vpop.f32.mrf.mxu0
        %1774 = vmatprep.mubr.bf16.mxu0 0
        %1775 = vmatmul.mubr.bf16.gmra.mxu0 %v1655
        %v1776 = vpop.f32.mrf.mxu0
        %v1777 = vadd.f32 0.0, %v1776
        %v1778 = vpop.f32.mrf.mxu0
        %v1779 = vpop.f32.mrf.mxu0
        %v1780 = vadd.f32 0.0, %v1779
        %v1781 = vpop.f32.mrf.mxu0
        %1782 = vmatprep.mubr.bf16.mxu0 0
        %1783 = vmatmul.mubr.bf16.gmra.mxu0 %v1656
        %v1784 = vpop.f32.mrf.mxu0
        %v1785 = vadd.f32 0.0, %v1784
        %v1786 = vpop.f32.mrf.mxu0
        %v1787 = vpop.f32.mrf.mxu0
        %v1788 = vadd.f32 0.0, %v1787
        %v1789 = vpop.f32.mrf.mxu0
        %1790 = vmatprep.mubr.bf16.mxu0 0
        %1791 = vmatmul.mubr.bf16.gmra.mxu0 %v1657
        %v1792 = vpop.f32.mrf.mxu0
        %v1793 = vadd.f32 0.0, %v1792
        %v1794 = vpop.f32.mrf.mxu0
        %v1795 = vpop.f32.mrf.mxu0
        %v1796 = vadd.f32 0.0, %v1795
        %v1797 = vpop.f32.mrf.mxu0
        %1798 = vmatprep.mubr.bf16.mxu0 0
        %1799 = vmatmul.mubr.bf16.gmra.mxu0 %v1658
        %v1800 = vpop.f32.mrf.mxu0
        %v1801 = vadd.f32 0.0, %v1800
        %v1802 = vpop.f32.mrf.mxu0
        %v1803 = vpop.f32.mrf.mxu0
        %v1804 = vadd.f32 0.0, %v1803
        %v1805 = vpop.f32.mrf.mxu0
        %1806 = vmatprep.mubr.bf16.mxu0 0
        %1807 = vmatmul.mubr.bf16.gmra.mxu0 %v1659
        %v1808 = vpop.f32.mrf.mxu0
        %v1809 = vadd.f32 0.0, %v1808
        %v1810 = vpop.f32.mrf.mxu0
        %v1811 = vpop.f32.mrf.mxu0
        %v1812 = vadd.f32 0.0, %v1811
        %v1813 = vpop.f32.mrf.mxu0
        %1814 = vmatprep.mubr.bf16.mxu0 0
        %1815 = vmatmul.mubr.bf16.gmra.mxu0 %v1660
        %v1816 = vpop.f32.mrf.mxu0
        %v1817 = vadd.f32 0.0, %v1816
        %v1818 = vpop.f32.mrf.mxu0
        %v1819 = vpop.f32.mrf.mxu0
        %v1820 = vadd.f32 0.0, %v1819
        %v1821 = vpop.f32.mrf.mxu0
        %1822 = vmatprep.mubr.bf16.mxu0 0
        %1823 = vmatmul.mubr.bf16.gmra.mxu0 %v1661
        %v1824 = vpop.f32.mrf.mxu0
        %v1825 = vadd.f32 0.0, %v1824
        %v1826 = vpop.f32.mrf.mxu0
        %v1827 = vpop.f32.mrf.mxu0
        %v1828 = vadd.f32 0.0, %v1827
        %v1829 = vpop.f32.mrf.mxu0
        %1830 = vmatprep.mubr.bf16.mxu0 0
        %1831 = vmatmul.mubr.bf16.gmra.mxu0 %v1662
        %v1832 = vpop.f32.mrf.mxu0
        %v1833 = vadd.f32 0.0, %v1832
        %v1834 = vpop.f32.mrf.mxu0
        %v1835 = vpop.f32.mrf.mxu0
        %v1836 = vadd.f32 0.0, %v1835
        %v1837 = vpop.f32.mrf.mxu0
        %1838 = vmatprep.mubr.bf16.mxu0 0
        %1839 = vmatmul.mubr.bf16.gmra.mxu0 %v1663
        %v1840 = vpop.f32.mrf.mxu0
        %v1841 = vadd.f32 0.0, %v1840
        %v1842 = vpop.f32.mrf.mxu0
        %v1843 = vpop.f32.mrf.mxu0
        %v1844 = vadd.f32 0.0, %v1843
        %v1845 = vpop.f32.mrf.mxu0
        %1846 = vmatprep.mubr.bf16.mxu0 0
        %1847 = vmatmul.mubr.bf16.gmra.mxu0 %v1664
        %v1848 = vpop.f32.mrf.mxu0
        %v1849 = vadd.f32 0.0, %v1848
        %v1850 = vpop.f32.mrf.mxu0
        %v1851 = vpop.f32.mrf.mxu0
        %v1852 = vadd.f32 0.0, %v1851
        %v1853 = vpop.f32.mrf.mxu0
        %1854 = vmatprep.mubr.bf16.mxu0 0
        %1855 = vmatmul.mubr.bf16.gmra.mxu0 %v1665
        %v1856 = vpop.f32.mrf.mxu0
        %v1857 = vadd.f32 0.0, %v1856
        %v1858 = vpop.f32.mrf.mxu0
        %v1859 = vpop.f32.mrf.mxu0
        %v1860 = vadd.f32 0.0, %v1859
        %v1861 = vpop.f32.mrf.mxu0
        %1862 = vmatprep.mubr.bf16.mxu0 0
        %1863 = vmatmul.mubr.bf16.gmra.mxu0 %v1666
        %v1864 = vpop.f32.mrf.mxu0
        %v1865 = vadd.f32 0.0, %v1864
        %v1866 = vpop.f32.mrf.mxu0
        %v1867 = vpop.f32.mrf.mxu0
        %v1868 = vadd.f32 0.0, %v1867
        %v1869 = vpop.f32.mrf.mxu0
        %1870 = vmatprep.mubr.bf16.mxu0 0
        %1871 = vmatmul.mubr.bf16.gmra.mxu0 %v1667
        %v1872 = vpop.f32.mrf.mxu0
        %v1873 = vadd.f32 0.0, %v1872
        %v1874 = vpop.f32.mrf.mxu0
        %v1875 = vpop.f32.mrf.mxu0
        %v1876 = vadd.f32 0.0, %v1875
        %v1877 = vpop.f32.mrf.mxu0
        %1878 = vmatprep.mubr.bf16.mxu0 0
        %1879 = vmatmul.mubr.bf16.gmra.mxu0 %v1668
        %v1880 = vpop.f32.mrf.mxu0
        %v1881 = vadd.f32 0.0, %v1880
        %v1882 = vpop.f32.mrf.mxu0
        %v1883 = vpop.f32.mrf.mxu0
        %v1884 = vadd.f32 0.0, %v1883
        %v1885 = vpop.f32.mrf.mxu0
        %1886 = vmatprep.mubr.bf16.mxu0 0
        %1887 = vmatmul.mubr.bf16.gmra.mxu0 %v1669
        %v1888 = vpop.f32.mrf.mxu0
        %v1889 = vadd.f32 0.0, %v1888
        %v1890 = vpop.f32.mrf.mxu0
        %v1891 = vpop.f32.mrf.mxu0
        %v1892 = vadd.f32 0.0, %v1891
        %v1893 = vpop.f32.mrf.mxu0
        %1894 = vdwg.mxu0
        %v1895 = vadd.f32 %v1084, %v1769
        %v1896 = vadd.f32 %v1085, %v1772
        %v1897 = vadd.f32 %v1086, %v1777
        %v1898 = vadd.f32 %v1087, %v1780
        %v1899 = vadd.f32 %v1088, %v1785
        %v1900 = vadd.f32 %v1089, %v1788
        %v1901 = vadd.f32 %v1090, %v1793
        %v1902 = vadd.f32 %v1091, %v1796
        %v1903 = vadd.f32 %v1092, %v1801
        %v1904 = vadd.f32 %v1093, %v1804
        %v1905 = vadd.f32 %v1094, %v1809
        %v1906 = vadd.f32 %v1095, %v1812
        %v1907 = vadd.f32 %v1096, %v1817
        %v1908 = vadd.f32 %v1097, %v1820
        %v1909 = vadd.f32 %v1098, %v1825
        %v1910 = vadd.f32 %v1099, %v1828
        %v1911 = vadd.f32 %v1100, %v1833
        %v1912 = vadd.f32 %v1101, %v1836
        %v1913 = vadd.f32 %v1102, %v1841
        %v1914 = vadd.f32 %v1103, %v1844
        %v1915 = vadd.f32 %v1104, %v1849
        %v1916 = vadd.f32 %v1105, %v1852
        %v1917 = vadd.f32 %v1106, %v1857
        %v1918 = vadd.f32 %v1107, %v1860
        %v1919 = vadd.f32 %v1108, %v1865
        %v1920 = vadd.f32 %v1109, %v1868
        %v1921 = vadd.f32 %v1110, %v1873
        %v1922 = vadd.f32 %v1111, %v1876
        %v1923 = vadd.f32 %v1112, %v1881
        %v1924 = vadd.f32 %v1113, %v1884
        %v1925 = vadd.f32 %v1114, %v1889
        %v1926 = vadd.f32 %v1115, %v1892
        %s1927 = scalar_lea.vmem %s1, 256
        %v1928 = vld [vmem:[%s1927] sm:$0xf]
        %v1929 = vld [vmem:[%s1927 + $0x4] sm:$0xf]
        %v1930 = vld [vmem:[%s1927 + $0x8] sm:$0xf]
        %v1931 = vld [vmem:[%s1927 + $0xc] sm:$0xf]
        %v1932 = vld [vmem:[%s1927 + $0x10] sm:$0xf]
        %v1933 = vld [vmem:[%s1927 + $0x14] sm:$0xf]
        %v1934 = vld [vmem:[%s1927 + $0x18] sm:$0xf]
        %v1935 = vld [vmem:[%s1927 + $0x1c] sm:$0xf]
        %v1936 = vld [vmem:[%s1927 + $0x20] sm:$0xf]
        %v1937 = vld [vmem:[%s1927 + $0x24] sm:$0xf]
        %v1938 = vld [vmem:[%s1927 + $0x28] sm:$0xf]
        %v1939 = vld [vmem:[%s1927 + $0x2c] sm:$0xf]
        %v1940 = vld [vmem:[%s1927 + $0x30] sm:$0xf]
        %v1941 = vld [vmem:[%s1927 + $0x34] sm:$0xf]
        %v1942 = vld [vmem:[%s1927 + $0x38] sm:$0xf]
        %v1943 = vld [vmem:[%s1927 + $0x3c] sm:$0xf]
        %v1944 = vunpack.c.l.b16 %v1570
        %v1945 = vunpack.c.l.b16 %v1580
        %v1946 = vpack.c.b16 %v1945, %v1944
        %v1964 = vunpack.c.l.b16 %v1928
        %v1965 = vunpack.c.l.b16 %v1929
        %v1966 = vunpack.c.l.b16 %v1930
        %v1967 = vunpack.c.l.b16 %v1931
        %v1968 = vunpack.c.l.b16 %v1932
        %v1969 = vunpack.c.l.b16 %v1933
        %v1970 = vunpack.c.l.b16 %v1934
        %v1971 = vunpack.c.l.b16 %v1935
        %v1972 = vunpack.c.l.b16 %v1936
        %v1973 = vunpack.c.l.b16 %v1937
        %v1974 = vunpack.c.l.b16 %v1938
        %v1975 = vunpack.c.l.b16 %v1939
        %v1976 = vunpack.c.l.b16 %v1940
        %v1977 = vunpack.c.l.b16 %v1941
        %v1978 = vunpack.c.l.b16 %v1942
        %v1979 = vunpack.c.l.b16 %v1943
        %v1980 = vpack.c.b16 %v1965, %v1964
        %v1981 = vpack.c.b16 %v1967, %v1966
        %v1982 = vpack.c.b16 %v1969, %v1968
        %v1983 = vpack.c.b16 %v1971, %v1970
        %v1984 = vpack.c.b16 %v1973, %v1972
        %v1985 = vpack.c.b16 %v1975, %v1974
        %v1986 = vpack.c.b16 %v1977, %v1976
        %v1987 = vpack.c.b16 %v1979, %v1978
        %1996 = vmatprep.subr.bf16.mxu0 0
        %1997 = vmatpush1.bf16.msra.mxu0 %v1987
        %1998 = vmatprep.subr.bf16.mxu0 0
        %1999 = vmatpush1.bf16.msra.mxu0 %v1986
        %2000 = vmatprep.subr.bf16.mxu0 0
        %2001 = vmatpush1.bf16.msra.mxu0 %v1985
        %2002 = vmatprep.subr.bf16.mxu0 0
        %2003 = vmatpush1.bf16.msra.mxu0 %v1984
        %2004 = vmatprep.subr.bf16.mxu0 0
        %2005 = vmatpush1.bf16.msra.mxu0 %v1983
        %2006 = vmatprep.subr.bf16.mxu0 0
        %2007 = vmatpush1.bf16.msra.mxu0 %v1982
        %2008 = vmatprep.subr.bf16.mxu0 0
        %2009 = vmatpush1.bf16.msra.mxu0 %v1981
        %2010 = vmatprep.subr.bf16.mxu0 0
        %2011 = vmatpush1.bf16.msra.mxu0 %v1980
        %2012 = vmatprep.subr.bf16.mxu0 0
        %2013 = vmatpush2.bf16.msra.mxu0 0
        %2014 = vmatprep.subr.bf16.mxu0 0
        %2015 = vmatpush2.bf16.msra.mxu0 0
        %2016 = vmatprep.subr.bf16.mxu0 0
        %2017 = vmatpush2.bf16.msra.mxu0 0
        %2018 = vmatprep.subr.bf16.mxu0 0
        %2019 = vmatpush2.bf16.msra.mxu0 0
        %2020 = vmatprep.subr.bf16.mxu0 0
        %2021 = vmatpush2.bf16.msra.mxu0 0
        %2022 = vmatprep.subr.bf16.mxu0 0
        %2023 = vmatpush2.bf16.msra.mxu0 0
        %2024 = vmatprep.subr.bf16.mxu0 0
        %2025 = vmatpush2.bf16.msra.mxu0 0
        %2026 = vmatprep.subr.bf16.mxu0 0
        %2027 = vmatpush2.bf16.msra.mxu0 0
        %2028 = vmatprep.mubr.bf16.mxu0 0
        %2029 = vmatmul.mubr.bf16.gmra.mxu0 %v1655
        %v2030 = vpop.f32.mrf.mxu0
        %v2031 = vadd.f32 0.0, %v2030
        %v2032 = vpop.f32.mrf.mxu0
        %v2033 = vpop.f32.mrf.mxu0
        %v2034 = vadd.f32 0.0, %v2033
        %v2035 = vpop.f32.mrf.mxu0
        %2036 = vmatprep.mubr.bf16.mxu0 0
        %2037 = vmatmul.mubr.bf16.gmra.mxu0 %v1656
        %v2038 = vpop.f32.mrf.mxu0
        %v2039 = vadd.f32 0.0, %v2038
        %v2040 = vpop.f32.mrf.mxu0
        %v2041 = vpop.f32.mrf.mxu0
        %v2042 = vadd.f32 0.0, %v2041
        %v2043 = vpop.f32.mrf.mxu0
        %2044 = vmatprep.mubr.bf16.mxu0 0
        %2045 = vmatmul.mubr.bf16.gmra.mxu0 %v1657
        %v2046 = vpop.f32.mrf.mxu0
        %v2047 = vadd.f32 0.0, %v2046
        %v2048 = vpop.f32.mrf.mxu0
        %v2049 = vpop.f32.mrf.mxu0
        %v2050 = vadd.f32 0.0, %v2049
        %v2051 = vpop.f32.mrf.mxu0
        %2052 = vmatprep.mubr.bf16.mxu0 0
        %2053 = vmatmul.mubr.bf16.gmra.mxu0 %v1658
        %v2054 = vpop.f32.mrf.mxu0
        %v2055 = vadd.f32 0.0, %v2054
        %v2056 = vpop.f32.mrf.mxu0
        %v2057 = vpop.f32.mrf.mxu0
        %v2058 = vadd.f32 0.0, %v2057
        %v2059 = vpop.f32.mrf.mxu0
        %2060 = vmatprep.mubr.bf16.mxu0 0
        %2061 = vmatmul.mubr.bf16.gmra.mxu0 %v1659
        %v2062 = vpop.f32.mrf.mxu0
        %v2063 = vadd.f32 0.0, %v2062
        %v2064 = vpop.f32.mrf.mxu0
        %v2065 = vpop.f32.mrf.mxu0
        %v2066 = vadd.f32 0.0, %v2065
        %v2067 = vpop.f32.mrf.mxu0
        %2068 = vmatprep.mubr.bf16.mxu0 0
        %2069 = vmatmul.mubr.bf16.gmra.mxu0 %v1660
        %v2070 = vpop.f32.mrf.mxu0
        %v2071 = vadd.f32 0.0, %v2070
        %v2072 = vpop.f32.mrf.mxu0
        %v2073 = vpop.f32.mrf.mxu0
        %v2074 = vadd.f32 0.0, %v2073
        %v2075 = vpop.f32.mrf.mxu0
        %2076 = vmatprep.mubr.bf16.mxu0 0
        %2077 = vmatmul.mubr.bf16.gmra.mxu0 %v1661
        %v2078 = vpop.f32.mrf.mxu0
        %v2079 = vadd.f32 0.0, %v2078
        %v2080 = vpop.f32.mrf.mxu0
        %v2081 = vpop.f32.mrf.mxu0
        %v2082 = vadd.f32 0.0, %v2081
        %v2083 = vpop.f32.mrf.mxu0
        %2084 = vmatprep.mubr.bf16.mxu0 0
        %2085 = vmatmul.mubr.bf16.gmra.mxu0 %v1662
        %v2086 = vpop.f32.mrf.mxu0
        %v2087 = vadd.f32 0.0, %v2086
        %v2088 = vpop.f32.mrf.mxu0
        %v2089 = vpop.f32.mrf.mxu0
        %v2090 = vadd.f32 0.0, %v2089
        %v2091 = vpop.f32.mrf.mxu0
        %2092 = vmatprep.mubr.bf16.mxu0 0
        %2093 = vmatmul.mubr.bf16.gmra.mxu0 %v1663
        %v2094 = vpop.f32.mrf.mxu0
        %v2095 = vadd.f32 0.0, %v2094
        %v2096 = vpop.f32.mrf.mxu0
        %v2097 = vpop.f32.mrf.mxu0
        %v2098 = vadd.f32 0.0, %v2097
        %v2099 = vpop.f32.mrf.mxu0
        %2100 = vmatprep.mubr.bf16.mxu0 0
        %2101 = vmatmul.mubr.bf16.gmra.mxu0 %v1664
        %v2102 = vpop.f32.mrf.mxu0
        %v2103 = vadd.f32 0.0, %v2102
        %v2104 = vpop.f32.mrf.mxu0
        %v2105 = vpop.f32.mrf.mxu0
        %v2106 = vadd.f32 0.0, %v2105
        %v2107 = vpop.f32.mrf.mxu0
        %2108 = vmatprep.mubr.bf16.mxu0 0
        %2109 = vmatmul.mubr.bf16.gmra.mxu0 %v1665
        %v2110 = vpop.f32.mrf.mxu0
        %v2111 = vadd.f32 0.0, %v2110
        %v2112 = vpop.f32.mrf.mxu0
        %v2113 = vpop.f32.mrf.mxu0
        %v2114 = vadd.f32 0.0, %v2113
        %v2115 = vpop.f32.mrf.mxu0
        %2116 = vmatprep.mubr.bf16.mxu0 0
        %2117 = vmatmul.mubr.bf16.gmra.mxu0 %v1666
        %v2118 = vpop.f32.mrf.mxu0
        %v2119 = vadd.f32 0.0, %v2118
        %v2120 = vpop.f32.mrf.mxu0
        %v2121 = vpop.f32.mrf.mxu0
        %v2122 = vadd.f32 0.0, %v2121
        %v2123 = vpop.f32.mrf.mxu0
        %2124 = vmatprep.mubr.bf16.mxu0 0
        %2125 = vmatmul.mubr.bf16.gmra.mxu0 %v1667
        %v2126 = vpop.f32.mrf.mxu0
        %v2127 = vadd.f32 0.0, %v2126
        %v2128 = vpop.f32.mrf.mxu0
        %v2129 = vpop.f32.mrf.mxu0
        %v2130 = vadd.f32 0.0, %v2129
        %v2131 = vpop.f32.mrf.mxu0
        %2132 = vmatprep.mubr.bf16.mxu0 0
        %2133 = vmatmul.mubr.bf16.gmra.mxu0 %v1668
        %v2134 = vpop.f32.mrf.mxu0
        %v2135 = vadd.f32 0.0, %v2134
        %v2136 = vpop.f32.mrf.mxu0
        %v2137 = vpop.f32.mrf.mxu0
        %v2138 = vadd.f32 0.0, %v2137
        %v2139 = vpop.f32.mrf.mxu0
        %2140 = vmatprep.mubr.bf16.mxu0 0
        %2141 = vmatmul.mubr.bf16.gmra.mxu0 %v1669
        %v2142 = vpop.f32.mrf.mxu0
        %v2143 = vadd.f32 0.0, %v2142
        %v2144 = vpop.f32.mrf.mxu0
        %v2145 = vpop.f32.mrf.mxu0
        %v2146 = vadd.f32 0.0, %v2145
        %v2147 = vpop.f32.mrf.mxu0
        %2148 = vmatprep.mubr.bf16.mxu0 0
        %2149 = vmatmul.mubr.bf16.gmra.mxu0 %v1946
        %v2150 = vpop.f32.mrf.mxu0
        %v2151 = vadd.f32 0.0, %v2150
        %v2152 = vpop.f32.mrf.mxu0
        %v2153 = vpop.f32.mrf.mxu0
        %v2154 = vadd.f32 0.0, %v2153
        %v2155 = vpop.f32.mrf.mxu0
        %2156 = vdwg.mxu0
        %v2157 = vadd.f32 %v1895, %v2031
        %v2158 = vadd.f32 %v1896, %v2034
        %v2159 = vadd.f32 %v1897, %v2039
        %v2160 = vadd.f32 %v1898, %v2042
        %v2161 = vadd.f32 %v1899, %v2047
        %v2162 = vadd.f32 %v1900, %v2050
        %v2163 = vadd.f32 %v1901, %v2055
        %v2164 = vadd.f32 %v1902, %v2058
        %v2165 = vadd.f32 %v1903, %v2063
        %v2166 = vadd.f32 %v1904, %v2066
        %v2167 = vadd.f32 %v1905, %v2071
        %v2168 = vadd.f32 %v1906, %v2074
        %v2169 = vadd.f32 %v1907, %v2079
        %v2170 = vadd.f32 %v1908, %v2082
        %v2171 = vadd.f32 %v1909, %v2087
        %v2172 = vadd.f32 %v1910, %v2090
        %v2173 = vadd.f32 %v1911, %v2095
        %v2174 = vadd.f32 %v1912, %v2098
        %v2175 = vadd.f32 %v1913, %v2103
        %v2176 = vadd.f32 %v1914, %v2106
        %v2177 = vadd.f32 %v1915, %v2111
        %v2178 = vadd.f32 %v1916, %v2114
        %v2179 = vadd.f32 %v1917, %v2119
        %v2180 = vadd.f32 %v1918, %v2122
        %v2181 = vadd.f32 %v1919, %v2127
        %v2182 = vadd.f32 %v1920, %v2130
        %v2183 = vadd.f32 %v1921, %v2135
        %v2184 = vadd.f32 %v1922, %v2138
        %v2185 = vadd.f32 %v1923, %v2143
        %v2186 = vadd.f32 %v1924, %v2146
        %v2187 = vadd.f32 %v1925, %v2151
        %v2188 = vadd.f32 %v1926, %v2154
        %s2189 = scalar_lea.vmem %s1, 448
        %v2190 = vld [vmem:[%s2189] sm:$0xf]
        %v2191 = vld [vmem:[%s2189 + $0x4] sm:$0xf]
        %v2192 = vld [vmem:[%s2189 + $0x8] sm:$0xf]
        %v2193 = vld [vmem:[%s2189 + $0xc] sm:$0xf]
        %v2194 = vld [vmem:[%s2189 + $0x10] sm:$0xf]
        %v2195 = vld [vmem:[%s2189 + $0x14] sm:$0xf]
        %v2196 = vld [vmem:[%s2189 + $0x18] sm:$0xf]
        %v2197 = vld [vmem:[%s2189 + $0x1c] sm:$0xf]
        %v2198 = vld [vmem:[%s2189 + $0x20] sm:$0xf]
        %v2199 = vld [vmem:[%s2189 + $0x24] sm:$0xf]
        %v2200 = vld [vmem:[%s2189 + $0x28] sm:$0xf]
        %v2201 = vld [vmem:[%s2189 + $0x2c] sm:$0xf]
        %v2202 = vld [vmem:[%s2189 + $0x30] sm:$0xf]
        %v2203 = vld [vmem:[%s2189 + $0x34] sm:$0xf]
        %v2204 = vld [vmem:[%s2189 + $0x38] sm:$0xf]
        %v2205 = vld [vmem:[%s2189 + $0x3c] sm:$0xf]
        %v2206 = vunpack.c.l.b16 %v1594
        %v2207 = vunpack.c.l.b16 %v1604
        %v2208 = vpack.c.b16 %v2207, %v2206
        %v2226 = vunpack.c.l.b16 %v2190
        %v2227 = vunpack.c.l.b16 %v2191
        %v2228 = vunpack.c.l.b16 %v2192
        %v2229 = vunpack.c.l.b16 %v2193
        %v2230 = vunpack.c.l.b16 %v2194
        %v2231 = vunpack.c.l.b16 %v2195
        %v2232 = vunpack.c.l.b16 %v2196
        %v2233 = vunpack.c.l.b16 %v2197
        %v2234 = vunpack.c.l.b16 %v2198
        %v2235 = vunpack.c.l.b16 %v2199
        %v2236 = vunpack.c.l.b16 %v2200
        %v2237 = vunpack.c.l.b16 %v2201
        %v2238 = vunpack.c.l.b16 %v2202
        %v2239 = vunpack.c.l.b16 %v2203
        %v2240 = vunpack.c.l.b16 %v2204
        %v2241 = vunpack.c.l.b16 %v2205
        %v2242 = vpack.c.b16 %v2227, %v2226
        %v2243 = vpack.c.b16 %v2229, %v2228
        %v2244 = vpack.c.b16 %v2231, %v2230
        %v2245 = vpack.c.b16 %v2233, %v2232
        %v2246 = vpack.c.b16 %v2235, %v2234
        %v2247 = vpack.c.b16 %v2237, %v2236
        %v2248 = vpack.c.b16 %v2239, %v2238
        %v2249 = vpack.c.b16 %v2241, %v2240
        %2258 = vmatprep.subr.bf16.mxu0 0
        %2259 = vmatpush1.bf16.msra.mxu0 %v2249
        %2260 = vmatprep.subr.bf16.mxu0 0
        %2261 = vmatpush1.bf16.msra.mxu0 %v2248
        %2262 = vmatprep.subr.bf16.mxu0 0
        %2263 = vmatpush1.bf16.msra.mxu0 %v2247
        %2264 = vmatprep.subr.bf16.mxu0 0
        %2265 = vmatpush1.bf16.msra.mxu0 %v2246
        %2266 = vmatprep.subr.bf16.mxu0 0
        %2267 = vmatpush1.bf16.msra.mxu0 %v2245
        %2268 = vmatprep.subr.bf16.mxu0 0
        %2269 = vmatpush1.bf16.msra.mxu0 %v2244
        %2270 = vmatprep.subr.bf16.mxu0 0
        %2271 = vmatpush1.bf16.msra.mxu0 %v2243
        %2272 = vmatprep.subr.bf16.mxu0 0
        %2273 = vmatpush1.bf16.msra.mxu0 %v2242
        %2274 = vmatprep.subr.bf16.mxu0 0
        %2275 = vmatpush2.bf16.msra.mxu0 0
        %2276 = vmatprep.subr.bf16.mxu0 0
        %2277 = vmatpush2.bf16.msra.mxu0 0
        %2278 = vmatprep.subr.bf16.mxu0 0
        %2279 = vmatpush2.bf16.msra.mxu0 0
        %2280 = vmatprep.subr.bf16.mxu0 0
        %2281 = vmatpush2.bf16.msra.mxu0 0
        %2282 = vmatprep.subr.bf16.mxu0 0
        %2283 = vmatpush2.bf16.msra.mxu0 0
        %2284 = vmatprep.subr.bf16.mxu0 0
        %2285 = vmatpush2.bf16.msra.mxu0 0
        %2286 = vmatprep.subr.bf16.mxu0 0
        %2287 = vmatpush2.bf16.msra.mxu0 0
        %2288 = vmatprep.subr.bf16.mxu0 0
        %2289 = vmatpush2.bf16.msra.mxu0 0
        %2290 = vmatprep.mubr.bf16.mxu0 0
        %2291 = vmatmul.mubr.bf16.gmra.mxu0 %v1656
        %v2292 = vpop.f32.mrf.mxu0
        %v2293 = vadd.f32 0.0, %v2292
        %v2294 = vpop.f32.mrf.mxu0
        %v2295 = vpop.f32.mrf.mxu0
        %v2296 = vadd.f32 0.0, %v2295
        %v2297 = vpop.f32.mrf.mxu0
        %2298 = vmatprep.mubr.bf16.mxu0 0
        %2299 = vmatmul.mubr.bf16.gmra.mxu0 %v1657
        %v2300 = vpop.f32.mrf.mxu0
        %v2301 = vadd.f32 0.0, %v2300
        %v2302 = vpop.f32.mrf.mxu0
        %v2303 = vpop.f32.mrf.mxu0
        %v2304 = vadd.f32 0.0, %v2303
        %v2305 = vpop.f32.mrf.mxu0
        %2306 = vmatprep.mubr.bf16.mxu0 0
        %2307 = vmatmul.mubr.bf16.gmra.mxu0 %v1658
        %v2308 = vpop.f32.mrf.mxu0
        %v2309 = vadd.f32 0.0, %v2308
        %v2310 = vpop.f32.mrf.mxu0
        %v2311 = vpop.f32.mrf.mxu0
        %v2312 = vadd.f32 0.0, %v2311
        %v2313 = vpop.f32.mrf.mxu0
        %2314 = vmatprep.mubr.bf16.mxu0 0
        %2315 = vmatmul.mubr.bf16.gmra.mxu0 %v1659
        %v2316 = vpop.f32.mrf.mxu0
        %v2317 = vadd.f32 0.0, %v2316
        %v2318 = vpop.f32.mrf.mxu0
        %v2319 = vpop.f32.mrf.mxu0
        %v2320 = vadd.f32 0.0, %v2319
        %v2321 = vpop.f32.mrf.mxu0
        %2322 = vmatprep.mubr.bf16.mxu0 0
        %2323 = vmatmul.mubr.bf16.gmra.mxu0 %v1660
        %v2324 = vpop.f32.mrf.mxu0
        %v2325 = vadd.f32 0.0, %v2324
        %v2326 = vpop.f32.mrf.mxu0
        %v2327 = vpop.f32.mrf.mxu0
        %v2328 = vadd.f32 0.0, %v2327
        %v2329 = vpop.f32.mrf.mxu0
        %2330 = vmatprep.mubr.bf16.mxu0 0
        %2331 = vmatmul.mubr.bf16.gmra.mxu0 %v1661
        %v2332 = vpop.f32.mrf.mxu0
        %v2333 = vadd.f32 0.0, %v2332
        %v2334 = vpop.f32.mrf.mxu0
        %v2335 = vpop.f32.mrf.mxu0
        %v2336 = vadd.f32 0.0, %v2335
        %v2337 = vpop.f32.mrf.mxu0
        %2338 = vmatprep.mubr.bf16.mxu0 0
        %2339 = vmatmul.mubr.bf16.gmra.mxu0 %v1662
        %v2340 = vpop.f32.mrf.mxu0
        %v2341 = vadd.f32 0.0, %v2340
        %v2342 = vpop.f32.mrf.mxu0
        %v2343 = vpop.f32.mrf.mxu0
        %v2344 = vadd.f32 0.0, %v2343
        %v2345 = vpop.f32.mrf.mxu0
        %2346 = vmatprep.mubr.bf16.mxu0 0
        %2347 = vmatmul.mubr.bf16.gmra.mxu0 %v1663
        %v2348 = vpop.f32.mrf.mxu0
        %v2349 = vadd.f32 0.0, %v2348
        %v2350 = vpop.f32.mrf.mxu0
        %v2351 = vpop.f32.mrf.mxu0
        %v2352 = vadd.f32 0.0, %v2351
        %v2353 = vpop.f32.mrf.mxu0
        %2354 = vmatprep.mubr.bf16.mxu0 0
        %2355 = vmatmul.mubr.bf16.gmra.mxu0 %v1664
        %v2356 = vpop.f32.mrf.mxu0
        %v2357 = vadd.f32 0.0, %v2356
        %v2358 = vpop.f32.mrf.mxu0
        %v2359 = vpop.f32.mrf.mxu0
        %v2360 = vadd.f32 0.0, %v2359
        %v2361 = vpop.f32.mrf.mxu0
        %2362 = vmatprep.mubr.bf16.mxu0 0
        %2363 = vmatmul.mubr.bf16.gmra.mxu0 %v1665
        %v2364 = vpop.f32.mrf.mxu0
        %v2365 = vadd.f32 0.0, %v2364
        %v2366 = vpop.f32.mrf.mxu0
        %v2367 = vpop.f32.mrf.mxu0
        %v2368 = vadd.f32 0.0, %v2367
        %v2369 = vpop.f32.mrf.mxu0
        %2370 = vmatprep.mubr.bf16.mxu0 0
        %2371 = vmatmul.mubr.bf16.gmra.mxu0 %v1666
        %v2372 = vpop.f32.mrf.mxu0
        %v2373 = vadd.f32 0.0, %v2372
        %v2374 = vpop.f32.mrf.mxu0
        %v2375 = vpop.f32.mrf.mxu0
        %v2376 = vadd.f32 0.0, %v2375
        %v2377 = vpop.f32.mrf.mxu0
        %2378 = vmatprep.mubr.bf16.mxu0 0
        %2379 = vmatmul.mubr.bf16.gmra.mxu0 %v1667
        %v2380 = vpop.f32.mrf.mxu0
        %v2381 = vadd.f32 0.0, %v2380
        %v2382 = vpop.f32.mrf.mxu0
        %v2383 = vpop.f32.mrf.mxu0
        %v2384 = vadd.f32 0.0, %v2383
        %v2385 = vpop.f32.mrf.mxu0
        %2386 = vmatprep.mubr.bf16.mxu0 0
        %2387 = vmatmul.mubr.bf16.gmra.mxu0 %v1668
        %v2388 = vpop.f32.mrf.mxu0
        %v2389 = vadd.f32 0.0, %v2388
        %v2390 = vpop.f32.mrf.mxu0
        %v2391 = vpop.f32.mrf.mxu0
        %v2392 = vadd.f32 0.0, %v2391
        %v2393 = vpop.f32.mrf.mxu0
        %2394 = vmatprep.mubr.bf16.mxu0 0
        %2395 = vmatmul.mubr.bf16.gmra.mxu0 %v1669
        %v2396 = vpop.f32.mrf.mxu0
        %v2397 = vadd.f32 0.0, %v2396
        %v2398 = vpop.f32.mrf.mxu0
        %v2399 = vpop.f32.mrf.mxu0
        %v2400 = vadd.f32 0.0, %v2399
        %v2401 = vpop.f32.mrf.mxu0
        %2402 = vmatprep.mubr.bf16.mxu0 0
        %2403 = vmatmul.mubr.bf16.gmra.mxu0 %v1946
        %v2404 = vpop.f32.mrf.mxu0
        %v2405 = vadd.f32 0.0, %v2404
        %v2406 = vpop.f32.mrf.mxu0
        %v2407 = vpop.f32.mrf.mxu0
        %v2408 = vadd.f32 0.0, %v2407
        %v2409 = vpop.f32.mrf.mxu0
        %2410 = vmatprep.mubr.bf16.mxu0 0
        %2411 = vmatmul.mubr.bf16.gmra.mxu0 %v2208
        %v2412 = vpop.f32.mrf.mxu0
        %v2413 = vadd.f32 0.0, %v2412
        %v2414 = vpop.f32.mrf.mxu0
        %v2415 = vpop.f32.mrf.mxu0
        %v2416 = vadd.f32 0.0, %v2415
        %v2417 = vpop.f32.mrf.mxu0
        %2418 = vdwg.mxu0
        %v2419 = vadd.f32 %v2157, %v2293
        %v2420 = vadd.f32 %v2158, %v2296
        %v2421 = vadd.f32 %v2159, %v2301
        %v2422 = vadd.f32 %v2160, %v2304
        %v2423 = vadd.f32 %v2161, %v2309
        %v2424 = vadd.f32 %v2162, %v2312
        %v2425 = vadd.f32 %v2163, %v2317
        %v2426 = vadd.f32 %v2164, %v2320
        %v2427 = vadd.f32 %v2165, %v2325
        %v2428 = vadd.f32 %v2166, %v2328
        %v2429 = vadd.f32 %v2167, %v2333
        %v2430 = vadd.f32 %v2168, %v2336
        %v2431 = vadd.f32 %v2169, %v2341
        %v2432 = vadd.f32 %v2170, %v2344
        %v2433 = vadd.f32 %v2171, %v2349
        %v2434 = vadd.f32 %v2172, %v2352
        %v2435 = vadd.f32 %v2173, %v2357
        %v2436 = vadd.f32 %v2174, %v2360
        %v2437 = vadd.f32 %v2175, %v2365
        %v2438 = vadd.f32 %v2176, %v2368
        %v2439 = vadd.f32 %v2177, %v2373
        %v2440 = vadd.f32 %v2178, %v2376
        %v2441 = vadd.f32 %v2179, %v2381
        %v2442 = vadd.f32 %v2180, %v2384
        %v2443 = vadd.f32 %v2181, %v2389
        %v2444 = vadd.f32 %v2182, %v2392
        %v2445 = vadd.f32 %v2183, %v2397
        %v2446 = vadd.f32 %v2184, %v2400
        %v2447 = vadd.f32 %v2185, %v2405
        %v2448 = vadd.f32 %v2186, %v2408
        %v2449 = vadd.f32 %v2187, %v2413
        %v2450 = vadd.f32 %v2188, %v2416
        %v2451 = vld [vmem:[%s188] sm:$0xe]
        %v2452 = vld [vmem:[%s188 + $0xc] sm:$0xe]
        %v2453 = vld [vmem:[%s188 + $0x18] sm:$0xe]
        %v2454 = vld [vmem:[%s188 + $0x24] sm:$0xe]
        %v2455 = vld [vmem:[%s188 + $0x30] sm:$0xe]
        %v2456 = vld [vmem:[%s188 + $0x3c] sm:$0xe]
        %v2457 = vld [vmem:[%s188 + $0x48] sm:$0xe]
        %v2458 = vld [vmem:[%s188 + $0x54] sm:$0xe]
        %v2459 = vld [vmem:[%s188 + $0x60] sm:$0xe]
        %v2460 = vld [vmem:[%s188 + $0x6c] sm:$0xe]
        %v2461 = vld [vmem:[%s188 + $0x78] sm:$0xe]
        %v2462 = vld [vmem:[%s188 + $0x84] sm:$0xe]
        %v2463 = vld [vmem:[%s188 + $0x90] sm:$0xe]
        %v2464 = vld [vmem:[%s188 + $0x9c] sm:$0xe]
        %v2465 = vld [vmem:[%s188 + $0xa8] sm:$0xe]
        %v2466 = vld [vmem:[%s188 + $0xb4] sm:$0xe]
        %v2467 = vld [vmem:[%s188 + $0xc0] sm:$0xe]
        %v2468 = vld [vmem:[%s188 + $0xcc] sm:$0xe]
        %vm2523 = vcmask 1042432
        %vm2524 = vcmask 1046532
        %vm2525 = vmor %vm2523, %vm2524
        %v2526 = vrot.slane %v2451, 5
        %v2527 = vrot.slane %v2526, 4
        %v2528 = vrot.slane %v1117, 5
        %v2529 = vsel %vm2525, %v2527, %v2528
        %v2530 = vrot.slane %v2528, 4
        %v2531 = vrot.slane %v1118, 5
        %v2532 = vsel %vm2525, %v2530, %v2531
        %v2533 = vrot.slane %v2452, 5
        %v2534 = vrot.slane %v2533, 4
        %v2535 = vrot.slane %v1120, 5
        %v2536 = vsel %vm2525, %v2534, %v2535
        %v2537 = vrot.slane %v2535, 4
        %v2538 = vrot.slane %v1121, 5
        %v2539 = vsel %vm2525, %v2537, %v2538
        %v2540 = vrot.slane %v2453, 5
        %v2541 = vrot.slane %v2540, 4
        %v2542 = vrot.slane %v1123, 5
        %v2543 = vsel %vm2525, %v2541, %v2542
        %v2544 = vrot.slane %v2542, 4
        %v2545 = vrot.slane %v1124, 5
        %v2546 = vsel %vm2525, %v2544, %v2545
        %v2547 = vrot.slane %v2454, 5
        %v2548 = vrot.slane %v2547, 4
        %v2549 = vrot.slane %v1126, 5
        %v2550 = vsel %vm2525, %v2548, %v2549
        %v2551 = vrot.slane %v2549, 4
        %v2552 = vrot.slane %v1127, 5
        %v2553 = vsel %vm2525, %v2551, %v2552
        %v2554 = vrot.slane %v2455, 5
        %v2555 = vrot.slane %v2554, 4
        %v2556 = vrot.slane %v1129, 5
        %v2557 = vsel %vm2525, %v2555, %v2556
        %v2558 = vrot.slane %v2556, 4
        %v2559 = vrot.slane %v1130, 5
        %v2560 = vsel %vm2525, %v2558, %v2559
        %v2561 = vrot.slane %v2456, 5
        %v2562 = vrot.slane %v2561, 4
        %v2563 = vrot.slane %v1132, 5
        %v2564 = vsel %vm2525, %v2562, %v2563
        %v2565 = vrot.slane %v2563, 4
        %v2566 = vrot.slane %v1133, 5
        %v2567 = vsel %vm2525, %v2565, %v2566
        %v2568 = vrot.slane %v2457, 5
        %v2569 = vrot.slane %v2568, 4
        %v2570 = vrot.slane %v1135, 5
        %v2571 = vsel %vm2525, %v2569, %v2570
        %v2572 = vrot.slane %v2570, 4
        %v2573 = vrot.slane %v1136, 5
        %v2574 = vsel %vm2525, %v2572, %v2573
        %v2575 = vrot.slane %v2458, 5
        %v2576 = vrot.slane %v2575, 4
        %v2577 = vrot.slane %v1138, 5
        %v2578 = vsel %vm2525, %v2576, %v2577
        %v2579 = vrot.slane %v2577, 4
        %v2580 = vrot.slane %v1139, 5
        %v2581 = vsel %vm2525, %v2579, %v2580
        %v2582 = vrot.slane %v2459, 5
        %v2583 = vrot.slane %v2582, 4
        %v2584 = vrot.slane %v1141, 5
        %v2585 = vsel %vm2525, %v2583, %v2584
        %v2586 = vrot.slane %v2584, 4
        %v2587 = vrot.slane %v1142, 5
        %v2588 = vsel %vm2525, %v2586, %v2587
        %v2589 = vrot.slane %v2460, 5
        %v2590 = vrot.slane %v2589, 4
        %v2591 = vrot.slane %v1144, 5
        %v2592 = vsel %vm2525, %v2590, %v2591
        %v2593 = vrot.slane %v2591, 4
        %v2594 = vrot.slane %v1145, 5
        %v2595 = vsel %vm2525, %v2593, %v2594
        %v2596 = vrot.slane %v2461, 5
        %v2597 = vrot.slane %v2596, 4
        %v2598 = vrot.slane %v1147, 5
        %v2599 = vsel %vm2525, %v2597, %v2598
        %v2600 = vrot.slane %v2598, 4
        %v2601 = vrot.slane %v1148, 5
        %v2602 = vsel %vm2525, %v2600, %v2601
        %v2603 = vrot.slane %v2462, 5
        %v2604 = vrot.slane %v2603, 4
        %v2605 = vrot.slane %v1150, 5
        %v2606 = vsel %vm2525, %v2604, %v2605
        %v2607 = vrot.slane %v2605, 4
        %v2608 = vrot.slane %v1151, 5
        %v2609 = vsel %vm2525, %v2607, %v2608
        %v2610 = vrot.slane %v2463, 5
        %v2611 = vrot.slane %v2610, 4
        %v2612 = vrot.slane %v1153, 5
        %v2613 = vsel %vm2525, %v2611, %v2612
        %v2614 = vrot.slane %v2612, 4
        %v2615 = vrot.slane %v1154, 5
        %v2616 = vsel %vm2525, %v2614, %v2615
        %v2617 = vrot.slane %v2464, 5
        %v2618 = vrot.slane %v2617, 4
        %v2619 = vrot.slane %v1156, 5
        %v2620 = vsel %vm2525, %v2618, %v2619
        %v2621 = vrot.slane %v2619, 4
        %v2622 = vrot.slane %v1157, 5
        %v2623 = vsel %vm2525, %v2621, %v2622
        %v2624 = vrot.slane %v2465, 5
        %v2625 = vrot.slane %v2624, 4
        %v2626 = vrot.slane %v1159, 5
        %v2627 = vsel %vm2525, %v2625, %v2626
        %v2628 = vrot.slane %v2626, 4
        %v2629 = vrot.slane %v1160, 5
        %v2630 = vsel %vm2525, %v2628, %v2629
        %v2631 = vrot.slane %v2466, 5
        %v2632 = vrot.slane %v2631, 4
        %v2633 = vrot.slane %v1162, 5
        %v2634 = vsel %vm2525, %v2632, %v2633
        %v2635 = vrot.slane %v2633, 4
        %v2636 = vrot.slane %v1163, 5
        %v2637 = vsel %vm2525, %v2635, %v2636
        %v2638 = vrot.slane %v2467, 5
        %v2639 = vrot.slane %v2638, 4
        %v2640 = vrot.slane %v1165, 5
        %v2641 = vsel %vm2525, %v2639, %v2640
        %v2642 = vrot.slane %v2640, 4
        %v2643 = vrot.slane %v1166, 5
        %v2644 = vsel %vm2525, %v2642, %v2643
        %v2645 = vrot.slane %v2468, 5
        %v2646 = vrot.slane %v2645, 4
        %v2647 = vrot.slane %v1168, 5
        %v2648 = vsel %vm2525, %v2646, %v2647
        %v2649 = vrot.slane %v2647, 4
        %v2650 = vrot.slane %v1169, 5
        %v2651 = vsel %vm2525, %v2649, %v2650
        %s2652 = scalar_lea.vmem %s1, 128
        %v2653 = vld [vmem:[%s2652] sm:$0xf]
        %v2654 = vld [vmem:[%s2652 + $0x4] sm:$0xf]
        %v2655 = vld [vmem:[%s2652 + $0x8] sm:$0xf]
        %v2656 = vld [vmem:[%s2652 + $0xc] sm:$0xf]
        %v2657 = vld [vmem:[%s2652 + $0x10] sm:$0xf]
        %v2658 = vld [vmem:[%s2652 + $0x14] sm:$0xf]
        %v2659 = vld [vmem:[%s2652 + $0x18] sm:$0xf]
        %v2660 = vld [vmem:[%s2652 + $0x1c] sm:$0xf]
        %v2661 = vld [vmem:[%s2652 + $0x20] sm:$0xf]
        %v2662 = vld [vmem:[%s2652 + $0x24] sm:$0xf]
        %v2663 = vld [vmem:[%s2652 + $0x28] sm:$0xf]
        %v2664 = vld [vmem:[%s2652 + $0x2c] sm:$0xf]
        %v2665 = vld [vmem:[%s2652 + $0x30] sm:$0xf]
        %v2666 = vld [vmem:[%s2652 + $0x34] sm:$0xf]
        %v2667 = vld [vmem:[%s2652 + $0x38] sm:$0xf]
        %v2668 = vld [vmem:[%s2652 + $0x3c] sm:$0xf]
        %v2669 = vunpack.c.l.b16 %v2529
        %v2670 = vunpack.c.l.b16 %v2532
        %v2671 = vunpack.c.l.b16 %v2536
        %v2672 = vunpack.c.l.b16 %v2539
        %v2673 = vunpack.c.l.b16 %v2543
        %v2674 = vunpack.c.l.b16 %v2546
        %v2675 = vunpack.c.l.b16 %v2550
        %v2676 = vunpack.c.l.b16 %v2553
        %v2677 = vunpack.c.l.b16 %v2557
        %v2678 = vunpack.c.l.b16 %v2560
        %v2679 = vunpack.c.l.b16 %v2564
        %v2680 = vunpack.c.l.b16 %v2567
        %v2681 = vunpack.c.l.b16 %v2571
        %v2682 = vunpack.c.l.b16 %v2574
        %v2683 = vunpack.c.l.b16 %v2578
        %v2684 = vunpack.c.l.b16 %v2581
        %v2685 = vunpack.c.l.b16 %v2585
        %v2686 = vunpack.c.l.b16 %v2588
        %v2687 = vunpack.c.l.b16 %v2592
        %v2688 = vunpack.c.l.b16 %v2595
        %v2689 = vunpack.c.l.b16 %v2599
        %v2690 = vunpack.c.l.b16 %v2602
        %v2691 = vunpack.c.l.b16 %v2606
        %v2692 = vunpack.c.l.b16 %v2609
        %v2693 = vunpack.c.l.b16 %v2613
        %v2694 = vunpack.c.l.b16 %v2616
        %v2695 = vunpack.c.l.b16 %v2620
        %v2696 = vunpack.c.l.b16 %v2623
        %v2697 = vunpack.c.l.b16 %v2627
        %v2698 = vunpack.c.l.b16 %v2630
        %v2699 = vunpack.c.l.b16 %v2634
        %v2700 = vunpack.c.l.b16 %v2637
        %v2701 = vpack.c.b16 %v2670, %v2669
        %v2702 = vpack.c.b16 %v2672, %v2671
        %v2703 = vpack.c.b16 %v2674, %v2673
        %v2704 = vpack.c.b16 %v2676, %v2675
        %v2705 = vpack.c.b16 %v2678, %v2677
        %v2706 = vpack.c.b16 %v2680, %v2679
        %v2707 = vpack.c.b16 %v2682, %v2681
        %v2708 = vpack.c.b16 %v2684, %v2683
        %v2709 = vpack.c.b16 %v2686, %v2685
        %v2710 = vpack.c.b16 %v2688, %v2687
        %v2711 = vpack.c.b16 %v2690, %v2689
        %v2712 = vpack.c.b16 %v2692, %v2691
        %v2713 = vpack.c.b16 %v2694, %v2693
        %v2714 = vpack.c.b16 %v2696, %v2695
        %v2715 = vpack.c.b16 %v2698, %v2697
        %v2716 = vpack.c.b16 %v2700, %v2699
        %v2749 = vunpack.c.l.b16 %v2653
        %v2750 = vunpack.c.l.b16 %v2654
        %v2751 = vunpack.c.l.b16 %v2655
        %v2752 = vunpack.c.l.b16 %v2656
        %v2753 = vunpack.c.l.b16 %v2657
        %v2754 = vunpack.c.l.b16 %v2658
        %v2755 = vunpack.c.l.b16 %v2659
        %v2756 = vunpack.c.l.b16 %v2660
        %v2757 = vunpack.c.l.b16 %v2661
        %v2758 = vunpack.c.l.b16 %v2662
        %v2759 = vunpack.c.l.b16 %v2663
        %v2760 = vunpack.c.l.b16 %v2664
        %v2761 = vunpack.c.l.b16 %v2665
        %v2762 = vunpack.c.l.b16 %v2666
        %v2763 = vunpack.c.l.b16 %v2667
        %v2764 = vunpack.c.l.b16 %v2668
        %v2765 = vpack.c.b16 %v2750, %v2749
        %v2766 = vpack.c.b16 %v2752, %v2751
        %v2767 = vpack.c.b16 %v2754, %v2753
        %v2768 = vpack.c.b16 %v2756, %v2755
        %v2769 = vpack.c.b16 %v2758, %v2757
        %v2770 = vpack.c.b16 %v2760, %v2759
        %v2771 = vpack.c.b16 %v2762, %v2761
        %v2772 = vpack.c.b16 %v2764, %v2763
        %2781 = vmatprep.subr.bf16.mxu0 0
        %2782 = vmatpush1.bf16.msra.mxu0 %v2772
        %2783 = vmatprep.subr.bf16.mxu0 0
        %2784 = vmatpush1.bf16.msra.mxu0 %v2771
        %2785 = vmatprep.subr.bf16.mxu0 0
        %2786 = vmatpush1.bf16.msra.mxu0 %v2770
        %2787 = vmatprep.subr.bf16.mxu0 0
        %2788 = vmatpush1.bf16.msra.mxu0 %v2769
        %2789 = vmatprep.subr.bf16.mxu0 0
        %2790 = vmatpush1.bf16.msra.mxu0 %v2768
        %2791 = vmatprep.subr.bf16.mxu0 0
        %2792 = vmatpush1.bf16.msra.mxu0 %v2767
        %2793 = vmatprep.subr.bf16.mxu0 0
        %2794 = vmatpush1.bf16.msra.mxu0 %v2766
        %2795 = vmatprep.subr.bf16.mxu0 0
        %2796 = vmatpush1.bf16.msra.mxu0 %v2765
        %2797 = vmatprep.subr.bf16.mxu0 0
        %2798 = vmatpush2.bf16.msra.mxu0 0
        %2799 = vmatprep.subr.bf16.mxu0 0
        %2800 = vmatpush2.bf16.msra.mxu0 0
        %2801 = vmatprep.subr.bf16.mxu0 0
        %2802 = vmatpush2.bf16.msra.mxu0 0
        %2803 = vmatprep.subr.bf16.mxu0 0
        %2804 = vmatpush2.bf16.msra.mxu0 0
        %2805 = vmatprep.subr.bf16.mxu0 0
        %2806 = vmatpush2.bf16.msra.mxu0 0
        %2807 = vmatprep.subr.bf16.mxu0 0
        %2808 = vmatpush2.bf16.msra.mxu0 0
        %2809 = vmatprep.subr.bf16.mxu0 0
        %2810 = vmatpush2.bf16.msra.mxu0 0
        %2811 = vmatprep.subr.bf16.mxu0 0
        %2812 = vmatpush2.bf16.msra.mxu0 0
        %2813 = vmatprep.mubr.bf16.mxu0 0
        %2814 = vmatmul.mubr.bf16.gmra.mxu0 %v2701
        %v2815 = vpop.f32.mrf.mxu0
        %v2816 = vadd.f32 0.0, %v2815
        %v2817 = vpop.f32.mrf.mxu0
        %v2818 = vpop.f32.mrf.mxu0
        %v2819 = vadd.f32 0.0, %v2818
        %v2820 = vpop.f32.mrf.mxu0
        %2821 = vmatprep.mubr.bf16.mxu0 0
        %2822 = vmatmul.mubr.bf16.gmra.mxu0 %v2702
        %v2823 = vpop.f32.mrf.mxu0
        %v2824 = vadd.f32 0.0, %v2823
        %v2825 = vpop.f32.mrf.mxu0
        %v2826 = vpop.f32.mrf.mxu0
        %v2827 = vadd.f32 0.0, %v2826
        %v2828 = vpop.f32.mrf.mxu0
        %2829 = vmatprep.mubr.bf16.mxu0 0
        %2830 = vmatmul.mubr.bf16.gmra.mxu0 %v2703
        %v2831 = vpop.f32.mrf.mxu0
        %v2832 = vadd.f32 0.0, %v2831
        %v2833 = vpop.f32.mrf.mxu0
        %v2834 = vpop.f32.mrf.mxu0
        %v2835 = vadd.f32 0.0, %v2834
        %v2836 = vpop.f32.mrf.mxu0
        %2837 = vmatprep.mubr.bf16.mxu0 0
        %2838 = vmatmul.mubr.bf16.gmra.mxu0 %v2704
        %v2839 = vpop.f32.mrf.mxu0
        %v2840 = vadd.f32 0.0, %v2839
        %v2841 = vpop.f32.mrf.mxu0
        %v2842 = vpop.f32.mrf.mxu0
        %v2843 = vadd.f32 0.0, %v2842
        %v2844 = vpop.f32.mrf.mxu0
        %2845 = vmatprep.mubr.bf16.mxu0 0
        %2846 = vmatmul.mubr.bf16.gmra.mxu0 %v2705
        %v2847 = vpop.f32.mrf.mxu0
        %v2848 = vadd.f32 0.0, %v2847
        %v2849 = vpop.f32.mrf.mxu0
        %v2850 = vpop.f32.mrf.mxu0
        %v2851 = vadd.f32 0.0, %v2850
        %v2852 = vpop.f32.mrf.mxu0
        %2853 = vmatprep.mubr.bf16.mxu0 0
        %2854 = vmatmul.mubr.bf16.gmra.mxu0 %v2706
        %v2855 = vpop.f32.mrf.mxu0
        %v2856 = vadd.f32 0.0, %v2855
        %v2857 = vpop.f32.mrf.mxu0
        %v2858 = vpop.f32.mrf.mxu0
        %v2859 = vadd.f32 0.0, %v2858
        %v2860 = vpop.f32.mrf.mxu0
        %2861 = vmatprep.mubr.bf16.mxu0 0
        %2862 = vmatmul.mubr.bf16.gmra.mxu0 %v2707
        %v2863 = vpop.f32.mrf.mxu0
        %v2864 = vadd.f32 0.0, %v2863
        %v2865 = vpop.f32.mrf.mxu0
        %v2866 = vpop.f32.mrf.mxu0
        %v2867 = vadd.f32 0.0, %v2866
        %v2868 = vpop.f32.mrf.mxu0
        %2869 = vmatprep.mubr.bf16.mxu0 0
        %2870 = vmatmul.mubr.bf16.gmra.mxu0 %v2708
        %v2871 = vpop.f32.mrf.mxu0
        %v2872 = vadd.f32 0.0, %v2871
        %v2873 = vpop.f32.mrf.mxu0
        %v2874 = vpop.f32.mrf.mxu0
        %v2875 = vadd.f32 0.0, %v2874
        %v2876 = vpop.f32.mrf.mxu0
        %2877 = vmatprep.mubr.bf16.mxu0 0
        %2878 = vmatmul.mubr.bf16.gmra.mxu0 %v2709
        %v2879 = vpop.f32.mrf.mxu0
        %v2880 = vadd.f32 0.0, %v2879
        %v2881 = vpop.f32.mrf.mxu0
        %v2882 = vpop.f32.mrf.mxu0
        %v2883 = vadd.f32 0.0, %v2882
        %v2884 = vpop.f32.mrf.mxu0
        %2885 = vmatprep.mubr.bf16.mxu0 0
        %2886 = vmatmul.mubr.bf16.gmra.mxu0 %v2710
        %v2887 = vpop.f32.mrf.mxu0
        %v2888 = vadd.f32 0.0, %v2887
        %v2889 = vpop.f32.mrf.mxu0
        %v2890 = vpop.f32.mrf.mxu0
        %v2891 = vadd.f32 0.0, %v2890
        %v2892 = vpop.f32.mrf.mxu0
        %2893 = vmatprep.mubr.bf16.mxu0 0
        %2894 = vmatmul.mubr.bf16.gmra.mxu0 %v2711
        %v2895 = vpop.f32.mrf.mxu0
        %v2896 = vadd.f32 0.0, %v2895
        %v2897 = vpop.f32.mrf.mxu0
        %v2898 = vpop.f32.mrf.mxu0
        %v2899 = vadd.f32 0.0, %v2898
        %v2900 = vpop.f32.mrf.mxu0
        %2901 = vmatprep.mubr.bf16.mxu0 0
        %2902 = vmatmul.mubr.bf16.gmra.mxu0 %v2712
        %v2903 = vpop.f32.mrf.mxu0
        %v2904 = vadd.f32 0.0, %v2903
        %v2905 = vpop.f32.mrf.mxu0
        %v2906 = vpop.f32.mrf.mxu0
        %v2907 = vadd.f32 0.0, %v2906
        %v2908 = vpop.f32.mrf.mxu0
        %2909 = vmatprep.mubr.bf16.mxu0 0
        %2910 = vmatmul.mubr.bf16.gmra.mxu0 %v2713
        %v2911 = vpop.f32.mrf.mxu0
        %v2912 = vadd.f32 0.0, %v2911
        %v2913 = vpop.f32.mrf.mxu0
        %v2914 = vpop.f32.mrf.mxu0
        %v2915 = vadd.f32 0.0, %v2914
        %v2916 = vpop.f32.mrf.mxu0
        %2917 = vmatprep.mubr.bf16.mxu0 0
        %2918 = vmatmul.mubr.bf16.gmra.mxu0 %v2714
        %v2919 = vpop.f32.mrf.mxu0
        %v2920 = vadd.f32 0.0, %v2919
        %v2921 = vpop.f32.mrf.mxu0
        %v2922 = vpop.f32.mrf.mxu0
        %v2923 = vadd.f32 0.0, %v2922
        %v2924 = vpop.f32.mrf.mxu0
        %2925 = vmatprep.mubr.bf16.mxu0 0
        %2926 = vmatmul.mubr.bf16.gmra.mxu0 %v2715
        %v2927 = vpop.f32.mrf.mxu0
        %v2928 = vadd.f32 0.0, %v2927
        %v2929 = vpop.f32.mrf.mxu0
        %v2930 = vpop.f32.mrf.mxu0
        %v2931 = vadd.f32 0.0, %v2930
        %v2932 = vpop.f32.mrf.mxu0
        %2933 = vmatprep.mubr.bf16.mxu0 0
        %2934 = vmatmul.mubr.bf16.gmra.mxu0 %v2716
        %v2935 = vpop.f32.mrf.mxu0
        %v2936 = vadd.f32 0.0, %v2935
        %v2937 = vpop.f32.mrf.mxu0
        %v2938 = vpop.f32.mrf.mxu0
        %v2939 = vadd.f32 0.0, %v2938
        %v2940 = vpop.f32.mrf.mxu0
        %2941 = vdwg.mxu0
        %v2942 = vadd.f32 %v2419, %v2816
        %v2943 = vadd.f32 %v2420, %v2819
        %v2944 = vadd.f32 %v2421, %v2824
        %v2945 = vadd.f32 %v2422, %v2827
        %v2946 = vadd.f32 %v2423, %v2832
        %v2947 = vadd.f32 %v2424, %v2835
        %v2948 = vadd.f32 %v2425, %v2840
        %v2949 = vadd.f32 %v2426, %v2843
        %v2950 = vadd.f32 %v2427, %v2848
        %v2951 = vadd.f32 %v2428, %v2851
        %v2952 = vadd.f32 %v2429, %v2856
        %v2953 = vadd.f32 %v2430, %v2859
        %v2954 = vadd.f32 %v2431, %v2864
        %v2955 = vadd.f32 %v2432, %v2867
        %v2956 = vadd.f32 %v2433, %v2872
        %v2957 = vadd.f32 %v2434, %v2875
        %v2958 = vadd.f32 %v2435, %v2880
        %v2959 = vadd.f32 %v2436, %v2883
        %v2960 = vadd.f32 %v2437, %v2888
        %v2961 = vadd.f32 %v2438, %v2891
        %v2962 = vadd.f32 %v2439, %v2896
        %v2963 = vadd.f32 %v2440, %v2899
        %v2964 = vadd.f32 %v2441, %v2904
        %v2965 = vadd.f32 %v2442, %v2907
        %v2966 = vadd.f32 %v2443, %v2912
        %v2967 = vadd.f32 %v2444, %v2915
        %v2968 = vadd.f32 %v2445, %v2920
        %v2969 = vadd.f32 %v2446, %v2923
        %v2970 = vadd.f32 %v2447, %v2928
        %v2971 = vadd.f32 %v2448, %v2931
        %v2972 = vadd.f32 %v2449, %v2936
        %v2973 = vadd.f32 %v2450, %v2939
        %s2974 = scalar_lea.vmem %s1, 320
        %v2975 = vld [vmem:[%s2974] sm:$0xf]
        %v2976 = vld [vmem:[%s2974 + $0x4] sm:$0xf]
        %v2977 = vld [vmem:[%s2974 + $0x8] sm:$0xf]
        %v2978 = vld [vmem:[%s2974 + $0xc] sm:$0xf]
        %v2979 = vld [vmem:[%s2974 + $0x10] sm:$0xf]
        %v2980 = vld [vmem:[%s2974 + $0x14] sm:$0xf]
        %v2981 = vld [vmem:[%s2974 + $0x18] sm:$0xf]
        %v2982 = vld [vmem:[%s2974 + $0x1c] sm:$0xf]
        %v2983 = vld [vmem:[%s2974 + $0x20] sm:$0xf]
        %v2984 = vld [vmem:[%s2974 + $0x24] sm:$0xf]
        %v2985 = vld [vmem:[%s2974 + $0x28] sm:$0xf]
        %v2986 = vld [vmem:[%s2974 + $0x2c] sm:$0xf]
        %v2987 = vld [vmem:[%s2974 + $0x30] sm:$0xf]
        %v2988 = vld [vmem:[%s2974 + $0x34] sm:$0xf]
        %v2989 = vld [vmem:[%s2974 + $0x38] sm:$0xf]
        %v2990 = vld [vmem:[%s2974 + $0x3c] sm:$0xf]
        %v2991 = vunpack.c.l.b16 %v2641
        %v2992 = vunpack.c.l.b16 %v2644
        %v2993 = vpack.c.b16 %v2992, %v2991
        %v3011 = vunpack.c.l.b16 %v2975
        %v3012 = vunpack.c.l.b16 %v2976
        %v3013 = vunpack.c.l.b16 %v2977
        %v3014 = vunpack.c.l.b16 %v2978
        %v3015 = vunpack.c.l.b16 %v2979
        %v3016 = vunpack.c.l.b16 %v2980
        %v3017 = vunpack.c.l.b16 %v2981
        %v3018 = vunpack.c.l.b16 %v2982
        %v3019 = vunpack.c.l.b16 %v2983
        %v3020 = vunpack.c.l.b16 %v2984
        %v3021 = vunpack.c.l.b16 %v2985
        %v3022 = vunpack.c.l.b16 %v2986
        %v3023 = vunpack.c.l.b16 %v2987
        %v3024 = vunpack.c.l.b16 %v2988
        %v3025 = vunpack.c.l.b16 %v2989
        %v3026 = vunpack.c.l.b16 %v2990
        %v3027 = vpack.c.b16 %v3012, %v3011
        %v3028 = vpack.c.b16 %v3014, %v3013
        %v3029 = vpack.c.b16 %v3016, %v3015
        %v3030 = vpack.c.b16 %v3018, %v3017
        %v3031 = vpack.c.b16 %v3020, %v3019
        %v3032 = vpack.c.b16 %v3022, %v3021
        %v3033 = vpack.c.b16 %v3024, %v3023
        %v3034 = vpack.c.b16 %v3026, %v3025
        %3043 = vmatprep.subr.bf16.mxu0 0
        %3044 = vmatpush1.bf16.msra.mxu0 %v3034
        %3045 = vmatprep.subr.bf16.mxu0 0
        %3046 = vmatpush1.bf16.msra.mxu0 %v3033
        %3047 = vmatprep.subr.bf16.mxu0 0
        %3048 = vmatpush1.bf16.msra.mxu0 %v3032
        %3049 = vmatprep.subr.bf16.mxu0 0
        %3050 = vmatpush1.bf16.msra.mxu0 %v3031
        %3051 = vmatprep.subr.bf16.mxu0 0
        %3052 = vmatpush1.bf16.msra.mxu0 %v3030
        %3053 = vmatprep.subr.bf16.mxu0 0
        %3054 = vmatpush1.bf16.msra.mxu0 %v3029
        %3055 = vmatprep.subr.bf16.mxu0 0
        %3056 = vmatpush1.bf16.msra.mxu0 %v3028
        %3057 = vmatprep.subr.bf16.mxu0 0
        %3058 = vmatpush1.bf16.msra.mxu0 %v3027
        %3059 = vmatprep.subr.bf16.mxu0 0
        %3060 = vmatpush2.bf16.msra.mxu0 0
        %3061 = vmatprep.subr.bf16.mxu0 0
        %3062 = vmatpush2.bf16.msra.mxu0 0
        %3063 = vmatprep.subr.bf16.mxu0 0
        %3064 = vmatpush2.bf16.msra.mxu0 0
        %3065 = vmatprep.subr.bf16.mxu0 0
        %3066 = vmatpush2.bf16.msra.mxu0 0
        %3067 = vmatprep.subr.bf16.mxu0 0
        %3068 = vmatpush2.bf16.msra.mxu0 0
        %3069 = vmatprep.subr.bf16.mxu0 0
        %3070 = vmatpush2.bf16.msra.mxu0 0
        %3071 = vmatprep.subr.bf16.mxu0 0
        %3072 = vmatpush2.bf16.msra.mxu0 0
        %3073 = vmatprep.subr.bf16.mxu0 0
        %3074 = vmatpush2.bf16.msra.mxu0 0
        %3075 = vmatprep.mubr.bf16.mxu0 0
        %3076 = vmatmul.mubr.bf16.gmra.mxu0 %v2702
        %v3077 = vpop.f32.mrf.mxu0
        %v3078 = vadd.f32 0.0, %v3077
        %v3079 = vpop.f32.mrf.mxu0
        %v3080 = vpop.f32.mrf.mxu0
        %v3081 = vadd.f32 0.0, %v3080
        %v3082 = vpop.f32.mrf.mxu0
        %3083 = vmatprep.mubr.bf16.mxu0 0
        %3084 = vmatmul.mubr.bf16.gmra.mxu0 %v2703
        %v3085 = vpop.f32.mrf.mxu0
        %v3086 = vadd.f32 0.0, %v3085
        %v3087 = vpop.f32.mrf.mxu0
        %v3088 = vpop.f32.mrf.mxu0
        %v3089 = vadd.f32 0.0, %v3088
        %v3090 = vpop.f32.mrf.mxu0
        %3091 = vmatprep.mubr.bf16.mxu0 0
        %3092 = vmatmul.mubr.bf16.gmra.mxu0 %v2704
        %v3093 = vpop.f32.mrf.mxu0
        %v3094 = vadd.f32 0.0, %v3093
        %v3095 = vpop.f32.mrf.mxu0
        %v3096 = vpop.f32.mrf.mxu0
        %v3097 = vadd.f32 0.0, %v3096
        %v3098 = vpop.f32.mrf.mxu0
        %3099 = vmatprep.mubr.bf16.mxu0 0
        %3100 = vmatmul.mubr.bf16.gmra.mxu0 %v2705
        %v3101 = vpop.f32.mrf.mxu0
        %v3102 = vadd.f32 0.0, %v3101
        %v3103 = vpop.f32.mrf.mxu0
        %v3104 = vpop.f32.mrf.mxu0
        %v3105 = vadd.f32 0.0, %v3104
        %v3106 = vpop.f32.mrf.mxu0
        %3107 = vmatprep.mubr.bf16.mxu0 0
        %3108 = vmatmul.mubr.bf16.gmra.mxu0 %v2706
        %v3109 = vpop.f32.mrf.mxu0
        %v3110 = vadd.f32 0.0, %v3109
        %v3111 = vpop.f32.mrf.mxu0
        %v3112 = vpop.f32.mrf.mxu0
        %v3113 = vadd.f32 0.0, %v3112
        %v3114 = vpop.f32.mrf.mxu0
        %3115 = vmatprep.mubr.bf16.mxu0 0
        %3116 = vmatmul.mubr.bf16.gmra.mxu0 %v2707
        %v3117 = vpop.f32.mrf.mxu0
        %v3118 = vadd.f32 0.0, %v3117
        %v3119 = vpop.f32.mrf.mxu0
        %v3120 = vpop.f32.mrf.mxu0
        %v3121 = vadd.f32 0.0, %v3120
        %v3122 = vpop.f32.mrf.mxu0
        %3123 = vmatprep.mubr.bf16.mxu0 0
        %3124 = vmatmul.mubr.bf16.gmra.mxu0 %v2708
        %v3125 = vpop.f32.mrf.mxu0
        %v3126 = vadd.f32 0.0, %v3125
        %v3127 = vpop.f32.mrf.mxu0
        %v3128 = vpop.f32.mrf.mxu0
        %v3129 = vadd.f32 0.0, %v3128
        %v3130 = vpop.f32.mrf.mxu0
        %3131 = vmatprep.mubr.bf16.mxu0 0
        %3132 = vmatmul.mubr.bf16.gmra.mxu0 %v2709
        %v3133 = vpop.f32.mrf.mxu0
        %v3134 = vadd.f32 0.0, %v3133
        %v3135 = vpop.f32.mrf.mxu0
        %v3136 = vpop.f32.mrf.mxu0
        %v3137 = vadd.f32 0.0, %v3136
        %v3138 = vpop.f32.mrf.mxu0
        %3139 = vmatprep.mubr.bf16.mxu0 0
        %3140 = vmatmul.mubr.bf16.gmra.mxu0 %v2710
        %v3141 = vpop.f32.mrf.mxu0
        %v3142 = vadd.f32 0.0, %v3141
        %v3143 = vpop.f32.mrf.mxu0
        %v3144 = vpop.f32.mrf.mxu0
        %v3145 = vadd.f32 0.0, %v3144
        %v3146 = vpop.f32.mrf.mxu0
        %3147 = vmatprep.mubr.bf16.mxu0 0
        %3148 = vmatmul.mubr.bf16.gmra.mxu0 %v2711
        %v3149 = vpop.f32.mrf.mxu0
        %v3150 = vadd.f32 0.0, %v3149
        %v3151 = vpop.f32.mrf.mxu0
        %v3152 = vpop.f32.mrf.mxu0
        %v3153 = vadd.f32 0.0, %v3152
        %v3154 = vpop.f32.mrf.mxu0
        %3155 = vmatprep.mubr.bf16.mxu0 0
        %3156 = vmatmul.mubr.bf16.gmra.mxu0 %v2712
        %v3157 = vpop.f32.mrf.mxu0
        %v3158 = vadd.f32 0.0, %v3157
        %v3159 = vpop.f32.mrf.mxu0
        %v3160 = vpop.f32.mrf.mxu0
        %v3161 = vadd.f32 0.0, %v3160
        %v3162 = vpop.f32.mrf.mxu0
        %3163 = vmatprep.mubr.bf16.mxu0 0
        %3164 = vmatmul.mubr.bf16.gmra.mxu0 %v2713
        %v3165 = vpop.f32.mrf.mxu0
        %v3166 = vadd.f32 0.0, %v3165
        %v3167 = vpop.f32.mrf.mxu0
        %v3168 = vpop.f32.mrf.mxu0
        %v3169 = vadd.f32 0.0, %v3168
        %v3170 = vpop.f32.mrf.mxu0
        %3171 = vmatprep.mubr.bf16.mxu0 0
        %3172 = vmatmul.mubr.bf16.gmra.mxu0 %v2714
        %v3173 = vpop.f32.mrf.mxu0
        %v3174 = vadd.f32 0.0, %v3173
        %v3175 = vpop.f32.mrf.mxu0
        %v3176 = vpop.f32.mrf.mxu0
        %v3177 = vadd.f32 0.0, %v3176
        %v3178 = vpop.f32.mrf.mxu0
        %3179 = vmatprep.mubr.bf16.mxu0 0
        %3180 = vmatmul.mubr.bf16.gmra.mxu0 %v2715
        %v3181 = vpop.f32.mrf.mxu0
        %v3182 = vadd.f32 0.0, %v3181
        %v3183 = vpop.f32.mrf.mxu0
        %v3184 = vpop.f32.mrf.mxu0
        %v3185 = vadd.f32 0.0, %v3184
        %v3186 = vpop.f32.mrf.mxu0
        %3187 = vmatprep.mubr.bf16.mxu0 0
        %3188 = vmatmul.mubr.bf16.gmra.mxu0 %v2716
        %v3189 = vpop.f32.mrf.mxu0
        %v3190 = vadd.f32 0.0, %v3189
        %v3191 = vpop.f32.mrf.mxu0
        %v3192 = vpop.f32.mrf.mxu0
        %v3193 = vadd.f32 0.0, %v3192
        %v3194 = vpop.f32.mrf.mxu0
        %3195 = vmatprep.mubr.bf16.mxu0 0
        %3196 = vmatmul.mubr.bf16.gmra.mxu0 %v2993
        %v3197 = vpop.f32.mrf.mxu0
        %v3198 = vadd.f32 0.0, %v3197
        %v3199 = vpop.f32.mrf.mxu0
        %v3200 = vpop.f32.mrf.mxu0
        %v3201 = vadd.f32 0.0, %v3200
        %v3202 = vpop.f32.mrf.mxu0
        %3203 = vdwg.mxu0
        %v3204 = vadd.f32 %v2942, %v3078
        %v3205 = vadd.f32 %v2943, %v3081
        %v3206 = vadd.f32 %v2944, %v3086
        %v3207 = vadd.f32 %v2945, %v3089
        %v3208 = vadd.f32 %v2946, %v3094
        %v3209 = vadd.f32 %v2947, %v3097
        %v3210 = vadd.f32 %v2948, %v3102
        %v3211 = vadd.f32 %v2949, %v3105
        %v3212 = vadd.f32 %v2950, %v3110
        %v3213 = vadd.f32 %v2951, %v3113
        %v3214 = vadd.f32 %v2952, %v3118
        %v3215 = vadd.f32 %v2953, %v3121
        %v3216 = vadd.f32 %v2954, %v3126
        %v3217 = vadd.f32 %v2955, %v3129
        %v3218 = vadd.f32 %v2956, %v3134
        %v3219 = vadd.f32 %v2957, %v3137
        %v3220 = vadd.f32 %v2958, %v3142
        %v3221 = vadd.f32 %v2959, %v3145
        %v3222 = vadd.f32 %v2960, %v3150
        %v3223 = vadd.f32 %v2961, %v3153
        %v3224 = vadd.f32 %v2962, %v3158
        %v3225 = vadd.f32 %v2963, %v3161
        %v3226 = vadd.f32 %v2964, %v3166
        %v3227 = vadd.f32 %v2965, %v3169
        %v3228 = vadd.f32 %v2966, %v3174
        %v3229 = vadd.f32 %v2967, %v3177
        %v3230 = vadd.f32 %v2968, %v3182
        %v3231 = vadd.f32 %v2969, %v3185
        %v3232 = vadd.f32 %v2970, %v3190
        %v3233 = vadd.f32 %v2971, %v3193
        %v3234 = vadd.f32 %v2972, %v3198
        %v3235 = vadd.f32 %v2973, %v3201
        %s3236 = scalar_lea.vmem %s1, 512
        %v3237 = vld [vmem:[%s3236] sm:$0xf]
        %v3238 = vld [vmem:[%s3236 + $0x4] sm:$0xf]
        %v3239 = vld [vmem:[%s3236 + $0x8] sm:$0xf]
        %v3240 = vld [vmem:[%s3236 + $0xc] sm:$0xf]
        %v3241 = vld [vmem:[%s3236 + $0x10] sm:$0xf]
        %v3242 = vld [vmem:[%s3236 + $0x14] sm:$0xf]
        %v3243 = vld [vmem:[%s3236 + $0x18] sm:$0xf]
        %v3244 = vld [vmem:[%s3236 + $0x1c] sm:$0xf]
        %v3245 = vld [vmem:[%s3236 + $0x20] sm:$0xf]
        %v3246 = vld [vmem:[%s3236 + $0x24] sm:$0xf]
        %v3247 = vld [vmem:[%s3236 + $0x28] sm:$0xf]
        %v3248 = vld [vmem:[%s3236 + $0x2c] sm:$0xf]
        %v3249 = vld [vmem:[%s3236 + $0x30] sm:$0xf]
        %v3250 = vld [vmem:[%s3236 + $0x34] sm:$0xf]
        %v3251 = vld [vmem:[%s3236 + $0x38] sm:$0xf]
        %v3252 = vld [vmem:[%s3236 + $0x3c] sm:$0xf]
        %v3253 = vunpack.c.l.b16 %v2648
        %v3254 = vunpack.c.l.b16 %v2651
        %v3255 = vpack.c.b16 %v3254, %v3253
        %v3273 = vunpack.c.l.b16 %v3237
        %v3274 = vunpack.c.l.b16 %v3238
        %v3275 = vunpack.c.l.b16 %v3239
        %v3276 = vunpack.c.l.b16 %v3240
        %v3277 = vunpack.c.l.b16 %v3241
        %v3278 = vunpack.c.l.b16 %v3242
        %v3279 = vunpack.c.l.b16 %v3243
        %v3280 = vunpack.c.l.b16 %v3244
        %v3281 = vunpack.c.l.b16 %v3245
        %v3282 = vunpack.c.l.b16 %v3246
        %v3283 = vunpack.c.l.b16 %v3247
        %v3284 = vunpack.c.l.b16 %v3248
        %v3285 = vunpack.c.l.b16 %v3249
        %v3286 = vunpack.c.l.b16 %v3250
        %v3287 = vunpack.c.l.b16 %v3251
        %v3288 = vunpack.c.l.b16 %v3252
        %v3289 = vpack.c.b16 %v3274, %v3273
        %v3290 = vpack.c.b16 %v3276, %v3275
        %v3291 = vpack.c.b16 %v3278, %v3277
        %v3292 = vpack.c.b16 %v3280, %v3279
        %v3293 = vpack.c.b16 %v3282, %v3281
        %v3294 = vpack.c.b16 %v3284, %v3283
        %v3295 = vpack.c.b16 %v3286, %v3285
        %v3296 = vpack.c.b16 %v3288, %v3287
        %3305 = vmatprep.subr.bf16.mxu0 0
        %3306 = vmatpush1.bf16.msra.mxu0 %v3296
        %3307 = vmatprep.subr.bf16.mxu0 0
        %3308 = vmatpush1.bf16.msra.mxu0 %v3295
        %3309 = vmatprep.subr.bf16.mxu0 0
        %3310 = vmatpush1.bf16.msra.mxu0 %v3294
        %3311 = vmatprep.subr.bf16.mxu0 0
        %3312 = vmatpush1.bf16.msra.mxu0 %v3293
        %3313 = vmatprep.subr.bf16.mxu0 0
        %3314 = vmatpush1.bf16.msra.mxu0 %v3292
        %3315 = vmatprep.subr.bf16.mxu0 0
        %3316 = vmatpush1.bf16.msra.mxu0 %v3291
        %3317 = vmatprep.subr.bf16.mxu0 0
        %3318 = vmatpush1.bf16.msra.mxu0 %v3290
        %3319 = vmatprep.subr.bf16.mxu0 0
        %3320 = vmatpush1.bf16.msra.mxu0 %v3289
        %3321 = vmatprep.subr.bf16.mxu0 0
        %3322 = vmatpush2.bf16.msra.mxu0 0
        %3323 = vmatprep.subr.bf16.mxu0 0
        %3324 = vmatpush2.bf16.msra.mxu0 0
        %3325 = vmatprep.subr.bf16.mxu0 0
        %3326 = vmatpush2.bf16.msra.mxu0 0
        %3327 = vmatprep.subr.bf16.mxu0 0
        %3328 = vmatpush2.bf16.msra.mxu0 0
        %3329 = vmatprep.subr.bf16.mxu0 0
        %3330 = vmatpush2.bf16.msra.mxu0 0
        %3331 = vmatprep.subr.bf16.mxu0 0
        %3332 = vmatpush2.bf16.msra.mxu0 0
        %3333 = vmatprep.subr.bf16.mxu0 0
        %3334 = vmatpush2.bf16.msra.mxu0 0
        %3335 = vmatprep.subr.bf16.mxu0 0
        %3336 = vmatpush2.bf16.msra.mxu0 0
        %3337 = vmatprep.mubr.bf16.mxu0 0
        %3338 = vmatmul.mubr.bf16.gmra.mxu0 %v2703
        %v3339 = vpop.f32.mrf.mxu0
        %v3340 = vadd.f32 0.0, %v3339
        %v3341 = vpop.f32.mrf.mxu0
        %v3342 = vpop.f32.mrf.mxu0
        %v3343 = vadd.f32 0.0, %v3342
        %v3344 = vpop.f32.mrf.mxu0
        %3345 = vmatprep.mubr.bf16.mxu0 0
        %3346 = vmatmul.mubr.bf16.gmra.mxu0 %v2704
        %v3347 = vpop.f32.mrf.mxu0
        %v3348 = vadd.f32 0.0, %v3347
        %v3349 = vpop.f32.mrf.mxu0
        %v3350 = vpop.f32.mrf.mxu0
        %v3351 = vadd.f32 0.0, %v3350
        %v3352 = vpop.f32.mrf.mxu0
        %3353 = vmatprep.mubr.bf16.mxu0 0
        %3354 = vmatmul.mubr.bf16.gmra.mxu0 %v2705
        %v3355 = vpop.f32.mrf.mxu0
        %v3356 = vadd.f32 0.0, %v3355
        %v3357 = vpop.f32.mrf.mxu0
        %v3358 = vpop.f32.mrf.mxu0
        %v3359 = vadd.f32 0.0, %v3358
        %v3360 = vpop.f32.mrf.mxu0
        %3361 = vmatprep.mubr.bf16.mxu0 0
        %3362 = vmatmul.mubr.bf16.gmra.mxu0 %v2706
        %v3363 = vpop.f32.mrf.mxu0
        %v3364 = vadd.f32 0.0, %v3363
        %v3365 = vpop.f32.mrf.mxu0
        %v3366 = vpop.f32.mrf.mxu0
        %v3367 = vadd.f32 0.0, %v3366
        %v3368 = vpop.f32.mrf.mxu0
        %3369 = vmatprep.mubr.bf16.mxu0 0
        %3370 = vmatmul.mubr.bf16.gmra.mxu0 %v2707
        %v3371 = vpop.f32.mrf.mxu0
        %v3372 = vadd.f32 0.0, %v3371
        %v3373 = vpop.f32.mrf.mxu0
        %v3374 = vpop.f32.mrf.mxu0
        %v3375 = vadd.f32 0.0, %v3374
        %v3376 = vpop.f32.mrf.mxu0
        %3377 = vmatprep.mubr.bf16.mxu0 0
        %3378 = vmatmul.mubr.bf16.gmra.mxu0 %v2708
        %v3379 = vpop.f32.mrf.mxu0
        %v3380 = vadd.f32 0.0, %v3379
        %v3381 = vpop.f32.mrf.mxu0
        %v3382 = vpop.f32.mrf.mxu0
        %v3383 = vadd.f32 0.0, %v3382
        %v3384 = vpop.f32.mrf.mxu0
        %3385 = vmatprep.mubr.bf16.mxu0 0
        %3386 = vmatmul.mubr.bf16.gmra.mxu0 %v2709
        %v3387 = vpop.f32.mrf.mxu0
        %v3388 = vadd.f32 0.0, %v3387
        %v3389 = vpop.f32.mrf.mxu0
        %v3390 = vpop.f32.mrf.mxu0
        %v3391 = vadd.f32 0.0, %v3390
        %v3392 = vpop.f32.mrf.mxu0
        %3393 = vmatprep.mubr.bf16.mxu0 0
        %3394 = vmatmul.mubr.bf16.gmra.mxu0 %v2710
        %v3395 = vpop.f32.mrf.mxu0
        %v3396 = vadd.f32 0.0, %v3395
        %v3397 = vpop.f32.mrf.mxu0
        %v3398 = vpop.f32.mrf.mxu0
        %v3399 = vadd.f32 0.0, %v3398
        %v3400 = vpop.f32.mrf.mxu0
        %3401 = vmatprep.mubr.bf16.mxu0 0
        %3402 = vmatmul.mubr.bf16.gmra.mxu0 %v2711
        %v3403 = vpop.f32.mrf.mxu0
        %v3404 = vadd.f32 0.0, %v3403
        %v3405 = vpop.f32.mrf.mxu0
        %v3406 = vpop.f32.mrf.mxu0
        %v3407 = vadd.f32 0.0, %v3406
        %v3408 = vpop.f32.mrf.mxu0
        %3409 = vmatprep.mubr.bf16.mxu0 0
        %3410 = vmatmul.mubr.bf16.gmra.mxu0 %v2712
        %v3411 = vpop.f32.mrf.mxu0
        %v3412 = vadd.f32 0.0, %v3411
        %v3413 = vpop.f32.mrf.mxu0
        %v3414 = vpop.f32.mrf.mxu0
        %v3415 = vadd.f32 0.0, %v3414
        %v3416 = vpop.f32.mrf.mxu0
        %3417 = vmatprep.mubr.bf16.mxu0 0
        %3418 = vmatmul.mubr.bf16.gmra.mxu0 %v2713
        %v3419 = vpop.f32.mrf.mxu0
        %v3420 = vadd.f32 0.0, %v3419
        %v3421 = vpop.f32.mrf.mxu0
        %v3422 = vpop.f32.mrf.mxu0
        %v3423 = vadd.f32 0.0, %v3422
        %v3424 = vpop.f32.mrf.mxu0
        %3425 = vmatprep.mubr.bf16.mxu0 0
        %3426 = vmatmul.mubr.bf16.gmra.mxu0 %v2714
        %v3427 = vpop.f32.mrf.mxu0
        %v3428 = vadd.f32 0.0, %v3427
        %v3429 = vpop.f32.mrf.mxu0
        %v3430 = vpop.f32.mrf.mxu0
        %v3431 = vadd.f32 0.0, %v3430
        %v3432 = vpop.f32.mrf.mxu0
        %3433 = vmatprep.mubr.bf16.mxu0 0
        %3434 = vmatmul.mubr.bf16.gmra.mxu0 %v2715
        %v3435 = vpop.f32.mrf.mxu0
        %v3436 = vadd.f32 0.0, %v3435
        %v3437 = vpop.f32.mrf.mxu0
        %v3438 = vpop.f32.mrf.mxu0
        %v3439 = vadd.f32 0.0, %v3438
        %v3440 = vpop.f32.mrf.mxu0
        %3441 = vmatprep.mubr.bf16.mxu0 0
        %3442 = vmatmul.mubr.bf16.gmra.mxu0 %v2716
        %v3443 = vpop.f32.mrf.mxu0
        %v3444 = vadd.f32 0.0, %v3443
        %v3445 = vpop.f32.mrf.mxu0
        %v3446 = vpop.f32.mrf.mxu0
        %v3447 = vadd.f32 0.0, %v3446
        %v3448 = vpop.f32.mrf.mxu0
        %3449 = vmatprep.mubr.bf16.mxu0 0
        %3450 = vmatmul.mubr.bf16.gmra.mxu0 %v2993
        %v3451 = vpop.f32.mrf.mxu0
        %v3452 = vadd.f32 0.0, %v3451
        %v3453 = vpop.f32.mrf.mxu0
        %v3454 = vpop.f32.mrf.mxu0
        %v3455 = vadd.f32 0.0, %v3454
        %v3456 = vpop.f32.mrf.mxu0
        %3457 = vmatprep.mubr.bf16.mxu0 0
        %3458 = vmatmul.mubr.bf16.gmra.mxu0 %v3255
        %v3459 = vpop.f32.mrf.mxu0
        %v3460 = vadd.f32 0.0, %v3459
        %v3461 = vpop.f32.mrf.mxu0
        %v3462 = vpop.f32.mrf.mxu0
        %v3463 = vadd.f32 0.0, %v3462
        %v3464 = vpop.f32.mrf.mxu0
        %3465 = vdwg.mxu0
        %v3466 = vadd.f32 %v3204, %v3340
        %v3467 = vadd.f32 %v3205, %v3343
        %v3468 = vadd.f32 %v3206, %v3348
        %v3469 = vadd.f32 %v3207, %v3351
        %v3470 = vadd.f32 %v3208, %v3356
        %v3471 = vadd.f32 %v3209, %v3359
        %v3472 = vadd.f32 %v3210, %v3364
        %v3473 = vadd.f32 %v3211, %v3367
        %v3474 = vadd.f32 %v3212, %v3372
        %v3475 = vadd.f32 %v3213, %v3375
        %v3476 = vadd.f32 %v3214, %v3380
        %v3477 = vadd.f32 %v3215, %v3383
        %v3478 = vadd.f32 %v3216, %v3388
        %v3479 = vadd.f32 %v3217, %v3391
        %v3480 = vadd.f32 %v3218, %v3396
        %v3481 = vadd.f32 %v3219, %v3399
        %v3482 = vadd.f32 %v3220, %v3404
        %v3483 = vadd.f32 %v3221, %v3407
        %v3484 = vadd.f32 %v3222, %v3412
        %v3485 = vadd.f32 %v3223, %v3415
        %v3486 = vadd.f32 %v3224, %v3420
        %v3487 = vadd.f32 %v3225, %v3423
        %v3488 = vadd.f32 %v3226, %v3428
        %v3489 = vadd.f32 %v3227, %v3431
        %v3490 = vadd.f32 %v3228, %v3436
        %v3491 = vadd.f32 %v3229, %v3439
        %v3492 = vadd.f32 %v3230, %v3444
        %v3493 = vadd.f32 %v3231, %v3447
        %v3494 = vadd.f32 %v3232, %v3452
        %v3495 = vadd.f32 %v3233, %v3455
        %v3496 = vadd.f32 %v3234, %v3460
        %v3497 = vadd.f32 %v3235, %v3463
        %3498 = vst [vmem:[%s182] sm:$0xff] %v3466
        %3499 = vst [vmem:[%s182 + $0x8] sm:$0xff] %v3467
        %3500 = vst [vmem:[%s182 + $0x10] sm:$0xff] %v3468
        %3501 = vst [vmem:[%s182 + $0x18] sm:$0xff] %v3469
        %3502 = vst [vmem:[%s182 + $0x20] sm:$0xff] %v3470
        %3503 = vst [vmem:[%s182 + $0x28] sm:$0xff] %v3471
        %3504 = vst [vmem:[%s182 + $0x30] sm:$0xff] %v3472
        %3505 = vst [vmem:[%s182 + $0x38] sm:$0xff] %v3473
        %3506 = vst [vmem:[%s182 + $0x40] sm:$0xff] %v3474
        %3507 = vst [vmem:[%s182 + $0x48] sm:$0xff] %v3475
        %3508 = vst [vmem:[%s182 + $0x50] sm:$0xff] %v3476
        %3509 = vst [vmem:[%s182 + $0x58] sm:$0xff] %v3477
        %3510 = vst [vmem:[%s182 + $0x60] sm:$0xff] %v3478
        %3511 = vst [vmem:[%s182 + $0x68] sm:$0xff] %v3479
        %3512 = vst [vmem:[%s182 + $0x70] sm:$0xff] %v3480
        %3513 = vst [vmem:[%s182 + $0x78] sm:$0xff] %v3481
        %3514 = vst [vmem:[%s182 + $0x80] sm:$0xff] %v3482
        %3515 = vst [vmem:[%s182 + $0x88] sm:$0xff] %v3483
        %3516 = vst [vmem:[%s182 + $0x90] sm:$0xff] %v3484
        %3517 = vst [vmem:[%s182 + $0x98] sm:$0xff] %v3485
        %3518 = vst [vmem:[%s182 + $0xa0] sm:$0xff] %v3486
        %3519 = vst [vmem:[%s182 + $0xa8] sm:$0xff] %v3487
        %3520 = vst [vmem:[%s182 + $0xb0] sm:$0xff] %v3488
        %3521 = vst [vmem:[%s182 + $0xb8] sm:$0xff] %v3489
        %3522 = vst [vmem:[%s182 + $0xc0] sm:$0xff] %v3490
        %3523 = vst [vmem:[%s182 + $0xc8] sm:$0xff] %v3491
        %3524 = vst [vmem:[%s182 + $0xd0] sm:$0xff] %v3492
        %3525 = vst [vmem:[%s182 + $0xd8] sm:$0xff] %v3493
        %3526 = vst [vmem:[%s182 + $0xe0] sm:$0xff] %v3494
        %3527 = vst [vmem:[%s182 + $0xe8] sm:$0xff] %v3495
        %3528 = vst [vmem:[%s182 + $0xf0] sm:$0xff] %v3496
        %3529 = vst [vmem:[%s182 + $0xf8] sm:$0xff] %v3497
        %s3530 = sand.u32 %s109, 1
        %s3531 = scalar_lea.sflag [#allocation3], %s3530
        %s3532 = sand.u32 %s109, 1
        %s3533 = smul.addr %s3532, 256
        %s3534 = scalar_lea.vmem [#allocation2], %s3533
        // Predicated region
        $region33: #{fam_forward.1} parent=31 // pred_check
          %p3535 = pneg %p119
        $region34: #{fam_forward.1} parent=31 // pred_check_branch
          %3537 = sbr.rel (%p3535) target = $region36
        $region35: #{fam_forward.1} parent=31 // pred_region
          %s3538 = smul.u32 32, %s22
          %s3540 = ssub.s32 4096, 4096
          %3541 = vsyncadd %s3531, %s3540
          %s3542 = smul.addr %s21, 32
          %s3543 = sadd.s32 %s3538, %s3542
          %s3544 = smul.addr %s3543, 128
          %s3545 = scalar_lea.hbm %s3, %s3544
          %s3546 = sshll.u32 %s3534, 4
          %s3547 = int_to_ptr.vmem [resolvable:$true] %s3546
          %3552 = dma.vmem_to_hbm [thread:$0]  %s3547, 4096, %s3545, %s3531, 128, 128, 8
        $region36: #{fam_forward.1} parent=31 // pred_fallthru
          _
      $region32: #{fam_forward.1} parent=5 // pred_fallthru
        _
      %p3553 = scmp.le.s32.totalorder 2, %s12
      // Predicated region
      $region37: #{fam_forward.1} parent=5 // pred_check
        %p3554 = pneg %p3553
      $region38: #{fam_forward.1} parent=5 // pred_check_branch
        %3556 = sbr.rel (%p3554) target = $region40
      $region39: #{fam_forward.1} parent=5 // pred_region
        %s3557 = ssub.s32 %s12, 2
        // Predicated region
        $region41: #{fam_forward.1} parent=39 // pred_check
          %p3558 = pneg %p125
        $region42: #{fam_forward.1} parent=39 // pred_check_branch
          %3560 = sbr.rel (%p3558) target = $region44
        $region43: #{fam_forward.1} parent=39 // pred_region
          %s3561 = sand.u32 %s110, 1
          %s3562 = scalar_lea.sflag [#allocation3], %s3561
          %s3563 = sand.u32 %s110, 1
          %s3564 = smul.addr %s3563, 256
          %s3565 = scalar_lea.vmem [#allocation2], %s3564
          %3566 = dma.done %s3562, 4096
        $region44: #{fam_forward.1} parent=39 // pred_fallthru
          _
      $region40: #{fam_forward.1} parent=5 // pred_fallthru
        _
    $region6: #{fam_forward.1} parent=1 // loop_footer
      %s16 = sadd.s32 1, %s12
    $region7: #{fam_forward.1} parent=1 // loop_footer_branch
      %11 = sbr.rel target = $region3
    $region8: #{fam_forward.1} parent=1 // loop_exit
      _
    %3567 = vsyncpa [#allocation3], 1
    %s3568 = scalar_lea.sflag [#allocation3], 1
    %3569 = vsyncpa %s3568, 1

</llo_original>
